<compile_context>
chip_gen: v7x
topology: tpu7x:2x2x1
jax: 0.10.0
libtpu: 0.0.40
codegen_flags: <defaults>
</compile_context>

<pallas_src>
import functools

import jax
import jax.numpy as jnp
from jax.experimental import pallas as pl
from jax.experimental.pallas import tpu as pltpu


def _erf(x):
  """Abramowitz & Stegun 7.1.26 erf polynomial (|err| <= 1.5e-7), VPU/EUP-only ops."""
  a1, a2, a3, a4, a5 = 0.254829592, -0.284496736, 1.421413741, -1.453152027, 1.061405429
  p = 0.3275911
  ax = jnp.abs(x)
  t = 1.0 / (1.0 + p * ax)
  poly = ((((a5 * t + a4) * t + a3) * t + a2) * t + a1) * t
  y = 1.0 - poly * jnp.exp(-ax * ax)
  return jnp.where(x >= 0, y, -y)


def _gelu_exact(x):
  """Exact (erf-based) GELU, matching PyTorch nn.GELU() default."""
  return 0.5 * x * (1.0 + _erf(x * 0.7071067811865476))


def _transformer1d_kernel(x_ref, wq_ref, wqr_ref, wk_ref, wkr_ref, wv_ref,
                          wout_ref, bout_ref, g_ref, bln_ref,
                          wff1_ref, bff1_ref, wff2_ref, bff2_ref,
                          cos_ref, sin_ref, bias_ref, o_ref,
                          *, depth, heads, dim_head):
  """All `depth` transformer layers for ALL batch elements (stacked on sublanes), fused."""
  x = x_ref[...]            # (B*N, C), resident across all layers
  cos = cos_ref[...]        # (B*N, hd) rotary cos, tiled over heads and batch
  sin = sin_ref[...]        # (B*N, hd) rotary sin
  attn_bias = bias_ref[...]  # (B*N, B*N) additive block-diag mask: 0 within batch, -1e30 across

  for d in range(depth):    # depth is small & static -> unrolled (fori_loop at larger depth)
    wq = wq_ref[d]          # (C, hd)   already scaled by 1/sqrt(dim_head)
    wqr = wqr_ref[d]        # (C, hd)   = (Wq @ rot) * scale  (rotate_half folded host-side)
    wk = wk_ref[d]          # (C, hd)
    wkr = wkr_ref[d]        # (C, hd)   = Wk @ rot
    wv = wv_ref[d]          # (C, hd)
    wout = wout_ref[d]      # (hd, C)
    bout = bout_ref[d]      # (1, C)
    g = g_ref[d]            # (1, C)
    bln = bln_ref[d]        # (1, C)
    wff1 = wff1_ref[d]      # (C, Cm)
    bff1 = bff1_ref[d]      # (1, Cm)
    wff2 = wff2_ref[d]      # (Cm, C)
    bff2 = bff2_ref[d]      # (1, C)

    # to_qkv (bias=False 1x1 conv) with pre-split / pre-rotated / pre-scaled weights.
    # Rotary is linear, so q_rot = x @ (Wq @ rot); only the *cos/*sin combine stays in-kernel.
    q = (jnp.dot(x, wq, preferred_element_type=jnp.float32) * cos
         + jnp.dot(x, wqr, preferred_element_type=jnp.float32) * sin)   # (B*N, hd)
    k = (jnp.dot(x, wk, preferred_element_type=jnp.float32) * cos
         + jnp.dot(x, wkr, preferred_element_type=jnp.float32) * sin)   # (B*N, hd)
    v = jnp.dot(x, wv, preferred_element_type=jnp.float32)              # (B*N, hd)

    # Per-head attention over the batch-stacked rows; cross-batch pairs are masked out by
    # attn_bias.  Per-head outputs are concatenated once and projected with a single matmul.
    head_outs = []
    for h in range(heads):
      lo = h * dim_head
      hi = lo + dim_head
      qh = q[:, lo:hi]
      kh = k[:, lo:hi]
      vh = v[:, lo:hi]
      # sim[i, j] = qh[i] . kh[j]  (contraction on the last dim of both -> no explicit kh.T)
      sim = jax.lax.dot_general(qh, kh, (((1,), (1,)), ((), ())),
                                preferred_element_type=jnp.float32) + attn_bias
      sim = sim - jnp.max(sim, axis=-1, keepdims=True)
      p = jnp.exp(sim)
      attn = p * pl.reciprocal(jnp.sum(p, axis=-1, keepdims=True), approx=True)
      head_outs.append(jnp.dot(attn, vh, preferred_element_type=jnp.float32))
    o_heads = jnp.concatenate(head_outs, axis=-1)                       # (B*N, hd)
    x = jnp.dot(o_heads, wout, preferred_element_type=jnp.float32) + bout + x   # residual 1

    # FeedForward1d: LayerNorm1d (over channels, unbiased=False) -> Conv1d -> GELU -> Conv1d
    mean = jnp.mean(x, axis=-1, keepdims=True)
    var = jnp.mean((x - mean) ** 2, axis=-1, keepdims=True)
    norm = (x - mean) * jax.lax.rsqrt(var + 1e-5) * g + bln
    hmid = jnp.dot(norm, wff1, preferred_element_type=jnp.float32) + bff1
    hmid = _gelu_exact(hmid)
    x = jnp.dot(hmid, wff2, preferred_element_type=jnp.float32) + bff2 + x       # residual 2

  o_ref[...] = x.astype(o_ref.dtype)


def transformer1d_forward(x_ncw, stacked_params, cos_all, sin_all, *, heads, dim_head):
  """x_ncw: (B, C, N) as the PyTorch module expects. Returns (B, C, N)."""
  B, C, N = x_ncw.shape
  x = jnp.transpose(x_ncw, (0, 2, 1)).reshape(B * N, C)   # NCW -> batch-stacked (B*N, C)
  depth = stacked_params[0].shape[0]

  # Rotary tables tiled over the batch-stacked rows; block-diagonal additive mask so rows of
  # different batch elements never attend to each other.
  cos_flat = jnp.tile(cos_all, (B, 1))                     # (B*N, hd)
  sin_flat = jnp.tile(sin_all, (B, 1))                     # (B*N, hd)
  batch_ids = jnp.repeat(jnp.arange(B, dtype=jnp.int32), N)
  attn_bias = jnp.where(batch_ids[:, None] == batch_ids[None, :],
                        0.0, -1e30).astype(jnp.float32)    # (B*N, B*N)

  kernel = functools.partial(_transformer1d_kernel,
                             depth=depth, heads=heads, dim_head=dim_head)

  def full_spec(a):
    nd = a.ndim
    return pl.BlockSpec(a.shape, lambda i, _nd=nd: (0,) * _nd)

  consts = tuple(stacked_params) + (cos_flat, sin_flat, attn_bias)
  out = pl.pallas_call(
      kernel,
      out_shape=jax.ShapeDtypeStruct((B * N, C), x.dtype),
      grid=(1,),                                           # single launch, single step
      in_specs=[pl.BlockSpec((B * N, C), lambda i: (0, 0))]
               + [full_spec(a) for a in consts],
      out_specs=pl.BlockSpec((B * N, C), lambda i: (0, 0)),
      compiler_params=pltpu.CompilerParams(dimension_semantics=("arbitrary",)),
  )(x, *consts)
  return jnp.transpose(out.reshape(B, N, C), (0, 2, 1))    # back to NCW


# ----------------------- pure-JAX reference (for sanity check) -----------------------
def reference_block(x, params, cos, sin, rotmat, heads, dim_head):
  wqkv, wout, bout, g, bln, wff1, bff1, wff2, bff2 = params
  B, N, C = x.shape
  hd = heads * dim_head
  qkv = jnp.einsum('bnc,cf->bnf', x, wqkv)
  q, k, v = qkv[..., :hd], qkv[..., hd:2 * hd], qkv[..., 2 * hd:]
  split = lambda t: t.reshape(B, N, heads, dim_head).transpose(0, 2, 1, 3)
  q, k, v = split(q), split(k), split(v)
  q = q * cos + q @ rotmat * sin
  k = k * cos + k @ rotmat * sin
  sim = jnp.einsum('bhid,bhjd->bhij', q, k) * dim_head ** -0.5
  attn = jax.nn.softmax(sim, axis=-1)
  out = jnp.einsum('bhij,bhjd->bhid', attn, v)
  out = out.transpose(0, 2, 1, 3).reshape(B, N, hd)
  x1 = out @ wout + bout + x
  mean = x1.mean(-1, keepdims=True)
  var = ((x1 - mean) ** 2).mean(-1, keepdims=True)
  norm = (x1 - mean) * jax.lax.rsqrt(var + 1e-5) * g + bln
  h = jax.nn.gelu(norm @ wff1 + bff1, approximate=False)
  return h @ wff2 + bff2 + x1


if __name__ == "__main__":
  key = jax.random.PRNGKey(0)
  B, C, N = 2, 16, 16                   # batch, dim (channels), sequence length
  heads, dim_head, depth = 4, 8, 2
  mlp_mult = 2                          # Transformer1d mlp_dim -> FeedForward1d ch_mult
  hidden = heads * dim_head
  Cm = C * mlp_mult
  scale = dim_head ** -0.5

  keys = jax.random.split(key, 1 + depth)
  x_ncw = jax.random.normal(keys[0], (B, C, N), jnp.float32)   # PyTorch NCW input

  # Rotary tables: RotaryEmbedding(dim=dim_head//2), theta=10000, interleaved pairing.
  rot_dim = dim_head // 2
  inv_freq = 1.0 / (10000.0 ** (jnp.arange(0, rot_dim, 2, dtype=jnp.float32) / rot_dim))
  t = jnp.arange(N, dtype=jnp.float32)
  freqs = jnp.repeat(t[:, None] * inv_freq[None, :], 2, axis=-1)        # (N, rot_dim)
  cos_h = jnp.concatenate([jnp.cos(freqs),
                           jnp.ones((N, dim_head - rot_dim), jnp.float32)], -1)
  sin_h = jnp.concatenate([jnp.sin(freqs),
                           jnp.zeros((N, dim_head - rot_dim), jnp.float32)], -1)
  # rotate_half as a matmul: (x @ rot_h)[:, 2i] = -x[:, 2i+1], [:, 2i+1] = x[:, 2i]
  rot_h = jnp.zeros((dim_head, dim_head), jnp.float32)
  for i in range(rot_dim // 2):
    rot_h = rot_h.at[2 * i + 1, 2 * i].set(-1.0)
    rot_h = rot_h.at[2 * i, 2 * i + 1].set(1.0)
  # All-heads versions: per-head tables tiled over the flattened (head, dim_head) lane layout.
  cos_all = jnp.tile(cos_h, (1, heads))                                 # (N, hd)
  sin_all = jnp.tile(sin_h, (1, heads))                                 # (N, hd)
  rot_all = jnp.kron(jnp.eye(heads, dtype=jnp.float32), rot_h)          # (hd, hd)

  def init_layer(k):
    k1, k2, k3, k4, k5 = jax.random.split(k, 5)
    s = 0.05
    wqkv = s * jax.random.normal(k1, (C, 3 * hidden), jnp.float32)   # to_qkv.weight^T
    wout = s * jax.random.normal(k2, (hidden, C), jnp.float32)       # to_out.weight^T
    bout = s * jax.random.normal(k3, (1, C), jnp.float32)            # to_out.bias
    g = jnp.ones((1, C), jnp.float32)                                # LayerNorm1d.g
    bln = jnp.zeros((1, C), jnp.float32)                             # LayerNorm1d.b
    wff1 = s * jax.random.normal(k4, (C, Cm), jnp.float32)
    bff1 = jnp.zeros((1, Cm), jnp.float32)
    wff2 = s * jax.random.normal(k5, (Cm, C), jnp.float32)
    bff2 = jnp.zeros((1, C), jnp.float32)
    return (wqkv, wout, bout, g, bln, wff1, bff1, wff2, bff2)

  layers = [init_layer(keys[1 + i]) for i in range(depth)]

  # Host-side weight prep for the fused kernel: split QKV, fold rotate_half and the
  # 1/sqrt(dim_head) scale into the q-side weights (all exact, rotation is linear).
  def fold_layer(p):
    wqkv, wout, bout, g, bln, wff1, bff1, wff2, bff2 = p
    wq, wk, wv = wqkv[:, :hidden], wqkv[:, hidden:2 * hidden], wqkv[:, 2 * hidden:]
    wq_s = wq * scale
    wqr_s = (wq @ rot_all) * scale
    wkr = wk @ rot_all
    return (wq_s, wqr_s, wk, wkr, wv, wout, bout, g, bln, wff1, bff1, wff2, bff2)

  folded = [fold_layer(p) for p in layers]
  stacked = tuple(jnp.stack([folded[d][j] for d in range(depth)], axis=0)
                  for j in range(len(folded[0])))

  out_ncw = transformer1d_forward(x_ncw, stacked, cos_all, sin_all,
                                  heads=heads, dim_head=dim_head)
  out_ncw = jax.block_until_ready(out_ncw)

  # Pure-JAX reference, layer by layer (unfolded weights, exact softmax / erf GELU).
  x_ref = jnp.transpose(x_ncw, (0, 2, 1))
  for p in layers:
    x_ref = reference_block(x_ref, p, cos_h, sin_h, rot_h, heads, dim_head)
  ref_ncw = jnp.transpose(x_ref, (0, 2, 1))

  err = float(jnp.max(jnp.abs(out_ncw - ref_ncw)))
  assert err < 2e-3, f"max abs error vs reference: {err}"
  print("KERNEL_OK")
</pallas_src>

<mosaic_0001>
module attributes {stable_mosaic.version = 11 : i64} {
  func.func @_transformer1d_kernel(%arg0: i32, %arg1: memref<32x16xf32, #tpu.memory_space<vmem>>, %arg2: memref<2x16x32xf32, #tpu.memory_space<vmem>>, %arg3: memref<2x16x32xf32, #tpu.memory_space<vmem>>, %arg4: memref<2x16x32xf32, #tpu.memory_space<vmem>>, %arg5: memref<2x16x32xf32, #tpu.memory_space<vmem>>, %arg6: memref<2x16x32xf32, #tpu.memory_space<vmem>>, %arg7: memref<2x32x16xf32, #tpu.memory_space<vmem>>, %arg8: memref<2x1x16xf32, #tpu.memory_space<vmem>>, %arg9: memref<2x1x16xf32, #tpu.memory_space<vmem>>, %arg10: memref<2x1x16xf32, #tpu.memory_space<vmem>>, %arg11: memref<2x16x32xf32, #tpu.memory_space<vmem>>, %arg12: memref<2x1x32xf32, #tpu.memory_space<vmem>>, %arg13: memref<2x32x16xf32, #tpu.memory_space<vmem>>, %arg14: memref<2x1x16xf32, #tpu.memory_space<vmem>>, %arg15: memref<32x32xf32, #tpu.memory_space<vmem>>, %arg16: memref<32x32xf32, #tpu.memory_space<vmem>>, %arg17: memref<32x32xf32, #tpu.memory_space<vmem>>, %arg18: memref<32x16xf32, #tpu.memory_space<vmem>>) attributes {dimension_semantics = [#tpu.dimension_semantics<arbitrary>], iteration_bounds = array<i64: 1>, scalar_prefetch = 0 : i64, scratch_operands = 0 : i64, tpu.core_type = #tpu.core_type<tc>, window_params = [{pipeline_mode = #tpu.pipeline_mode<synchronous>, transform_indices = @transform_0, window_bounds = array<i64: 32, 16>}, {pipeline_mode = #tpu.pipeline_mode<synchronous>, transform_indices = @transform_1, window_bounds = array<i64: 2, 16, 32>}, {pipeline_mode = #tpu.pipeline_mode<synchronous>, transform_indices = @transform_2, window_bounds = array<i64: 2, 16, 32>}, {pipeline_mode = #tpu.pipeline_mode<synchronous>, transform_indices = @transform_3, window_bounds = array<i64: 2, 16, 32>}, {pipeline_mode = #tpu.pipeline_mode<synchronous>, transform_indices = @transform_4, window_bounds = array<i64: 2, 16, 32>}, {pipeline_mode = #tpu.pipeline_mode<synchronous>, transform_indices = @transform_5, window_bounds = array<i64: 2, 16, 32>}, {pipeline_mode = #tpu.pipeline_mode<synchronous>, transform_indices = @transform_6, window_bounds = array<i64: 2, 32, 16>}, {pipeline_mode = #tpu.pipeline_mode<synchronous>, transform_indices = @transform_7, window_bounds = array<i64: 2, 1, 16>}, {pipeline_mode = #tpu.pipeline_mode<synchronous>, transform_indices = @transform_8, window_bounds = array<i64: 2, 1, 16>}, {pipeline_mode = #tpu.pipeline_mode<synchronous>, transform_indices = @transform_9, window_bounds = array<i64: 2, 1, 16>}, {pipeline_mode = #tpu.pipeline_mode<synchronous>, transform_indices = @transform_10, window_bounds = array<i64: 2, 16, 32>}, {pipeline_mode = #tpu.pipeline_mode<synchronous>, transform_indices = @transform_11, window_bounds = array<i64: 2, 1, 32>}, {pipeline_mode = #tpu.pipeline_mode<synchronous>, transform_indices = @transform_12, window_bounds = array<i64: 2, 32, 16>}, {pipeline_mode = #tpu.pipeline_mode<synchronous>, transform_indices = @transform_13, window_bounds = array<i64: 2, 1, 16>}, {pipeline_mode = #tpu.pipeline_mode<synchronous>, transform_indices = @transform_14, window_bounds = array<i64: 32, 32>}, {pipeline_mode = #tpu.pipeline_mode<synchronous>, transform_indices = @transform_15, window_bounds = array<i64: 32, 32>}, {pipeline_mode = #tpu.pipeline_mode<synchronous>, transform_indices = @transform_16, window_bounds = array<i64: 32, 32>}, {pipeline_mode = #tpu.pipeline_mode<synchronous>, transform_indices = @transform_17, window_bounds = array<i64: 32, 16>}]} {
    %c0 = arith.constant 0 : index
    %c0_0 = arith.constant 0 : index
    %0 = vector.load %arg1[%c0, %c0_0] : memref<32x16xf32, #tpu.memory_space<vmem>>, vector<32x16xf32>
    %c0_1 = arith.constant 0 : index
    %c0_2 = arith.constant 0 : index
    %1 = vector.load %arg15[%c0_1, %c0_2] : memref<32x32xf32, #tpu.memory_space<vmem>>, vector<32x32xf32>
    %c0_3 = arith.constant 0 : index
    %c0_4 = arith.constant 0 : index
    %2 = vector.load %arg16[%c0_3, %c0_4] : memref<32x32xf32, #tpu.memory_space<vmem>>, vector<32x32xf32>
    %c0_5 = arith.constant 0 : index
    %c0_6 = arith.constant 0 : index
    %3 = vector.load %arg17[%c0_5, %c0_6] : memref<32x32xf32, #tpu.memory_space<vmem>>, vector<32x32xf32>
    %c0_7 = arith.constant 0 : index
    %c0_8 = arith.constant 0 : index
    %c0_9 = arith.constant 0 : index
    %4 = vector.load %arg2[%c0_7, %c0_8, %c0_9] : memref<2x16x32xf32, #tpu.memory_space<vmem>>, vector<1x16x32xf32>
    %5 = vector.shape_cast %4 : vector<1x16x32xf32> to vector<16x32xf32>
    %c0_10 = arith.constant 0 : index
    %c0_11 = arith.constant 0 : index
    %c0_12 = arith.constant 0 : index
    %6 = vector.load %arg3[%c0_10, %c0_11, %c0_12] : memref<2x16x32xf32, #tpu.memory_space<vmem>>, vector<1x16x32xf32>
    %7 = vector.shape_cast %6 : vector<1x16x32xf32> to vector<16x32xf32>
    %c0_13 = arith.constant 0 : index
    %c0_14 = arith.constant 0 : index
    %c0_15 = arith.constant 0 : index
    %8 = vector.load %arg4[%c0_13, %c0_14, %c0_15] : memref<2x16x32xf32, #tpu.memory_space<vmem>>, vector<1x16x32xf32>
    %9 = vector.shape_cast %8 : vector<1x16x32xf32> to vector<16x32xf32>
    %c0_16 = arith.constant 0 : index
    %c0_17 = arith.constant 0 : index
    %c0_18 = arith.constant 0 : index
    %10 = vector.load %arg5[%c0_16, %c0_17, %c0_18] : memref<2x16x32xf32, #tpu.memory_space<vmem>>, vector<1x16x32xf32>
    %11 = vector.shape_cast %10 : vector<1x16x32xf32> to vector<16x32xf32>
    %c0_19 = arith.constant 0 : index
    %c0_20 = arith.constant 0 : index
    %c0_21 = arith.constant 0 : index
    %12 = vector.load %arg6[%c0_19, %c0_20, %c0_21] : memref<2x16x32xf32, #tpu.memory_space<vmem>>, vector<1x16x32xf32>
    %13 = vector.shape_cast %12 : vector<1x16x32xf32> to vector<16x32xf32>
    %c0_22 = arith.constant 0 : index
    %c0_23 = arith.constant 0 : index
    %c0_24 = arith.constant 0 : index
    %14 = vector.load %arg7[%c0_22, %c0_23, %c0_24] : memref<2x32x16xf32, #tpu.memory_space<vmem>>, vector<1x32x16xf32>
    %15 = vector.shape_cast %14 : vector<1x32x16xf32> to vector<32x16xf32>
    %c0_25 = arith.constant 0 : index
    %c0_26 = arith.constant 0 : index
    %c0_27 = arith.constant 0 : index
    %16 = vector.load %arg8[%c0_25, %c0_26, %c0_27] : memref<2x1x16xf32, #tpu.memory_space<vmem>>, vector<1x1x16xf32>
    %17 = vector.shape_cast %16 : vector<1x1x16xf32> to vector<1x16xf32>
    %c0_28 = arith.constant 0 : index
    %c0_29 = arith.constant 0 : index
    %c0_30 = arith.constant 0 : index
    %18 = vector.load %arg9[%c0_28, %c0_29, %c0_30] : memref<2x1x16xf32, #tpu.memory_space<vmem>>, vector<1x1x16xf32>
    %19 = vector.shape_cast %18 : vector<1x1x16xf32> to vector<1x16xf32>
    %c0_31 = arith.constant 0 : index
    %c0_32 = arith.constant 0 : index
    %c0_33 = arith.constant 0 : index
    %20 = vector.load %arg10[%c0_31, %c0_32, %c0_33] : memref<2x1x16xf32, #tpu.memory_space<vmem>>, vector<1x1x16xf32>
    %21 = vector.shape_cast %20 : vector<1x1x16xf32> to vector<1x16xf32>
    %c0_34 = arith.constant 0 : index
    %c0_35 = arith.constant 0 : index
    %c0_36 = arith.constant 0 : index
    %22 = vector.load %arg11[%c0_34, %c0_35, %c0_36] : memref<2x16x32xf32, #tpu.memory_space<vmem>>, vector<1x16x32xf32>
    %23 = vector.shape_cast %22 : vector<1x16x32xf32> to vector<16x32xf32>
    %c0_37 = arith.constant 0 : index
    %c0_38 = arith.constant 0 : index
    %c0_39 = arith.constant 0 : index
    %24 = vector.load %arg12[%c0_37, %c0_38, %c0_39] : memref<2x1x32xf32, #tpu.memory_space<vmem>>, vector<1x1x32xf32>
    %25 = vector.shape_cast %24 : vector<1x1x32xf32> to vector<1x32xf32>
    %c0_40 = arith.constant 0 : index
    %c0_41 = arith.constant 0 : index
    %c0_42 = arith.constant 0 : index
    %26 = vector.load %arg13[%c0_40, %c0_41, %c0_42] : memref<2x32x16xf32, #tpu.memory_space<vmem>>, vector<1x32x16xf32>
    %27 = vector.shape_cast %26 : vector<1x32x16xf32> to vector<32x16xf32>
    %c0_43 = arith.constant 0 : index
    %c0_44 = arith.constant 0 : index
    %c0_45 = arith.constant 0 : index
    %28 = vector.load %arg14[%c0_43, %c0_44, %c0_45] : memref<2x1x16xf32, #tpu.memory_space<vmem>>, vector<1x1x16xf32>
    %29 = vector.shape_cast %28 : vector<1x1x16xf32> to vector<1x16xf32>
    %cst = arith.constant dense<0.000000e+00> : vector<32x32xf32>
    %30 = tpu.matmul %0, %5, %cst {dimension_numbers = #tpu.dot_dimension_numbers<[1], [0], [0], [1], [0, 0, 1, 1], [], []>} : vector<32x16xf32>, vector<16x32xf32>, vector<32x32xf32> -> vector<32x32xf32>
    %31 = arith.mulf %30, %1 : vector<32x32xf32>
    %cst_46 = arith.constant dense<0.000000e+00> : vector<32x32xf32>
    %32 = tpu.matmul %0, %7, %cst_46 {dimension_numbers = #tpu.dot_dimension_numbers<[1], [0], [0], [1], [0, 0, 1, 1], [], []>} : vector<32x16xf32>, vector<16x32xf32>, vector<32x32xf32> -> vector<32x32xf32>
    %33 = arith.mulf %32, %2 : vector<32x32xf32>
    %34 = arith.addf %31, %33 : vector<32x32xf32>
    %cst_47 = arith.constant dense<0.000000e+00> : vector<32x32xf32>
    %35 = tpu.matmul %0, %9, %cst_47 {dimension_numbers = #tpu.dot_dimension_numbers<[1], [0], [0], [1], [0, 0, 1, 1], [], []>} : vector<32x16xf32>, vector<16x32xf32>, vector<32x32xf32> -> vector<32x32xf32>
    %36 = arith.mulf %35, %1 : vector<32x32xf32>
    %cst_48 = arith.constant dense<0.000000e+00> : vector<32x32xf32>
    %37 = tpu.matmul %0, %11, %cst_48 {dimension_numbers = #tpu.dot_dimension_numbers<[1], [0], [0], [1], [0, 0, 1, 1], [], []>} : vector<32x16xf32>, vector<16x32xf32>, vector<32x32xf32> -> vector<32x32xf32>
    %38 = arith.mulf %37, %2 : vector<32x32xf32>
    %39 = arith.addf %36, %38 : vector<32x32xf32>
    %cst_49 = arith.constant dense<0.000000e+00> : vector<32x32xf32>
    %40 = tpu.matmul %0, %13, %cst_49 {dimension_numbers = #tpu.dot_dimension_numbers<[1], [0], [0], [1], [0, 0, 1, 1], [], []>} : vector<32x16xf32>, vector<16x32xf32>, vector<32x32xf32> -> vector<32x32xf32>
    %41 = vector.extract_strided_slice %34 {offsets = [0, 0], sizes = [32, 8], strides = [1, 1]} : vector<32x32xf32> to vector<32x8xf32>
    %42 = vector.extract_strided_slice %39 {offsets = [0, 0], sizes = [32, 8], strides = [1, 1]} : vector<32x32xf32> to vector<32x8xf32>
    %43 = vector.extract_strided_slice %40 {offsets = [0, 0], sizes = [32, 8], strides = [1, 1]} : vector<32x32xf32> to vector<32x8xf32>
    %cst_50 = arith.constant dense<0.000000e+00> : vector<32x32xf32>
    %44 = tpu.matmul %41, %42, %cst_50 {dimension_numbers = #tpu.dot_dimension_numbers<[1], [1], [0], [0], [0, 0, 1, 0], [], []>} : vector<32x8xf32>, vector<32x8xf32>, vector<32x32xf32> -> vector<32x32xf32>
    %45 = arith.addf %44, %3 : vector<32x32xf32>
    %cst_51 = arith.constant dense<0xFF800000> : vector<32xf32>
    %46 = vector.multi_reduction <maximumf>, %45, %cst_51 [1] : vector<32x32xf32> to vector<32xf32>
    %47 = vector.shape_cast %46 : vector<32xf32> to vector<32x1xf32>
    %48 = vector.broadcast %47 : vector<32x1xf32> to vector<32x32xf32>
    %49 = arith.subf %45, %48 : vector<32x32xf32>
    %50 = math.exp %49 : vector<32x32xf32>
    %cst_52 = arith.constant dense<0.000000e+00> : vector<32xf32>
    %51 = vector.multi_reduction <add>, %50, %cst_52 [1] : vector<32x32xf32> to vector<32xf32>
    %52 = vector.shape_cast %51 : vector<32xf32> to vector<32x1xf32>
    %53 = tpu.reciprocal %52 {approx = true} : vector<32x1xf32> -> vector<32x1xf32>
    %54 = vector.broadcast %53 : vector<32x1xf32> to vector<32x32xf32>
    %55 = arith.mulf %50, %54 : vector<32x32xf32>
    %cst_53 = arith.constant dense<0.000000e+00> : vector<32x8xf32>
    %56 = tpu.matmul %55, %43, %cst_53 {dimension_numbers = #tpu.dot_dimension_numbers<[1], [0], [0], [1], [0, 0, 1, 1], [], []>} : vector<32x32xf32>, vector<32x8xf32>, vector<32x8xf32> -> vector<32x8xf32>
    %57 = vector.extract_strided_slice %34 {offsets = [0, 8], sizes = [32, 8], strides = [1, 1]} : vector<32x32xf32> to vector<32x8xf32>
    %58 = vector.extract_strided_slice %39 {offsets = [0, 8], sizes = [32, 8], strides = [1, 1]} : vector<32x32xf32> to vector<32x8xf32>
    %59 = vector.extract_strided_slice %40 {offsets = [0, 8], sizes = [32, 8], strides = [1, 1]} : vector<32x32xf32> to vector<32x8xf32>
    %cst_54 = arith.constant dense<0.000000e+00> : vector<32x32xf32>
    %60 = tpu.matmul %57, %58, %cst_54 {dimension_numbers = #tpu.dot_dimension_numbers<[1], [1], [0], [0], [0, 0, 1, 0], [], []>} : vector<32x8xf32>, vector<32x8xf32>, vector<32x32xf32> -> vector<32x32xf32>
    %61 = arith.addf %60, %3 : vector<32x32xf32>
    %cst_55 = arith.constant dense<0xFF800000> : vector<32xf32>
    %62 = vector.multi_reduction <maximumf>, %61, %cst_55 [1] : vector<32x32xf32> to vector<32xf32>
    %63 = vector.shape_cast %62 : vector<32xf32> to vector<32x1xf32>
    %64 = vector.broadcast %63 : vector<32x1xf32> to vector<32x32xf32>
    %65 = arith.subf %61, %64 : vector<32x32xf32>
    %66 = math.exp %65 : vector<32x32xf32>
    %cst_56 = arith.constant dense<0.000000e+00> : vector<32xf32>
    %67 = vector.multi_reduction <add>, %66, %cst_56 [1] : vector<32x32xf32> to vector<32xf32>
    %68 = vector.shape_cast %67 : vector<32xf32> to vector<32x1xf32>
    %69 = tpu.reciprocal %68 {approx = true} : vector<32x1xf32> -> vector<32x1xf32>
    %70 = vector.broadcast %69 : vector<32x1xf32> to vector<32x32xf32>
    %71 = arith.mulf %66, %70 : vector<32x32xf32>
    %cst_57 = arith.constant dense<0.000000e+00> : vector<32x8xf32>
    %72 = tpu.matmul %71, %59, %cst_57 {dimension_numbers = #tpu.dot_dimension_numbers<[1], [0], [0], [1], [0, 0, 1, 1], [], []>} : vector<32x32xf32>, vector<32x8xf32>, vector<32x8xf32> -> vector<32x8xf32>
    %73 = vector.extract_strided_slice %34 {offsets = [0, 16], sizes = [32, 8], strides = [1, 1]} : vector<32x32xf32> to vector<32x8xf32>
    %74 = vector.extract_strided_slice %39 {offsets = [0, 16], sizes = [32, 8], strides = [1, 1]} : vector<32x32xf32> to vector<32x8xf32>
    %75 = vector.extract_strided_slice %40 {offsets = [0, 16], sizes = [32, 8], strides = [1, 1]} : vector<32x32xf32> to vector<32x8xf32>
    %cst_58 = arith.constant dense<0.000000e+00> : vector<32x32xf32>
    %76 = tpu.matmul %73, %74, %cst_58 {dimension_numbers = #tpu.dot_dimension_numbers<[1], [1], [0], [0], [0, 0, 1, 0], [], []>} : vector<32x8xf32>, vector<32x8xf32>, vector<32x32xf32> -> vector<32x32xf32>
    %77 = arith.addf %76, %3 : vector<32x32xf32>
    %cst_59 = arith.constant dense<0xFF800000> : vector<32xf32>
    %78 = vector.multi_reduction <maximumf>, %77, %cst_59 [1] : vector<32x32xf32> to vector<32xf32>
    %79 = vector.shape_cast %78 : vector<32xf32> to vector<32x1xf32>
    %80 = vector.broadcast %79 : vector<32x1xf32> to vector<32x32xf32>
    %81 = arith.subf %77, %80 : vector<32x32xf32>
    %82 = math.exp %81 : vector<32x32xf32>
    %cst_60 = arith.constant dense<0.000000e+00> : vector<32xf32>
    %83 = vector.multi_reduction <add>, %82, %cst_60 [1] : vector<32x32xf32> to vector<32xf32>
    %84 = vector.shape_cast %83 : vector<32xf32> to vector<32x1xf32>
    %85 = tpu.reciprocal %84 {approx = true} : vector<32x1xf32> -> vector<32x1xf32>
    %86 = vector.broadcast %85 : vector<32x1xf32> to vector<32x32xf32>
    %87 = arith.mulf %82, %86 : vector<32x32xf32>
    %cst_61 = arith.constant dense<0.000000e+00> : vector<32x8xf32>
    %88 = tpu.matmul %87, %75, %cst_61 {dimension_numbers = #tpu.dot_dimension_numbers<[1], [0], [0], [1], [0, 0, 1, 1], [], []>} : vector<32x32xf32>, vector<32x8xf32>, vector<32x8xf32> -> vector<32x8xf32>
    %89 = vector.extract_strided_slice %34 {offsets = [0, 24], sizes = [32, 8], strides = [1, 1]} : vector<32x32xf32> to vector<32x8xf32>
    %90 = vector.extract_strided_slice %39 {offsets = [0, 24], sizes = [32, 8], strides = [1, 1]} : vector<32x32xf32> to vector<32x8xf32>
    %91 = vector.extract_strided_slice %40 {offsets = [0, 24], sizes = [32, 8], strides = [1, 1]} : vector<32x32xf32> to vector<32x8xf32>
    %cst_62 = arith.constant dense<0.000000e+00> : vector<32x32xf32>
    %92 = tpu.matmul %89, %90, %cst_62 {dimension_numbers = #tpu.dot_dimension_numbers<[1], [1], [0], [0], [0, 0, 1, 0], [], []>} : vector<32x8xf32>, vector<32x8xf32>, vector<32x32xf32> -> vector<32x32xf32>
    %93 = arith.addf %92, %3 : vector<32x32xf32>
    %cst_63 = arith.constant dense<0xFF800000> : vector<32xf32>
    %94 = vector.multi_reduction <maximumf>, %93, %cst_63 [1] : vector<32x32xf32> to vector<32xf32>
    %95 = vector.shape_cast %94 : vector<32xf32> to vector<32x1xf32>
    %96 = vector.broadcast %95 : vector<32x1xf32> to vector<32x32xf32>
    %97 = arith.subf %93, %96 : vector<32x32xf32>
    %98 = math.exp %97 : vector<32x32xf32>
    %cst_64 = arith.constant dense<0.000000e+00> : vector<32xf32>
    %99 = vector.multi_reduction <add>, %98, %cst_64 [1] : vector<32x32xf32> to vector<32xf32>
    %100 = vector.shape_cast %99 : vector<32xf32> to vector<32x1xf32>
    %101 = tpu.reciprocal %100 {approx = true} : vector<32x1xf32> -> vector<32x1xf32>
    %102 = vector.broadcast %101 : vector<32x1xf32> to vector<32x32xf32>
    %103 = arith.mulf %98, %102 : vector<32x32xf32>
    %cst_65 = arith.constant dense<0.000000e+00> : vector<32x8xf32>
    %104 = tpu.matmul %103, %91, %cst_65 {dimension_numbers = #tpu.dot_dimension_numbers<[1], [0], [0], [1], [0, 0, 1, 1], [], []>} : vector<32x32xf32>, vector<32x8xf32>, vector<32x8xf32> -> vector<32x8xf32>
    %105 = tpu.concatenate %56, %72, %88, %104 in 1 : vector<32x8xf32>, vector<32x8xf32>, vector<32x8xf32>, vector<32x8xf32> -> vector<32x32xf32>
    %cst_66 = arith.constant dense<0.000000e+00> : vector<32x16xf32>
    %106 = tpu.matmul %105, %15, %cst_66 {dimension_numbers = #tpu.dot_dimension_numbers<[1], [0], [0], [1], [0, 0, 1, 1], [], []>} : vector<32x32xf32>, vector<32x16xf32>, vector<32x16xf32> -> vector<32x16xf32>
    %107 = vector.broadcast %17 : vector<1x16xf32> to vector<32x16xf32>
    %108 = arith.addf %106, %107 : vector<32x16xf32>
    %109 = arith.addf %108, %0 : vector<32x16xf32>
    %cst_67 = arith.constant dense<0.000000e+00> : vector<32xf32>
    %110 = vector.multi_reduction <add>, %109, %cst_67 [1] : vector<32x16xf32> to vector<32xf32>
    %111 = vector.shape_cast %110 : vector<32xf32> to vector<32x1xf32>
    %cst_68 = arith.constant 1.600000e+01 : f32
    %112 = vector.broadcast %cst_68 : f32 to vector<32x1xf32>
    %113 = arith.divf %111, %112 : vector<32x1xf32>
    %114 = vector.broadcast %113 : vector<32x1xf32> to vector<32x16xf32>
    %115 = arith.subf %109, %114 : vector<32x16xf32>
    %116 = arith.mulf %115, %115 : vector<32x16xf32>
    %cst_69 = arith.constant dense<0.000000e+00> : vector<32xf32>
    %117 = vector.multi_reduction <add>, %116, %cst_69 [1] : vector<32x16xf32> to vector<32xf32>
    %118 = vector.shape_cast %117 : vector<32xf32> to vector<32x1xf32>
    %cst_70 = arith.constant 1.600000e+01 : f32
    %119 = vector.broadcast %cst_70 : f32 to vector<32x1xf32>
    %120 = arith.divf %118, %119 : vector<32x1xf32>
    %121 = vector.broadcast %113 : vector<32x1xf32> to vector<32x16xf32>
    %122 = arith.subf %109, %121 : vector<32x16xf32>
    %cst_71 = arith.constant 9.99999974E-6 : f32
    %123 = vector.broadcast %cst_71 : f32 to vector<32x1xf32>
    %124 = arith.addf %120, %123 : vector<32x1xf32>
    %125 = math.rsqrt %124 : vector<32x1xf32>
    %126 = vector.broadcast %125 : vector<32x1xf32> to vector<32x16xf32>
    %127 = arith.mulf %122, %126 : vector<32x16xf32>
    %128 = vector.broadcast %19 : vector<1x16xf32> to vector<32x16xf32>
    %129 = arith.mulf %127, %128 : vector<32x16xf32>
    %130 = vector.broadcast %21 : vector<1x16xf32> to vector<32x16xf32>
    %131 = arith.addf %129, %130 : vector<32x16xf32>
    %cst_72 = arith.constant dense<0.000000e+00> : vector<32x32xf32>
    %132 = tpu.matmul %131, %23, %cst_72 {dimension_numbers = #tpu.dot_dimension_numbers<[1], [0], [0], [1], [0, 0, 1, 1], [], []>} : vector<32x16xf32>, vector<16x32xf32>, vector<32x32xf32> -> vector<32x32xf32>
    %133 = vector.broadcast %25 : vector<1x32xf32> to vector<32x32xf32>
    %134 = arith.addf %132, %133 : vector<32x32xf32>
    %cst_73 = arith.constant 5.000000e-01 : f32
    %135 = vector.broadcast %cst_73 : f32 to vector<32x32xf32>
    %136 = arith.mulf %135, %134 : vector<32x32xf32>
    %cst_74 = arith.constant 0.707106769 : f32
    %137 = vector.broadcast %cst_74 : f32 to vector<32x32xf32>
    %138 = arith.mulf %134, %137 : vector<32x32xf32>
    %139 = math.absf %138 : vector<32x32xf32>
    %cst_75 = arith.constant 0.327591091 : f32
    %140 = vector.broadcast %cst_75 : f32 to vector<32x32xf32>
    %141 = arith.mulf %140, %139 : vector<32x32xf32>
    %cst_76 = arith.constant 1.000000e+00 : f32
    %142 = vector.broadcast %cst_76 : f32 to vector<32x32xf32>
    %143 = arith.addf %142, %141 : vector<32x32xf32>
    %cst_77 = arith.constant 1.000000e+00 : f32
    %144 = vector.broadcast %cst_77 : f32 to vector<32x32xf32>
    %145 = arith.divf %144, %143 : vector<32x32xf32>
    %cst_78 = arith.constant 1.06140542 : f32
    %146 = vector.broadcast %cst_78 : f32 to vector<32x32xf32>
    %147 = arith.mulf %146, %145 : vector<32x32xf32>
    %cst_79 = arith.constant -1.45315206 : f32
    %148 = vector.broadcast %cst_79 : f32 to vector<32x32xf32>
    %149 = arith.addf %147, %148 : vector<32x32xf32>
    %150 = arith.mulf %149, %145 : vector<32x32xf32>
    %cst_80 = arith.constant 1.42141378 : f32
    %151 = vector.broadcast %cst_80 : f32 to vector<32x32xf32>
    %152 = arith.addf %150, %151 : vector<32x32xf32>
    %153 = arith.mulf %152, %145 : vector<32x32xf32>
    %cst_81 = arith.constant -0.284496725 : f32
    %154 = vector.broadcast %cst_81 : f32 to vector<32x32xf32>
    %155 = arith.addf %153, %154 : vector<32x32xf32>
    %156 = arith.mulf %155, %145 : vector<32x32xf32>
    %cst_82 = arith.constant 0.254829586 : f32
    %157 = vector.broadcast %cst_82 : f32 to vector<32x32xf32>
    %158 = arith.addf %156, %157 : vector<32x32xf32>
    %159 = arith.mulf %158, %145 : vector<32x32xf32>
    %cst_83 = arith.constant 0.000000e+00 : f32
    %160 = vector.broadcast %cst_83 : f32 to vector<32x32xf32>
    %161 = arith.subf %160, %139 : vector<32x32xf32>
    %162 = arith.mulf %161, %139 : vector<32x32xf32>
    %163 = math.exp %162 : vector<32x32xf32>
    %164 = arith.mulf %159, %163 : vector<32x32xf32>
    %cst_84 = arith.constant 1.000000e+00 : f32
    %165 = vector.broadcast %cst_84 : f32 to vector<32x32xf32>
    %166 = arith.subf %165, %164 : vector<32x32xf32>
    %cst_85 = arith.constant 0.000000e+00 : f32
    %167 = vector.broadcast %cst_85 : f32 to vector<32x32xf32>
    %168 = arith.cmpf oge, %138, %167 : vector<32x32xf32>
    %cst_86 = arith.constant 0.000000e+00 : f32
    %169 = vector.broadcast %cst_86 : f32 to vector<32x32xf32>
    %170 = arith.subf %169, %166 : vector<32x32xf32>
    %171 = arith.select %168, %166, %170 : vector<32x32xi1>, vector<32x32xf32>
    %cst_87 = arith.constant 1.000000e+00 : f32
    %172 = vector.broadcast %cst_87 : f32 to vector<32x32xf32>
    %173 = arith.addf %172, %171 : vector<32x32xf32>
    %174 = arith.mulf %136, %173 : vector<32x32xf32>
    %cst_88 = arith.constant dense<0.000000e+00> : vector<32x16xf32>
    %175 = tpu.matmul %174, %27, %cst_88 {dimension_numbers = #tpu.dot_dimension_numbers<[1], [0], [0], [1], [0, 0, 1, 1], [], []>} : vector<32x32xf32>, vector<32x16xf32>, vector<32x16xf32> -> vector<32x16xf32>
    %176 = vector.broadcast %29 : vector<1x16xf32> to vector<32x16xf32>
    %177 = arith.addf %175, %176 : vector<32x16xf32>
    %178 = arith.addf %177, %109 : vector<32x16xf32>
    %c1 = arith.constant 1 : index
    %c0_89 = arith.constant 0 : index
    %c0_90 = arith.constant 0 : index
    %179 = vector.load %arg2[%c1, %c0_89, %c0_90] : memref<2x16x32xf32, #tpu.memory_space<vmem>>, vector<1x16x32xf32>
    %180 = vector.shape_cast %179 : vector<1x16x32xf32> to vector<16x32xf32>
    %c1_91 = arith.constant 1 : index
    %c0_92 = arith.constant 0 : index
    %c0_93 = arith.constant 0 : index
    %181 = vector.load %arg3[%c1_91, %c0_92, %c0_93] : memref<2x16x32xf32, #tpu.memory_space<vmem>>, vector<1x16x32xf32>
    %182 = vector.shape_cast %181 : vector<1x16x32xf32> to vector<16x32xf32>
    %c1_94 = arith.constant 1 : index
    %c0_95 = arith.constant 0 : index
    %c0_96 = arith.constant 0 : index
    %183 = vector.load %arg4[%c1_94, %c0_95, %c0_96] : memref<2x16x32xf32, #tpu.memory_space<vmem>>, vector<1x16x32xf32>
    %184 = vector.shape_cast %183 : vector<1x16x32xf32> to vector<16x32xf32>
    %c1_97 = arith.constant 1 : index
    %c0_98 = arith.constant 0 : index
    %c0_99 = arith.constant 0 : index
    %185 = vector.load %arg5[%c1_97, %c0_98, %c0_99] : memref<2x16x32xf32, #tpu.memory_space<vmem>>, vector<1x16x32xf32>
    %186 = vector.shape_cast %185 : vector<1x16x32xf32> to vector<16x32xf32>
    %c1_100 = arith.constant 1 : index
    %c0_101 = arith.constant 0 : index
    %c0_102 = arith.constant 0 : index
    %187 = vector.load %arg6[%c1_100, %c0_101, %c0_102] : memref<2x16x32xf32, #tpu.memory_space<vmem>>, vector<1x16x32xf32>
    %188 = vector.shape_cast %187 : vector<1x16x32xf32> to vector<16x32xf32>
    %c1_103 = arith.constant 1 : index
    %c0_104 = arith.constant 0 : index
    %c0_105 = arith.constant 0 : index
    %189 = vector.load %arg7[%c1_103, %c0_104, %c0_105] : memref<2x32x16xf32, #tpu.memory_space<vmem>>, vector<1x32x16xf32>
    %190 = vector.shape_cast %189 : vector<1x32x16xf32> to vector<32x16xf32>
    %c1_106 = arith.constant 1 : index
    %c0_107 = arith.constant 0 : index
    %c0_108 = arith.constant 0 : index
    %191 = vector.load %arg8[%c1_106, %c0_107, %c0_108] : memref<2x1x16xf32, #tpu.memory_space<vmem>>, vector<1x1x16xf32>
    %192 = vector.shape_cast %191 : vector<1x1x16xf32> to vector<1x16xf32>
    %c1_109 = arith.constant 1 : index
    %c0_110 = arith.constant 0 : index
    %c0_111 = arith.constant 0 : index
    %193 = vector.load %arg9[%c1_109, %c0_110, %c0_111] : memref<2x1x16xf32, #tpu.memory_space<vmem>>, vector<1x1x16xf32>
    %194 = vector.shape_cast %193 : vector<1x1x16xf32> to vector<1x16xf32>
    %c1_112 = arith.constant 1 : index
    %c0_113 = arith.constant 0 : index
    %c0_114 = arith.constant 0 : index
    %195 = vector.load %arg10[%c1_112, %c0_113, %c0_114] : memref<2x1x16xf32, #tpu.memory_space<vmem>>, vector<1x1x16xf32>
    %196 = vector.shape_cast %195 : vector<1x1x16xf32> to vector<1x16xf32>
    %c1_115 = arith.constant 1 : index
    %c0_116 = arith.constant 0 : index
    %c0_117 = arith.constant 0 : index
    %197 = vector.load %arg11[%c1_115, %c0_116, %c0_117] : memref<2x16x32xf32, #tpu.memory_space<vmem>>, vector<1x16x32xf32>
    %198 = vector.shape_cast %197 : vector<1x16x32xf32> to vector<16x32xf32>
    %c1_118 = arith.constant 1 : index
    %c0_119 = arith.constant 0 : index
    %c0_120 = arith.constant 0 : index
    %199 = vector.load %arg12[%c1_118, %c0_119, %c0_120] : memref<2x1x32xf32, #tpu.memory_space<vmem>>, vector<1x1x32xf32>
    %200 = vector.shape_cast %199 : vector<1x1x32xf32> to vector<1x32xf32>
    %c1_121 = arith.constant 1 : index
    %c0_122 = arith.constant 0 : index
    %c0_123 = arith.constant 0 : index
    %201 = vector.load %arg13[%c1_121, %c0_122, %c0_123] : memref<2x32x16xf32, #tpu.memory_space<vmem>>, vector<1x32x16xf32>
    %202 = vector.shape_cast %201 : vector<1x32x16xf32> to vector<32x16xf32>
    %c1_124 = arith.constant 1 : index
    %c0_125 = arith.constant 0 : index
    %c0_126 = arith.constant 0 : index
    %203 = vector.load %arg14[%c1_124, %c0_125, %c0_126] : memref<2x1x16xf32, #tpu.memory_space<vmem>>, vector<1x1x16xf32>
    %204 = vector.shape_cast %203 : vector<1x1x16xf32> to vector<1x16xf32>
    %cst_127 = arith.constant dense<0.000000e+00> : vector<32x32xf32>
    %205 = tpu.matmul %178, %180, %cst_127 {dimension_numbers = #tpu.dot_dimension_numbers<[1], [0], [0], [1], [0, 0, 1, 1], [], []>} : vector<32x16xf32>, vector<16x32xf32>, vector<32x32xf32> -> vector<32x32xf32>
    %206 = arith.mulf %205, %1 : vector<32x32xf32>
    %cst_128 = arith.constant dense<0.000000e+00> : vector<32x32xf32>
    %207 = tpu.matmul %178, %182, %cst_128 {dimension_numbers = #tpu.dot_dimension_numbers<[1], [0], [0], [1], [0, 0, 1, 1], [], []>} : vector<32x16xf32>, vector<16x32xf32>, vector<32x32xf32> -> vector<32x32xf32>
    %208 = arith.mulf %207, %2 : vector<32x32xf32>
    %209 = arith.addf %206, %208 : vector<32x32xf32>
    %cst_129 = arith.constant dense<0.000000e+00> : vector<32x32xf32>
    %210 = tpu.matmul %178, %184, %cst_129 {dimension_numbers = #tpu.dot_dimension_numbers<[1], [0], [0], [1], [0, 0, 1, 1], [], []>} : vector<32x16xf32>, vector<16x32xf32>, vector<32x32xf32> -> vector<32x32xf32>
    %211 = arith.mulf %210, %1 : vector<32x32xf32>
    %cst_130 = arith.constant dense<0.000000e+00> : vector<32x32xf32>
    %212 = tpu.matmul %178, %186, %cst_130 {dimension_numbers = #tpu.dot_dimension_numbers<[1], [0], [0], [1], [0, 0, 1, 1], [], []>} : vector<32x16xf32>, vector<16x32xf32>, vector<32x32xf32> -> vector<32x32xf32>
    %213 = arith.mulf %212, %2 : vector<32x32xf32>
    %214 = arith.addf %211, %213 : vector<32x32xf32>
    %cst_131 = arith.constant dense<0.000000e+00> : vector<32x32xf32>
    %215 = tpu.matmul %178, %188, %cst_131 {dimension_numbers = #tpu.dot_dimension_numbers<[1], [0], [0], [1], [0, 0, 1, 1], [], []>} : vector<32x16xf32>, vector<16x32xf32>, vector<32x32xf32> -> vector<32x32xf32>
    %216 = vector.extract_strided_slice %209 {offsets = [0, 0], sizes = [32, 8], strides = [1, 1]} : vector<32x32xf32> to vector<32x8xf32>
    %217 = vector.extract_strided_slice %214 {offsets = [0, 0], sizes = [32, 8], strides = [1, 1]} : vector<32x32xf32> to vector<32x8xf32>
    %218 = vector.extract_strided_slice %215 {offsets = [0, 0], sizes = [32, 8], strides = [1, 1]} : vector<32x32xf32> to vector<32x8xf32>
    %cst_132 = arith.constant dense<0.000000e+00> : vector<32x32xf32>
    %219 = tpu.matmul %216, %217, %cst_132 {dimension_numbers = #tpu.dot_dimension_numbers<[1], [1], [0], [0], [0, 0, 1, 0], [], []>} : vector<32x8xf32>, vector<32x8xf32>, vector<32x32xf32> -> vector<32x32xf32>
    %220 = arith.addf %219, %3 : vector<32x32xf32>
    %cst_133 = arith.constant dense<0xFF800000> : vector<32xf32>
    %221 = vector.multi_reduction <maximumf>, %220, %cst_133 [1] : vector<32x32xf32> to vector<32xf32>
    %222 = vector.shape_cast %221 : vector<32xf32> to vector<32x1xf32>
    %223 = vector.broadcast %222 : vector<32x1xf32> to vector<32x32xf32>
    %224 = arith.subf %220, %223 : vector<32x32xf32>
    %225 = math.exp %224 : vector<32x32xf32>
    %cst_134 = arith.constant dense<0.000000e+00> : vector<32xf32>
    %226 = vector.multi_reduction <add>, %225, %cst_134 [1] : vector<32x32xf32> to vector<32xf32>
    %227 = vector.shape_cast %226 : vector<32xf32> to vector<32x1xf32>
    %228 = tpu.reciprocal %227 {approx = true} : vector<32x1xf32> -> vector<32x1xf32>
    %229 = vector.broadcast %228 : vector<32x1xf32> to vector<32x32xf32>
    %230 = arith.mulf %225, %229 : vector<32x32xf32>
    %cst_135 = arith.constant dense<0.000000e+00> : vector<32x8xf32>
    %231 = tpu.matmul %230, %218, %cst_135 {dimension_numbers = #tpu.dot_dimension_numbers<[1], [0], [0], [1], [0, 0, 1, 1], [], []>} : vector<32x32xf32>, vector<32x8xf32>, vector<32x8xf32> -> vector<32x8xf32>
    %232 = vector.extract_strided_slice %209 {offsets = [0, 8], sizes = [32, 8], strides = [1, 1]} : vector<32x32xf32> to vector<32x8xf32>
    %233 = vector.extract_strided_slice %214 {offsets = [0, 8], sizes = [32, 8], strides = [1, 1]} : vector<32x32xf32> to vector<32x8xf32>
    %234 = vector.extract_strided_slice %215 {offsets = [0, 8], sizes = [32, 8], strides = [1, 1]} : vector<32x32xf32> to vector<32x8xf32>
    %cst_136 = arith.constant dense<0.000000e+00> : vector<32x32xf32>
    %235 = tpu.matmul %232, %233, %cst_136 {dimension_numbers = #tpu.dot_dimension_numbers<[1], [1], [0], [0], [0, 0, 1, 0], [], []>} : vector<32x8xf32>, vector<32x8xf32>, vector<32x32xf32> -> vector<32x32xf32>
    %236 = arith.addf %235, %3 : vector<32x32xf32>
    %cst_137 = arith.constant dense<0xFF800000> : vector<32xf32>
    %237 = vector.multi_reduction <maximumf>, %236, %cst_137 [1] : vector<32x32xf32> to vector<32xf32>
    %238 = vector.shape_cast %237 : vector<32xf32> to vector<32x1xf32>
    %239 = vector.broadcast %238 : vector<32x1xf32> to vector<32x32xf32>
    %240 = arith.subf %236, %239 : vector<32x32xf32>
    %241 = math.exp %240 : vector<32x32xf32>
    %cst_138 = arith.constant dense<0.000000e+00> : vector<32xf32>
    %242 = vector.multi_reduction <add>, %241, %cst_138 [1] : vector<32x32xf32> to vector<32xf32>
    %243 = vector.shape_cast %242 : vector<32xf32> to vector<32x1xf32>
    %244 = tpu.reciprocal %243 {approx = true} : vector<32x1xf32> -> vector<32x1xf32>
    %245 = vector.broadcast %244 : vector<32x1xf32> to vector<32x32xf32>
    %246 = arith.mulf %241, %245 : vector<32x32xf32>
    %cst_139 = arith.constant dense<0.000000e+00> : vector<32x8xf32>
    %247 = tpu.matmul %246, %234, %cst_139 {dimension_numbers = #tpu.dot_dimension_numbers<[1], [0], [0], [1], [0, 0, 1, 1], [], []>} : vector<32x32xf32>, vector<32x8xf32>, vector<32x8xf32> -> vector<32x8xf32>
    %248 = vector.extract_strided_slice %209 {offsets = [0, 16], sizes = [32, 8], strides = [1, 1]} : vector<32x32xf32> to vector<32x8xf32>
    %249 = vector.extract_strided_slice %214 {offsets = [0, 16], sizes = [32, 8], strides = [1, 1]} : vector<32x32xf32> to vector<32x8xf32>
    %250 = vector.extract_strided_slice %215 {offsets = [0, 16], sizes = [32, 8], strides = [1, 1]} : vector<32x32xf32> to vector<32x8xf32>
    %cst_140 = arith.constant dense<0.000000e+00> : vector<32x32xf32>
    %251 = tpu.matmul %248, %249, %cst_140 {dimension_numbers = #tpu.dot_dimension_numbers<[1], [1], [0], [0], [0, 0, 1, 0], [], []>} : vector<32x8xf32>, vector<32x8xf32>, vector<32x32xf32> -> vector<32x32xf32>
    %252 = arith.addf %251, %3 : vector<32x32xf32>
    %cst_141 = arith.constant dense<0xFF800000> : vector<32xf32>
    %253 = vector.multi_reduction <maximumf>, %252, %cst_141 [1] : vector<32x32xf32> to vector<32xf32>
    %254 = vector.shape_cast %253 : vector<32xf32> to vector<32x1xf32>
    %255 = vector.broadcast %254 : vector<32x1xf32> to vector<32x32xf32>
    %256 = arith.subf %252, %255 : vector<32x32xf32>
    %257 = math.exp %256 : vector<32x32xf32>
    %cst_142 = arith.constant dense<0.000000e+00> : vector<32xf32>
    %258 = vector.multi_reduction <add>, %257, %cst_142 [1] : vector<32x32xf32> to vector<32xf32>
    %259 = vector.shape_cast %258 : vector<32xf32> to vector<32x1xf32>
    %260 = tpu.reciprocal %259 {approx = true} : vector<32x1xf32> -> vector<32x1xf32>
    %261 = vector.broadcast %260 : vector<32x1xf32> to vector<32x32xf32>
    %262 = arith.mulf %257, %261 : vector<32x32xf32>
    %cst_143 = arith.constant dense<0.000000e+00> : vector<32x8xf32>
    %263 = tpu.matmul %262, %250, %cst_143 {dimension_numbers = #tpu.dot_dimension_numbers<[1], [0], [0], [1], [0, 0, 1, 1], [], []>} : vector<32x32xf32>, vector<32x8xf32>, vector<32x8xf32> -> vector<32x8xf32>
    %264 = vector.extract_strided_slice %209 {offsets = [0, 24], sizes = [32, 8], strides = [1, 1]} : vector<32x32xf32> to vector<32x8xf32>
    %265 = vector.extract_strided_slice %214 {offsets = [0, 24], sizes = [32, 8], strides = [1, 1]} : vector<32x32xf32> to vector<32x8xf32>
    %266 = vector.extract_strided_slice %215 {offsets = [0, 24], sizes = [32, 8], strides = [1, 1]} : vector<32x32xf32> to vector<32x8xf32>
    %cst_144 = arith.constant dense<0.000000e+00> : vector<32x32xf32>
    %267 = tpu.matmul %264, %265, %cst_144 {dimension_numbers = #tpu.dot_dimension_numbers<[1], [1], [0], [0], [0, 0, 1, 0], [], []>} : vector<32x8xf32>, vector<32x8xf32>, vector<32x32xf32> -> vector<32x32xf32>
    %268 = arith.addf %267, %3 : vector<32x32xf32>
    %cst_145 = arith.constant dense<0xFF800000> : vector<32xf32>
    %269 = vector.multi_reduction <maximumf>, %268, %cst_145 [1] : vector<32x32xf32> to vector<32xf32>
    %270 = vector.shape_cast %269 : vector<32xf32> to vector<32x1xf32>
    %271 = vector.broadcast %270 : vector<32x1xf32> to vector<32x32xf32>
    %272 = arith.subf %268, %271 : vector<32x32xf32>
    %273 = math.exp %272 : vector<32x32xf32>
    %cst_146 = arith.constant dense<0.000000e+00> : vector<32xf32>
    %274 = vector.multi_reduction <add>, %273, %cst_146 [1] : vector<32x32xf32> to vector<32xf32>
    %275 = vector.shape_cast %274 : vector<32xf32> to vector<32x1xf32>
    %276 = tpu.reciprocal %275 {approx = true} : vector<32x1xf32> -> vector<32x1xf32>
    %277 = vector.broadcast %276 : vector<32x1xf32> to vector<32x32xf32>
    %278 = arith.mulf %273, %277 : vector<32x32xf32>
    %cst_147 = arith.constant dense<0.000000e+00> : vector<32x8xf32>
    %279 = tpu.matmul %278, %266, %cst_147 {dimension_numbers = #tpu.dot_dimension_numbers<[1], [0], [0], [1], [0, 0, 1, 1], [], []>} : vector<32x32xf32>, vector<32x8xf32>, vector<32x8xf32> -> vector<32x8xf32>
    %280 = tpu.concatenate %231, %247, %263, %279 in 1 : vector<32x8xf32>, vector<32x8xf32>, vector<32x8xf32>, vector<32x8xf32> -> vector<32x32xf32>
    %cst_148 = arith.constant dense<0.000000e+00> : vector<32x16xf32>
    %281 = tpu.matmul %280, %190, %cst_148 {dimension_numbers = #tpu.dot_dimension_numbers<[1], [0], [0], [1], [0, 0, 1, 1], [], []>} : vector<32x32xf32>, vector<32x16xf32>, vector<32x16xf32> -> vector<32x16xf32>
    %282 = vector.broadcast %192 : vector<1x16xf32> to vector<32x16xf32>
    %283 = arith.addf %281, %282 : vector<32x16xf32>
    %284 = arith.addf %283, %178 : vector<32x16xf32>
    %cst_149 = arith.constant dense<0.000000e+00> : vector<32xf32>
    %285 = vector.multi_reduction <add>, %284, %cst_149 [1] : vector<32x16xf32> to vector<32xf32>
    %286 = vector.shape_cast %285 : vector<32xf32> to vector<32x1xf32>
    %cst_150 = arith.constant 1.600000e+01 : f32
    %287 = vector.broadcast %cst_150 : f32 to vector<32x1xf32>
    %288 = arith.divf %286, %287 : vector<32x1xf32>
    %289 = vector.broadcast %288 : vector<32x1xf32> to vector<32x16xf32>
    %290 = arith.subf %284, %289 : vector<32x16xf32>
    %291 = arith.mulf %290, %290 : vector<32x16xf32>
    %cst_151 = arith.constant dense<0.000000e+00> : vector<32xf32>
    %292 = vector.multi_reduction <add>, %291, %cst_151 [1] : vector<32x16xf32> to vector<32xf32>
    %293 = vector.shape_cast %292 : vector<32xf32> to vector<32x1xf32>
    %cst_152 = arith.constant 1.600000e+01 : f32
    %294 = vector.broadcast %cst_152 : f32 to vector<32x1xf32>
    %295 = arith.divf %293, %294 : vector<32x1xf32>
    %296 = vector.broadcast %288 : vector<32x1xf32> to vector<32x16xf32>
    %297 = arith.subf %284, %296 : vector<32x16xf32>
    %cst_153 = arith.constant 9.99999974E-6 : f32
    %298 = vector.broadcast %cst_153 : f32 to vector<32x1xf32>
    %299 = arith.addf %295, %298 : vector<32x1xf32>
    %300 = math.rsqrt %299 : vector<32x1xf32>
    %301 = vector.broadcast %300 : vector<32x1xf32> to vector<32x16xf32>
    %302 = arith.mulf %297, %301 : vector<32x16xf32>
    %303 = vector.broadcast %194 : vector<1x16xf32> to vector<32x16xf32>
    %304 = arith.mulf %302, %303 : vector<32x16xf32>
    %305 = vector.broadcast %196 : vector<1x16xf32> to vector<32x16xf32>
    %306 = arith.addf %304, %305 : vector<32x16xf32>
    %cst_154 = arith.constant dense<0.000000e+00> : vector<32x32xf32>
    %307 = tpu.matmul %306, %198, %cst_154 {dimension_numbers = #tpu.dot_dimension_numbers<[1], [0], [0], [1], [0, 0, 1, 1], [], []>} : vector<32x16xf32>, vector<16x32xf32>, vector<32x32xf32> -> vector<32x32xf32>
    %308 = vector.broadcast %200 : vector<1x32xf32> to vector<32x32xf32>
    %309 = arith.addf %307, %308 : vector<32x32xf32>
    %cst_155 = arith.constant 5.000000e-01 : f32
    %310 = vector.broadcast %cst_155 : f32 to vector<32x32xf32>
    %311 = arith.mulf %310, %309 : vector<32x32xf32>
    %cst_156 = arith.constant 0.707106769 : f32
    %312 = vector.broadcast %cst_156 : f32 to vector<32x32xf32>
    %313 = arith.mulf %309, %312 : vector<32x32xf32>
    %314 = math.absf %313 : vector<32x32xf32>
    %cst_157 = arith.constant 0.327591091 : f32
    %315 = vector.broadcast %cst_157 : f32 to vector<32x32xf32>
    %316 = arith.mulf %315, %314 : vector<32x32xf32>
    %cst_158 = arith.constant 1.000000e+00 : f32
    %317 = vector.broadcast %cst_158 : f32 to vector<32x32xf32>
    %318 = arith.addf %317, %316 : vector<32x32xf32>
    %cst_159 = arith.constant 1.000000e+00 : f32
    %319 = vector.broadcast %cst_159 : f32 to vector<32x32xf32>
    %320 = arith.divf %319, %318 : vector<32x32xf32>
    %cst_160 = arith.constant 1.06140542 : f32
    %321 = vector.broadcast %cst_160 : f32 to vector<32x32xf32>
    %322 = arith.mulf %321, %320 : vector<32x32xf32>
    %cst_161 = arith.constant -1.45315206 : f32
    %323 = vector.broadcast %cst_161 : f32 to vector<32x32xf32>
    %324 = arith.addf %322, %323 : vector<32x32xf32>
    %325 = arith.mulf %324, %320 : vector<32x32xf32>
    %cst_162 = arith.constant 1.42141378 : f32
    %326 = vector.broadcast %cst_162 : f32 to vector<32x32xf32>
    %327 = arith.addf %325, %326 : vector<32x32xf32>
    %328 = arith.mulf %327, %320 : vector<32x32xf32>
    %cst_163 = arith.constant -0.284496725 : f32
    %329 = vector.broadcast %cst_163 : f32 to vector<32x32xf32>
    %330 = arith.addf %328, %329 : vector<32x32xf32>
    %331 = arith.mulf %330, %320 : vector<32x32xf32>
    %cst_164 = arith.constant 0.254829586 : f32
    %332 = vector.broadcast %cst_164 : f32 to vector<32x32xf32>
    %333 = arith.addf %331, %332 : vector<32x32xf32>
    %334 = arith.mulf %333, %320 : vector<32x32xf32>
    %cst_165 = arith.constant 0.000000e+00 : f32
    %335 = vector.broadcast %cst_165 : f32 to vector<32x32xf32>
    %336 = arith.subf %335, %314 : vector<32x32xf32>
    %337 = arith.mulf %336, %314 : vector<32x32xf32>
    %338 = math.exp %337 : vector<32x32xf32>
    %339 = arith.mulf %334, %338 : vector<32x32xf32>
    %cst_166 = arith.constant 1.000000e+00 : f32
    %340 = vector.broadcast %cst_166 : f32 to vector<32x32xf32>
    %341 = arith.subf %340, %339 : vector<32x32xf32>
    %cst_167 = arith.constant 0.000000e+00 : f32
    %342 = vector.broadcast %cst_167 : f32 to vector<32x32xf32>
    %343 = arith.cmpf oge, %313, %342 : vector<32x32xf32>
    %cst_168 = arith.constant 0.000000e+00 : f32
    %344 = vector.broadcast %cst_168 : f32 to vector<32x32xf32>
    %345 = arith.subf %344, %341 : vector<32x32xf32>
    %346 = arith.select %343, %341, %345 : vector<32x32xi1>, vector<32x32xf32>
    %cst_169 = arith.constant 1.000000e+00 : f32
    %347 = vector.broadcast %cst_169 : f32 to vector<32x32xf32>
    %348 = arith.addf %347, %346 : vector<32x32xf32>
    %349 = arith.mulf %311, %348 : vector<32x32xf32>
    %cst_170 = arith.constant dense<0.000000e+00> : vector<32x16xf32>
    %350 = tpu.matmul %349, %202, %cst_170 {dimension_numbers = #tpu.dot_dimension_numbers<[1], [0], [0], [1], [0, 0, 1, 1], [], []>} : vector<32x32xf32>, vector<32x16xf32>, vector<32x16xf32> -> vector<32x16xf32>
    %351 = vector.broadcast %204 : vector<1x16xf32> to vector<32x16xf32>
    %352 = arith.addf %350, %351 : vector<32x16xf32>
    %353 = arith.addf %352, %284 : vector<32x16xf32>
    %c0_171 = arith.constant 0 : index
    %c0_172 = arith.constant 0 : index
    %354 = vector.load %arg18[%c0_171, %c0_172] : memref<32x16xf32, #tpu.memory_space<vmem>>, vector<32x16xf32>
    tpu.vector_store %arg18[%c0_171, %c0_172], %353 {strides = array<i32>} : memref<32x16xf32, #tpu.memory_space<vmem>>, vector<32x16xf32>,
    return
  }
  func.func @transform_0(%arg0: i32) -> (i32, i32) {
    %c0_i32 = arith.constant 0 : i32
    %c0_i32_0 = arith.constant 0 : i32
    %c0_i32_1 = arith.constant 0 : i32
    return %c0_i32, %c0_i32_0 : i32, i32
  }
  func.func @transform_1(%arg0: i32) -> (i32, i32, i32) {
    %c0_i32 = arith.constant 0 : i32
    %c0_i32_0 = arith.constant 0 : i32
    %c0_i32_1 = arith.constant 0 : i32
    %c0_i32_2 = arith.constant 0 : i32
    return %c0_i32, %c0_i32_0, %c0_i32_1 : i32, i32, i32
  }
  func.func @transform_2(%arg0: i32) -> (i32, i32, i32) {
    %c0_i32 = arith.constant 0 : i32
    %c0_i32_0 = arith.constant 0 : i32
    %c0_i32_1 = arith.constant 0 : i32
    %c0_i32_2 = arith.constant 0 : i32
    return %c0_i32, %c0_i32_0, %c0_i32_1 : i32, i32, i32
  }
  func.func @transform_3(%arg0: i32) -> (i32, i32, i32) {
    %c0_i32 = arith.constant 0 : i32
    %c0_i32_0 = arith.constant 0 : i32
    %c0_i32_1 = arith.constant 0 : i32
    %c0_i32_2 = arith.constant 0 : i32
    return %c0_i32, %c0_i32_0, %c0_i32_1 : i32, i32, i32
  }
  func.func @transform_4(%arg0: i32) -> (i32, i32, i32) {
    %c0_i32 = arith.constant 0 : i32
    %c0_i32_0 = arith.constant 0 : i32
    %c0_i32_1 = arith.constant 0 : i32
    %c0_i32_2 = arith.constant 0 : i32
    return %c0_i32, %c0_i32_0, %c0_i32_1 : i32, i32, i32
  }
  func.func @transform_5(%arg0: i32) -> (i32, i32, i32) {
    %c0_i32 = arith.constant 0 : i32
    %c0_i32_0 = arith.constant 0 : i32
    %c0_i32_1 = arith.constant 0 : i32
    %c0_i32_2 = arith.constant 0 : i32
    return %c0_i32, %c0_i32_0, %c0_i32_1 : i32, i32, i32
  }
  func.func @transform_6(%arg0: i32) -> (i32, i32, i32) {
    %c0_i32 = arith.constant 0 : i32
    %c0_i32_0 = arith.constant 0 : i32
    %c0_i32_1 = arith.constant 0 : i32
    %c0_i32_2 = arith.constant 0 : i32
    return %c0_i32, %c0_i32_0, %c0_i32_1 : i32, i32, i32
  }
  func.func @transform_7(%arg0: i32) -> (i32, i32, i32) {
    %c0_i32 = arith.constant 0 : i32
    %c0_i32_0 = arith.constant 0 : i32
    %c0_i32_1 = arith.constant 0 : i32
    %c0_i32_2 = arith.constant 0 : i32
    return %c0_i32, %c0_i32_0, %c0_i32_1 : i32, i32, i32
  }
  func.func @transform_8(%arg0: i32) -> (i32, i32, i32) {
    %c0_i32 = arith.constant 0 : i32
    %c0_i32_0 = arith.constant 0 : i32
    %c0_i32_1 = arith.constant 0 : i32
    %c0_i32_2 = arith.constant 0 : i32
    return %c0_i32, %c0_i32_0, %c0_i32_1 : i32, i32, i32
  }
  func.func @transform_9(%arg0: i32) -> (i32, i32, i32) {
    %c0_i32 = arith.constant 0 : i32
    %c0_i32_0 = arith.constant 0 : i32
    %c0_i32_1 = arith.constant 0 : i32
    %c0_i32_2 = arith.constant 0 : i32
    return %c0_i32, %c0_i32_0, %c0_i32_1 : i32, i32, i32
  }
  func.func @transform_10(%arg0: i32) -> (i32, i32, i32) {
    %c0_i32 = arith.constant 0 : i32
    %c0_i32_0 = arith.constant 0 : i32
    %c0_i32_1 = arith.constant 0 : i32
    %c0_i32_2 = arith.constant 0 : i32
    return %c0_i32, %c0_i32_0, %c0_i32_1 : i32, i32, i32
  }
  func.func @transform_11(%arg0: i32) -> (i32, i32, i32) {
    %c0_i32 = arith.constant 0 : i32
    %c0_i32_0 = arith.constant 0 : i32
    %c0_i32_1 = arith.constant 0 : i32
    %c0_i32_2 = arith.constant 0 : i32
    return %c0_i32, %c0_i32_0, %c0_i32_1 : i32, i32, i32
  }
  func.func @transform_12(%arg0: i32) -> (i32, i32, i32) {
    %c0_i32 = arith.constant 0 : i32
    %c0_i32_0 = arith.constant 0 : i32
    %c0_i32_1 = arith.constant 0 : i32
    %c0_i32_2 = arith.constant 0 : i32
    return %c0_i32, %c0_i32_0, %c0_i32_1 : i32, i32, i32
  }
  func.func @transform_13(%arg0: i32) -> (i32, i32, i32) {
    %c0_i32 = arith.constant 0 : i32
    %c0_i32_0 = arith.constant 0 : i32
    %c0_i32_1 = arith.constant 0 : i32
    %c0_i32_2 = arith.constant 0 : i32
    return %c0_i32, %c0_i32_0, %c0_i32_1 : i32, i32, i32
  }
  func.func @transform_14(%arg0: i32) -> (i32, i32) {
    %c0_i32 = arith.constant 0 : i32
    %c0_i32_0 = arith.constant 0 : i32
    %c0_i32_1 = arith.constant 0 : i32
    return %c0_i32, %c0_i32_0 : i32, i32
  }
  func.func @transform_15(%arg0: i32) -> (i32, i32) {
    %c0_i32 = arith.constant 0 : i32
    %c0_i32_0 = arith.constant 0 : i32
    %c0_i32_1 = arith.constant 0 : i32
    return %c0_i32, %c0_i32_0 : i32, i32
  }
  func.func @transform_16(%arg0: i32) -> (i32, i32) {
    %c0_i32 = arith.constant 0 : i32
    %c0_i32_0 = arith.constant 0 : i32
    %c0_i32_1 = arith.constant 0 : i32
    return %c0_i32, %c0_i32_0 : i32, i32
  }
  func.func @transform_17(%arg0: i32) -> (i32, i32) {
    %c0_i32 = arith.constant 0 : i32
    %c0_i32_0 = arith.constant 0 : i32
    %c0_i32_1 = arith.constant 0 : i32
    return %c0_i32, %c0_i32_0 : i32, i32
  }
}

</mosaic_0001>

<llo_original>
// kernel: tpu_custom_call.1
$region0: #{tpu_custom_call.1}
  #allocation0 [shape = 'u32[]', space=smem, size = 0x4, offset = 0x4, fixed_abs, tag = 'smem constant byte address 0x4 - core index']
  #allocation1 [shape = 'u32[144,128]{1,0:T(1,128)}', space=vmem, size = 0x12000, scoped, tag = 'internal scratch']
  %s0 = inlined_call_operand.vmem [shape: f32[32,16], index: 0, kind: input, shape index: {}]
  %s1 = inlined_call_operand.vmem [shape: f32[2,16,32], index: 1, kind: input, shape index: {}]
  %s2 = inlined_call_operand.vmem [shape: f32[2,16,32], index: 2, kind: input, shape index: {}]
  %s3 = inlined_call_operand.vmem [shape: f32[2,16,32], index: 3, kind: input, shape index: {}]
  %s4 = inlined_call_operand.vmem [shape: f32[2,16,32], index: 4, kind: input, shape index: {}]
  %s5 = inlined_call_operand.vmem [shape: f32[2,16,32], index: 5, kind: input, shape index: {}]
  %s6 = inlined_call_operand.vmem [shape: f32[2,32,16], index: 6, kind: input, shape index: {}]
  %s7 = inlined_call_operand.hbm [shape: f32[2,1,16], index: 7, kind: input, shape index: {}]
  %s8 = inlined_call_operand.hbm [shape: f32[2,1,16], index: 8, kind: input, shape index: {}]
  %s9 = inlined_call_operand.hbm [shape: f32[2,1,16], index: 9, kind: input, shape index: {}]
  %s10 = inlined_call_operand.vmem [shape: f32[2,16,32], index: 10, kind: input, shape index: {}]
  %s11 = inlined_call_operand.hbm [shape: f32[2,1,32], index: 11, kind: input, shape index: {}]
  %s12 = inlined_call_operand.vmem [shape: f32[2,32,16], index: 12, kind: input, shape index: {}]
  %s13 = inlined_call_operand.hbm [shape: f32[2,1,16], index: 13, kind: input, shape index: {}]
  %s14 = inlined_call_operand.vmem [shape: f32[32,32], index: 14, kind: input, shape index: {}]
  %s15 = inlined_call_operand.hbm [shape: f32[32,32], index: 15, kind: input, shape index: {}]
  %s16 = inlined_call_operand.hbm [shape: f32[32,32], index: 16, kind: input, shape index: {}]
  %s17 = inlined_call_operand.vmem [shape: f32[32,16], index: 17, kind: output, shape index: {}]
  %s18 = sld [smem:[#allocation0]]
  $region106: #{tpu_custom_call.1} parent=0
    _
  %s20 = ssub.s32 1, %s18
  %s21 = scalar_select 0, %s20, %s18
  $region1: #{tpu_custom_call.1} parent=0
    #allocation2 [shape = 'u8[1024]{0}', space=vmem, size = 0x400, scoped, tag = 'input window, operand 7, single buffered']
    #allocation3 [shape = 's32[1]{0}', space=sflag, size = 0x4, scoped, tag = 'scoped memory for tpu_custom_call.1']
    #allocation4 [shape = 'u8[1024]{0}', space=vmem, size = 0x400, scoped, tag = 'input window, operand 8, single buffered']
    #allocation5 [shape = 's32[1]{0}', space=sflag, size = 0x4, scoped, tag = 'scoped memory for tpu_custom_call.1']
    #allocation6 [shape = 'u8[1024]{0}', space=vmem, size = 0x400, scoped, tag = 'input window, operand 9, single buffered']
    #allocation7 [shape = 'u8[1024]{0}', space=vmem, size = 0x400, scoped, tag = 'input window, operand 11, single buffered']
    #allocation8 [shape = 's32[1]{0}', space=sflag, size = 0x4, scoped, tag = 'scoped memory for tpu_custom_call.1']
    #allocation9 [shape = 'u8[1024]{0}', space=vmem, size = 0x400, scoped, tag = 'input window, operand 13, single buffered']
    #allocation10 [shape = 'u8[16384]{0}', space=vmem, size = 0x4000, scoped, tag = 'input window, operand 15, single buffered']
    #allocation11 [shape = 's32[1]{0}', space=sflag, size = 0x4, scoped, tag = 'scoped memory for tpu_custom_call.1']
    #allocation12 [shape = 'u8[16384]{0}', space=vmem, size = 0x4000, scoped, tag = 'input window, operand 16, single buffered']
    %22 = vsyncpa [#allocation3], 0
    %23 = vsyncpa [#allocation5], 0
    %24 = vsyncpa [#allocation8], 0
    %25 = vsyncpa [#allocation11], 0
    // Predicated region
    $region2: #{tpu_custom_call.1} parent=1 // pred_check
      _
    $region3: #{tpu_custom_call.1} parent=1 // pred_check_branch
      %27 = sbr.rel (0) target = $region5
    $region4: #{tpu_custom_call.1} parent=1 // pred_region
      _
    $region5: #{tpu_custom_call.1} parent=1 // pred_fallthru
      _
    // Predicated region
    $region6: #{tpu_custom_call.1} parent=1 // pred_check
      _
    $region7: #{tpu_custom_call.1} parent=1 // pred_check_branch
      %29 = sbr.rel (0) target = $region9
    $region8: #{tpu_custom_call.1} parent=1 // pred_region
      _
    $region9: #{tpu_custom_call.1} parent=1 // pred_fallthru
      _
    // Predicated region
    $region10: #{tpu_custom_call.1} parent=1 // pred_check
      _
    $region11: #{tpu_custom_call.1} parent=1 // pred_check_branch
      %31 = sbr.rel (0) target = $region13
    $region12: #{tpu_custom_call.1} parent=1 // pred_region
      _
    $region13: #{tpu_custom_call.1} parent=1 // pred_fallthru
      _
    // Predicated region
    $region14: #{tpu_custom_call.1} parent=1 // pred_check
      _
    $region15: #{tpu_custom_call.1} parent=1 // pred_check_branch
      %33 = sbr.rel (0) target = $region17
    $region16: #{tpu_custom_call.1} parent=1 // pred_region
      _
    $region17: #{tpu_custom_call.1} parent=1 // pred_fallthru
      _
    // Predicated region
    $region18: #{tpu_custom_call.1} parent=1 // pred_check
      _
    $region19: #{tpu_custom_call.1} parent=1 // pred_check_branch
      %35 = sbr.rel (0) target = $region21
    $region20: #{tpu_custom_call.1} parent=1 // pred_region
      _
    $region21: #{tpu_custom_call.1} parent=1 // pred_fallthru
      _
    // Predicated region
    $region22: #{tpu_custom_call.1} parent=1 // pred_check
      _
    $region23: #{tpu_custom_call.1} parent=1 // pred_check_branch
      %37 = sbr.rel (0) target = $region25
    $region24: #{tpu_custom_call.1} parent=1 // pred_region
      _
    $region25: #{tpu_custom_call.1} parent=1 // pred_fallthru
      _
    // Predicated region
    $region26: #{tpu_custom_call.1} parent=1 // pred_check
      _
    $region27: #{tpu_custom_call.1} parent=1 // pred_check_branch
      %39 = sbr.rel (0) target = $region29
    $region28: #{tpu_custom_call.1} parent=1 // pred_region
      _
    $region29: #{tpu_custom_call.1} parent=1 // pred_fallthru
      _
    // Predicated region
    $region30: #{tpu_custom_call.1} parent=1 // pred_check
      _
    $region31: #{tpu_custom_call.1} parent=1 // pred_check_branch
      %41 = sbr.rel (0) target = $region33
    $region32: #{tpu_custom_call.1} parent=1 // pred_region
      %s43 = ssub.s32 32, 32
      %44 = vsyncadd [#allocation3], %s43
      %s45 = sshll.u32 [#allocation2], 4
      %s46 = int_to_ptr.vmem [resolvable:$true] %s45
      %51 = dma.hbm_to_vmem [thread:$0]  %s7, 32, %s46, [#allocation3], 16, 16, 1
    $region33: #{tpu_custom_call.1} parent=1 // pred_fallthru
      _
    // Predicated region
    $region34: #{tpu_custom_call.1} parent=1 // pred_check
      _
    $region35: #{tpu_custom_call.1} parent=1 // pred_check_branch
      %53 = sbr.rel (0) target = $region37
    $region36: #{tpu_custom_call.1} parent=1 // pred_region
      %s55 = ssub.s32 32, 32
      %56 = vsyncadd [#allocation5], %s55
      %s57 = sshll.u32 [#allocation4], 4
      %s58 = int_to_ptr.vmem [resolvable:$true] %s57
      %63 = dma.hbm_to_vmem [thread:$0]  %s8, 32, %s58, [#allocation5], 16, 16, 1
    $region37: #{tpu_custom_call.1} parent=1 // pred_fallthru
      _
    // Predicated region
    $region38: #{tpu_custom_call.1} parent=1 // pred_check
      _
    $region39: #{tpu_custom_call.1} parent=1 // pred_check_branch
      %65 = sbr.rel (0) target = $region41
    $region40: #{tpu_custom_call.1} parent=1 // pred_region
      %s67 = ssub.s32 32, 32
      %68 = vsyncadd [#allocation5], %s67
      %s69 = sshll.u32 [#allocation6], 4
      %s70 = int_to_ptr.vmem [resolvable:$true] %s69
      %75 = dma.hbm_to_vmem [thread:$0]  %s9, 32, %s70, [#allocation5], 16, 16, 1
    $region41: #{tpu_custom_call.1} parent=1 // pred_fallthru
      _
    // Predicated region
    $region42: #{tpu_custom_call.1} parent=1 // pred_check
      _
    $region43: #{tpu_custom_call.1} parent=1 // pred_check_branch
      %77 = sbr.rel (0) target = $region45
    $region44: #{tpu_custom_call.1} parent=1 // pred_region
      _
    $region45: #{tpu_custom_call.1} parent=1 // pred_fallthru
      _
    // Predicated region
    $region46: #{tpu_custom_call.1} parent=1 // pred_check
      _
    $region47: #{tpu_custom_call.1} parent=1 // pred_check_branch
      %79 = sbr.rel (0) target = $region49
    $region48: #{tpu_custom_call.1} parent=1 // pred_region
      %s81 = ssub.s32 32, 32
      %82 = vsyncadd [#allocation8], %s81
      %s83 = sshll.u32 [#allocation7], 4
      %s84 = int_to_ptr.vmem [resolvable:$true] %s83
      %89 = dma.hbm_to_vmem [thread:$0]  %s11, 32, %s84, [#allocation8], 16, 16, 1
    $region49: #{tpu_custom_call.1} parent=1 // pred_fallthru
      _
    // Predicated region
    $region50: #{tpu_custom_call.1} parent=1 // pred_check
      _
    $region51: #{tpu_custom_call.1} parent=1 // pred_check_branch
      %91 = sbr.rel (0) target = $region53
    $region52: #{tpu_custom_call.1} parent=1 // pred_region
      _
    $region53: #{tpu_custom_call.1} parent=1 // pred_fallthru
      _
    // Predicated region
    $region54: #{tpu_custom_call.1} parent=1 // pred_check
      _
    $region55: #{tpu_custom_call.1} parent=1 // pred_check_branch
      %93 = sbr.rel (0) target = $region57
    $region56: #{tpu_custom_call.1} parent=1 // pred_region
      %s95 = ssub.s32 32, 32
      %96 = vsyncadd [#allocation8], %s95
      %s97 = sshll.u32 [#allocation9], 4
      %s98 = int_to_ptr.vmem [resolvable:$true] %s97
      %103 = dma.hbm_to_vmem [thread:$0]  %s13, 32, %s98, [#allocation8], 16, 16, 1
    $region57: #{tpu_custom_call.1} parent=1 // pred_fallthru
      _
    // Predicated region
    $region58: #{tpu_custom_call.1} parent=1 // pred_check
      _
    $region59: #{tpu_custom_call.1} parent=1 // pred_check_branch
      %105 = sbr.rel (0) target = $region61
    $region60: #{tpu_custom_call.1} parent=1 // pred_region
      _
    $region61: #{tpu_custom_call.1} parent=1 // pred_fallthru
      _
    // Predicated region
    $region62: #{tpu_custom_call.1} parent=1 // pred_check
      _
    $region63: #{tpu_custom_call.1} parent=1 // pred_check_branch
      %107 = sbr.rel (0) target = $region65
    $region64: #{tpu_custom_call.1} parent=1 // pred_region
      %s109 = ssub.s32 512, 512
      %110 = vsyncadd [#allocation11], %s109
      %s111 = sshll.u32 [#allocation10], 4
      %s112 = int_to_ptr.vmem [resolvable:$true] %s111
      %117 = dma.hbm_to_vmem [thread:$0]  %s15, 512, %s112, [#allocation11], 128, 128, 8
    $region65: #{tpu_custom_call.1} parent=1 // pred_fallthru
      _
    // Predicated region
    $region66: #{tpu_custom_call.1} parent=1 // pred_check
      _
    $region67: #{tpu_custom_call.1} parent=1 // pred_check_branch
      %119 = sbr.rel (0) target = $region69
    $region68: #{tpu_custom_call.1} parent=1 // pred_region
      %s121 = ssub.s32 512, 512
      %122 = vsyncadd [#allocation11], %s121
      %s123 = sshll.u32 [#allocation12], 4
      %s124 = int_to_ptr.vmem [resolvable:$true] %s123
      %129 = dma.hbm_to_vmem [thread:$0]  %s16, 512, %s124, [#allocation11], 128, 128, 8
    $region69: #{tpu_custom_call.1} parent=1 // pred_fallthru
      _
    // Predicated region
    $region70: #{tpu_custom_call.1} parent=1 // pred_check
      _
    $region71: #{tpu_custom_call.1} parent=1 // pred_check_branch
      %131 = sbr.rel (0) target = $region73
    $region72: #{tpu_custom_call.1} parent=1 // pred_region
      %132 = dma.done [#allocation3], 32
    $region73: #{tpu_custom_call.1} parent=1 // pred_fallthru
      _
    // Predicated region
    $region74: #{tpu_custom_call.1} parent=1 // pred_check
      _
    $region75: #{tpu_custom_call.1} parent=1 // pred_check_branch
      %134 = sbr.rel (0) target = $region77
    $region76: #{tpu_custom_call.1} parent=1 // pred_region
      %135 = dma.done [#allocation5], 32
    $region77: #{tpu_custom_call.1} parent=1 // pred_fallthru
      _
    // Predicated region
    $region78: #{tpu_custom_call.1} parent=1 // pred_check
      _
    $region79: #{tpu_custom_call.1} parent=1 // pred_check_branch
      %137 = sbr.rel (0) target = $region81
    $region80: #{tpu_custom_call.1} parent=1 // pred_region
      %138 = dma.done [#allocation5], 32
    $region81: #{tpu_custom_call.1} parent=1 // pred_fallthru
      _
    // Predicated region
    $region82: #{tpu_custom_call.1} parent=1 // pred_check
      _
    $region83: #{tpu_custom_call.1} parent=1 // pred_check_branch
      %140 = sbr.rel (0) target = $region85
    $region84: #{tpu_custom_call.1} parent=1 // pred_region
      %141 = dma.done [#allocation8], 32
    $region85: #{tpu_custom_call.1} parent=1 // pred_fallthru
      _
    // Predicated region
    $region86: #{tpu_custom_call.1} parent=1 // pred_check
      _
    $region87: #{tpu_custom_call.1} parent=1 // pred_check_branch
      %143 = sbr.rel (0) target = $region89
    $region88: #{tpu_custom_call.1} parent=1 // pred_region
      %144 = dma.done [#allocation8], 32
    $region89: #{tpu_custom_call.1} parent=1 // pred_fallthru
      _
    // Predicated region
    $region90: #{tpu_custom_call.1} parent=1 // pred_check
      _
    $region91: #{tpu_custom_call.1} parent=1 // pred_check_branch
      %146 = sbr.rel (0) target = $region93
    $region92: #{tpu_custom_call.1} parent=1 // pred_region
      %147 = dma.done [#allocation11], 512
    $region93: #{tpu_custom_call.1} parent=1 // pred_fallthru
      _
    // Predicated region
    $region94: #{tpu_custom_call.1} parent=1 // pred_check
      _
    $region95: #{tpu_custom_call.1} parent=1 // pred_check_branch
      %149 = sbr.rel (0) target = $region97
    $region96: #{tpu_custom_call.1} parent=1 // pred_region
      %150 = dma.done [#allocation11], 512
    $region97: #{tpu_custom_call.1} parent=1 // pred_fallthru
      _
    %v151 = vld [vmem:[%s0] sm:$0xff]
    %v152 = vld [vmem:[%s0 + $0x8] sm:$0xff]
    %v153 = vld [vmem:[%s0 + $0x10] sm:$0xff]
    %v154 = vld [vmem:[%s0 + $0x18] sm:$0xff]
    %v155 = vld [vmem:[%s14] sm:$0xff]
    %v156 = vld [vmem:[%s14 + $0x8] sm:$0xff]
    %v157 = vld [vmem:[%s14 + $0x10] sm:$0xff]
    %v158 = vld [vmem:[%s14 + $0x18] sm:$0xff]
    %v159 = vld [vmem:[#allocation10] sm:$0xff]
    %v160 = vld [vmem:[#allocation10 + $0x8] sm:$0xff]
    %v161 = vld [vmem:[#allocation10 + $0x10] sm:$0xff]
    %v162 = vld [vmem:[#allocation10 + $0x18] sm:$0xff]
    %v163 = vld [vmem:[#allocation12] sm:$0xff]
    %v164 = vld [vmem:[#allocation12 + $0x8] sm:$0xff]
    %v165 = vld [vmem:[#allocation12 + $0x10] sm:$0xff]
    %v166 = vld [vmem:[#allocation12 + $0x18] sm:$0xff]
    %v167 = vld [vmem:[%s1] sm:$0xff]
    %v168 = vld [vmem:[%s1 + $0x8] sm:$0xff]
    %v169 = vld [vmem:[%s2] sm:$0xff]
    %v170 = vld [vmem:[%s2 + $0x8] sm:$0xff]
    %v171 = vld [vmem:[%s3] sm:$0xff]
    %v172 = vld [vmem:[%s3 + $0x8] sm:$0xff]
    %v173 = vld [vmem:[%s4] sm:$0xff]
    %v174 = vld [vmem:[%s4 + $0x8] sm:$0xff]
    %v175 = vld [vmem:[%s5] sm:$0xff]
    %v176 = vld [vmem:[%s5 + $0x8] sm:$0xff]
    %v177 = vld [vmem:[%s6] sm:$0xff]
    %v178 = vld [vmem:[%s6 + $0x8] sm:$0xff]
    %v179 = vld [vmem:[%s6 + $0x10] sm:$0xff]
    %v180 = vld [vmem:[%s6 + $0x18] sm:$0xff]
    %v181 = vld [vmem:[#allocation2] sm:$0x1]
    %v182 = vld [vmem:[#allocation4] sm:$0x1]
    %v183 = vld [vmem:[#allocation6] sm:$0x1]
    %v184 = vld [vmem:[%s10] sm:$0xff]
    %v185 = vld [vmem:[%s10 + $0x8] sm:$0xff]
    %v186 = vld [vmem:[#allocation7] sm:$0x1]
    %v187 = vld [vmem:[%s12] sm:$0xff]
    %v188 = vld [vmem:[%s12 + $0x8] sm:$0xff]
    %v189 = vld [vmem:[%s12 + $0x10] sm:$0xff]
    %v190 = vld [vmem:[%s12 + $0x18] sm:$0xff]
    %v191 = vld [vmem:[#allocation9] sm:$0x1]
    %vm192 = vcmask 130048
    %v194 = vsel %vm192, %v151, 0
    %v197 = vsel %vm192, %v152, 0
    %v200 = vsel %vm192, %v153, 0
    %v203 = vsel %vm192, %v154, 0
    %205 = vmatprep.subr.mxu0 0.0
    %206 = vmatpush1.msra.mxu0 %v167
    %207 = vmatprep.subr.mxu0 0.0
    %208 = vmatpush1.msra.mxu0 %v168
    %209 = vmatprep.subr.mxu0 0.0
    %210 = vmatpush1.msra.mxu0 0.0
    %211 = vmatprep.subr.mxu0 0.0
    %212 = vmatpush1.msra.mxu0 0.0
    %213 = vmatprep.subr.mxu0 0.0
    %214 = vmatpush1.msra.mxu0 0.0
    %215 = vmatprep.subr.mxu0 0.0
    %216 = vmatpush1.msra.mxu0 0.0
    %217 = vmatprep.subr.mxu0 0.0
    %218 = vmatpush1.msra.mxu0 0.0
    %219 = vmatprep.subr.mxu0 0.0
    %220 = vmatpush1.msra.mxu0 0.0
    %221 = vmatprep.subr.mxu0 0.0
    %222 = vmatpush1.msra.mxu0 0.0
    %223 = vmatprep.subr.mxu0 0.0
    %224 = vmatpush1.msra.mxu0 0.0
    %225 = vmatprep.subr.mxu0 0.0
    %226 = vmatpush1.msra.mxu0 0.0
    %227 = vmatprep.subr.mxu0 0.0
    %228 = vmatpush1.msra.mxu0 0.0
    %229 = vmatprep.subr.mxu0 0.0
    %230 = vmatpush1.msra.mxu0 0.0
    %231 = vmatprep.subr.mxu0 0.0
    %232 = vmatpush1.msra.mxu0 0.0
    %233 = vmatprep.subr.mxu0 0.0
    %234 = vmatpush1.msra.mxu0 0.0
    %235 = vmatprep.subr.mxu0 0.0
    %236 = vmatpush1.msra.mxu0 0.0
    %237 = vmatprep.subr.mxu0 0.0
    %238 = vmatpush1.msra.mxu0 0.0
    %239 = vmatprep.subr.mxu0 0.0
    %240 = vmatpush1.msra.mxu0 0.0
    %241 = vmatprep.subr.mxu0 0.0
    %242 = vmatpush1.msra.mxu0 0.0
    %243 = vmatprep.subr.mxu0 0.0
    %244 = vmatpush1.msra.mxu0 0.0
    %245 = vmatprep.subr.mxu0 0.0
    %246 = vmatpush1.msra.mxu0 0.0
    %247 = vmatprep.subr.mxu0 0.0
    %248 = vmatpush1.msra.mxu0 0.0
    %249 = vmatprep.subr.mxu0 0.0
    %250 = vmatpush1.msra.mxu0 0.0
    %251 = vmatprep.subr.mxu0 0.0
    %252 = vmatpush1.msra.mxu0 0.0
    %253 = vmatprep.subr.mxu0 0.0
    %254 = vmatpush1.msra.mxu0 0.0
    %255 = vmatprep.subr.mxu0 0.0
    %256 = vmatpush1.msra.mxu0 0.0
    %257 = vmatprep.subr.mxu0 0.0
    %258 = vmatpush1.msra.mxu0 0.0
    %259 = vmatprep.subr.mxu0 0.0
    %260 = vmatpush1.msra.mxu0 0.0
    %261 = vmatprep.subr.mxu0 0.0
    %262 = vmatpush1.msra.mxu0 0.0
    %263 = vmatprep.subr.mxu0 0.0
    %264 = vmatpush1.msra.mxu0 0.0
    %265 = vmatprep.subr.mxu0 0.0
    %266 = vmatpush1.msra.mxu0 0.0
    %267 = vmatprep.subr.mxu0 0.0
    %268 = vmatpush1.msra.mxu0 0.0
    %269 = vmatprep.mubr.f32.mxu0 0.0
    %270 = vmatmul.mubr.f32.gmra.mrb[0].mxu0 %v194
    %v271 = vpop.f32.mrb[0].mxu0
    %v272 = vadd.f32 0.0, %v271
    %v273 = vpop.f32.mrb[0].mxu0
    %274 = vmatprep.mubr.f32.mxu0 0.0
    %275 = vmatmul.mubr.f32.gmra.mrb[0].mxu0 %v197
    %v276 = vpop.f32.mrb[0].mxu0
    %v277 = vadd.f32 0.0, %v276
    %v278 = vpop.f32.mrb[0].mxu0
    %279 = vmatprep.mubr.f32.mxu0 0.0
    %280 = vmatmul.mubr.f32.gmra.mrb[0].mxu0 %v200
    %v281 = vpop.f32.mrb[0].mxu0
    %v282 = vadd.f32 0.0, %v281
    %v283 = vpop.f32.mrb[0].mxu0
    %284 = vmatprep.mubr.f32.mxu0 0.0
    %285 = vmatmul.mubr.f32.gmra.mrb[0].mxu0 %v203
    %v286 = vpop.f32.mrb[0].mxu0
    %v287 = vadd.f32 0.0, %v286
    %v288 = vpop.f32.mrb[0].mxu0
    %289 = vdwg.mxu0
    %v290 = vmul.f32 %v272, %v155
    %v291 = vmul.f32 %v277, %v156
    %v292 = vmul.f32 %v282, %v157
    %v293 = vmul.f32 %v287, %v158
    %294 = vmatprep.subr.mxu0 0.0
    %295 = vmatpush1.msra.mxu0 %v169
    %296 = vmatprep.subr.mxu0 0.0
    %297 = vmatpush1.msra.mxu0 %v170
    %298 = vmatprep.subr.mxu0 0.0
    %299 = vmatpush1.msra.mxu0 0.0
    %300 = vmatprep.subr.mxu0 0.0
    %301 = vmatpush1.msra.mxu0 0.0
    %302 = vmatprep.subr.mxu0 0.0
    %303 = vmatpush1.msra.mxu0 0.0
    %304 = vmatprep.subr.mxu0 0.0
    %305 = vmatpush1.msra.mxu0 0.0
    %306 = vmatprep.subr.mxu0 0.0
    %307 = vmatpush1.msra.mxu0 0.0
    %308 = vmatprep.subr.mxu0 0.0
    %309 = vmatpush1.msra.mxu0 0.0
    %310 = vmatprep.subr.mxu0 0.0
    %311 = vmatpush1.msra.mxu0 0.0
    %312 = vmatprep.subr.mxu0 0.0
    %313 = vmatpush1.msra.mxu0 0.0
    %314 = vmatprep.subr.mxu0 0.0
    %315 = vmatpush1.msra.mxu0 0.0
    %316 = vmatprep.subr.mxu0 0.0
    %317 = vmatpush1.msra.mxu0 0.0
    %318 = vmatprep.subr.mxu0 0.0
    %319 = vmatpush1.msra.mxu0 0.0
    %320 = vmatprep.subr.mxu0 0.0
    %321 = vmatpush1.msra.mxu0 0.0
    %322 = vmatprep.subr.mxu0 0.0
    %323 = vmatpush1.msra.mxu0 0.0
    %324 = vmatprep.subr.mxu0 0.0
    %325 = vmatpush1.msra.mxu0 0.0
    %326 = vmatprep.subr.mxu0 0.0
    %327 = vmatpush1.msra.mxu0 0.0
    %328 = vmatprep.subr.mxu0 0.0
    %329 = vmatpush1.msra.mxu0 0.0
    %330 = vmatprep.subr.mxu0 0.0
    %331 = vmatpush1.msra.mxu0 0.0
    %332 = vmatprep.subr.mxu0 0.0
    %333 = vmatpush1.msra.mxu0 0.0
    %334 = vmatprep.subr.mxu0 0.0
    %335 = vmatpush1.msra.mxu0 0.0
    %336 = vmatprep.subr.mxu0 0.0
    %337 = vmatpush1.msra.mxu0 0.0
    %338 = vmatprep.subr.mxu0 0.0
    %339 = vmatpush1.msra.mxu0 0.0
    %340 = vmatprep.subr.mxu0 0.0
    %341 = vmatpush1.msra.mxu0 0.0
    %342 = vmatprep.subr.mxu0 0.0
    %343 = vmatpush1.msra.mxu0 0.0
    %344 = vmatprep.subr.mxu0 0.0
    %345 = vmatpush1.msra.mxu0 0.0
    %346 = vmatprep.subr.mxu0 0.0
    %347 = vmatpush1.msra.mxu0 0.0
    %348 = vmatprep.subr.mxu0 0.0
    %349 = vmatpush1.msra.mxu0 0.0
    %350 = vmatprep.subr.mxu0 0.0
    %351 = vmatpush1.msra.mxu0 0.0
    %352 = vmatprep.subr.mxu0 0.0
    %353 = vmatpush1.msra.mxu0 0.0
    %354 = vmatprep.subr.mxu0 0.0
    %355 = vmatpush1.msra.mxu0 0.0
    %356 = vmatprep.subr.mxu0 0.0
    %357 = vmatpush1.msra.mxu0 0.0
    %358 = vmatprep.mubr.f32.mxu0 0.0
    %359 = vmatmul.mubr.f32.gmra.mrb[0].mxu0 %v194
    %v360 = vpop.f32.mrb[0].mxu0
    %v361 = vadd.f32 0.0, %v360
    %v362 = vpop.f32.mrb[0].mxu0
    %363 = vmatprep.mubr.f32.mxu0 0.0
    %364 = vmatmul.mubr.f32.gmra.mrb[0].mxu0 %v197
    %v365 = vpop.f32.mrb[0].mxu0
    %v366 = vadd.f32 0.0, %v365
    %v367 = vpop.f32.mrb[0].mxu0
    %368 = vmatprep.mubr.f32.mxu0 0.0
    %369 = vmatmul.mubr.f32.gmra.mrb[0].mxu0 %v200
    %v370 = vpop.f32.mrb[0].mxu0
    %v371 = vadd.f32 0.0, %v370
    %v372 = vpop.f32.mrb[0].mxu0
    %373 = vmatprep.mubr.f32.mxu0 0.0
    %374 = vmatmul.mubr.f32.gmra.mrb[0].mxu0 %v203
    %v375 = vpop.f32.mrb[0].mxu0
    %v376 = vadd.f32 0.0, %v375
    %v377 = vpop.f32.mrb[0].mxu0
    %378 = vdwg.mxu0
    %v379 = vmul.f32 %v361, %v159
    %v380 = vmul.f32 %v366, %v160
    %v381 = vmul.f32 %v371, %v161
    %v382 = vmul.f32 %v376, %v162
    %v383 = vadd.f32 %v290, %v379
    %v384 = vadd.f32 %v291, %v380
    %v385 = vadd.f32 %v292, %v381
    %v386 = vadd.f32 %v293, %v382
    %387 = vmatprep.subr.mxu0 0.0
    %388 = vmatpush1.msra.mxu0 %v171
    %389 = vmatprep.subr.mxu0 0.0
    %390 = vmatpush1.msra.mxu0 %v172
    %391 = vmatprep.subr.mxu0 0.0
    %392 = vmatpush1.msra.mxu0 0.0
    %393 = vmatprep.subr.mxu0 0.0
    %394 = vmatpush1.msra.mxu0 0.0
    %395 = vmatprep.subr.mxu0 0.0
    %396 = vmatpush1.msra.mxu0 0.0
    %397 = vmatprep.subr.mxu0 0.0
    %398 = vmatpush1.msra.mxu0 0.0
    %399 = vmatprep.subr.mxu0 0.0
    %400 = vmatpush1.msra.mxu0 0.0
    %401 = vmatprep.subr.mxu0 0.0
    %402 = vmatpush1.msra.mxu0 0.0
    %403 = vmatprep.subr.mxu0 0.0
    %404 = vmatpush1.msra.mxu0 0.0
    %405 = vmatprep.subr.mxu0 0.0
    %406 = vmatpush1.msra.mxu0 0.0
    %407 = vmatprep.subr.mxu0 0.0
    %408 = vmatpush1.msra.mxu0 0.0
    %409 = vmatprep.subr.mxu0 0.0
    %410 = vmatpush1.msra.mxu0 0.0
    %411 = vmatprep.subr.mxu0 0.0
    %412 = vmatpush1.msra.mxu0 0.0
    %413 = vmatprep.subr.mxu0 0.0
    %414 = vmatpush1.msra.mxu0 0.0
    %415 = vmatprep.subr.mxu0 0.0
    %416 = vmatpush1.msra.mxu0 0.0
    %417 = vmatprep.subr.mxu0 0.0
    %418 = vmatpush1.msra.mxu0 0.0
    %419 = vmatprep.subr.mxu0 0.0
    %420 = vmatpush1.msra.mxu0 0.0
    %421 = vmatprep.subr.mxu0 0.0
    %422 = vmatpush1.msra.mxu0 0.0
    %423 = vmatprep.subr.mxu0 0.0
    %424 = vmatpush1.msra.mxu0 0.0
    %425 = vmatprep.subr.mxu0 0.0
    %426 = vmatpush1.msra.mxu0 0.0
    %427 = vmatprep.subr.mxu0 0.0
    %428 = vmatpush1.msra.mxu0 0.0
    %429 = vmatprep.subr.mxu0 0.0
    %430 = vmatpush1.msra.mxu0 0.0
    %431 = vmatprep.subr.mxu0 0.0
    %432 = vmatpush1.msra.mxu0 0.0
    %433 = vmatprep.subr.mxu0 0.0
    %434 = vmatpush1.msra.mxu0 0.0
    %435 = vmatprep.subr.mxu0 0.0
    %436 = vmatpush1.msra.mxu0 0.0
    %437 = vmatprep.subr.mxu0 0.0
    %438 = vmatpush1.msra.mxu0 0.0
    %439 = vmatprep.subr.mxu0 0.0
    %440 = vmatpush1.msra.mxu0 0.0
    %441 = vmatprep.subr.mxu0 0.0
    %442 = vmatpush1.msra.mxu0 0.0
    %443 = vmatprep.subr.mxu0 0.0
    %444 = vmatpush1.msra.mxu0 0.0
    %445 = vmatprep.subr.mxu0 0.0
    %446 = vmatpush1.msra.mxu0 0.0
    %447 = vmatprep.subr.mxu0 0.0
    %448 = vmatpush1.msra.mxu0 0.0
    %449 = vmatprep.subr.mxu0 0.0
    %450 = vmatpush1.msra.mxu0 0.0
    %451 = vmatprep.mubr.f32.mxu0 0.0
    %452 = vmatmul.mubr.f32.gmra.mrb[0].mxu0 %v194
    %v453 = vpop.f32.mrb[0].mxu0
    %v454 = vadd.f32 0.0, %v453
    %v455 = vpop.f32.mrb[0].mxu0
    %456 = vmatprep.mubr.f32.mxu0 0.0
    %457 = vmatmul.mubr.f32.gmra.mrb[0].mxu0 %v197
    %v458 = vpop.f32.mrb[0].mxu0
    %v459 = vadd.f32 0.0, %v458
    %v460 = vpop.f32.mrb[0].mxu0
    %461 = vmatprep.mubr.f32.mxu0 0.0
    %462 = vmatmul.mubr.f32.gmra.mrb[0].mxu0 %v200
    %v463 = vpop.f32.mrb[0].mxu0
    %v464 = vadd.f32 0.0, %v463
    %v465 = vpop.f32.mrb[0].mxu0
    %466 = vmatprep.mubr.f32.mxu0 0.0
    %467 = vmatmul.mubr.f32.gmra.mrb[0].mxu0 %v203
    %v468 = vpop.f32.mrb[0].mxu0
    %v469 = vadd.f32 0.0, %v468
    %v470 = vpop.f32.mrb[0].mxu0
    %471 = vdwg.mxu0
    %v472 = vmul.f32 %v454, %v155
    %v473 = vmul.f32 %v459, %v156
    %v474 = vmul.f32 %v464, %v157
    %v475 = vmul.f32 %v469, %v158
    %476 = vmatprep.subr.mxu0 0.0
    %477 = vmatpush1.msra.mxu0 %v173
    %478 = vmatprep.subr.mxu0 0.0
    %479 = vmatpush1.msra.mxu0 %v174
    %480 = vmatprep.subr.mxu0 0.0
    %481 = vmatpush1.msra.mxu0 0.0
    %482 = vmatprep.subr.mxu0 0.0
    %483 = vmatpush1.msra.mxu0 0.0
    %484 = vmatprep.subr.mxu0 0.0
    %485 = vmatpush1.msra.mxu0 0.0
    %486 = vmatprep.subr.mxu0 0.0
    %487 = vmatpush1.msra.mxu0 0.0
    %488 = vmatprep.subr.mxu0 0.0
    %489 = vmatpush1.msra.mxu0 0.0
    %490 = vmatprep.subr.mxu0 0.0
    %491 = vmatpush1.msra.mxu0 0.0
    %492 = vmatprep.subr.mxu0 0.0
    %493 = vmatpush1.msra.mxu0 0.0
    %494 = vmatprep.subr.mxu0 0.0
    %495 = vmatpush1.msra.mxu0 0.0
    %496 = vmatprep.subr.mxu0 0.0
    %497 = vmatpush1.msra.mxu0 0.0
    %498 = vmatprep.subr.mxu0 0.0
    %499 = vmatpush1.msra.mxu0 0.0
    %500 = vmatprep.subr.mxu0 0.0
    %501 = vmatpush1.msra.mxu0 0.0
    %502 = vmatprep.subr.mxu0 0.0
    %503 = vmatpush1.msra.mxu0 0.0
    %504 = vmatprep.subr.mxu0 0.0
    %505 = vmatpush1.msra.mxu0 0.0
    %506 = vmatprep.subr.mxu0 0.0
    %507 = vmatpush1.msra.mxu0 0.0
    %508 = vmatprep.subr.mxu0 0.0
    %509 = vmatpush1.msra.mxu0 0.0
    %510 = vmatprep.subr.mxu0 0.0
    %511 = vmatpush1.msra.mxu0 0.0
    %512 = vmatprep.subr.mxu0 0.0
    %513 = vmatpush1.msra.mxu0 0.0
    %514 = vmatprep.subr.mxu0 0.0
    %515 = vmatpush1.msra.mxu0 0.0
    %516 = vmatprep.subr.mxu0 0.0
    %517 = vmatpush1.msra.mxu0 0.0
    %518 = vmatprep.subr.mxu0 0.0
    %519 = vmatpush1.msra.mxu0 0.0
    %520 = vmatprep.subr.mxu0 0.0
    %521 = vmatpush1.msra.mxu0 0.0
    %522 = vmatprep.subr.mxu0 0.0
    %523 = vmatpush1.msra.mxu0 0.0
    %524 = vmatprep.subr.mxu0 0.0
    %525 = vmatpush1.msra.mxu0 0.0
    %526 = vmatprep.subr.mxu0 0.0
    %527 = vmatpush1.msra.mxu0 0.0
    %528 = vmatprep.subr.mxu0 0.0
    %529 = vmatpush1.msra.mxu0 0.0
    %530 = vmatprep.subr.mxu0 0.0
    %531 = vmatpush1.msra.mxu0 0.0
    %532 = vmatprep.subr.mxu0 0.0
    %533 = vmatpush1.msra.mxu0 0.0
    %534 = vmatprep.subr.mxu0 0.0
    %535 = vmatpush1.msra.mxu0 0.0
    %536 = vmatprep.subr.mxu0 0.0
    %537 = vmatpush1.msra.mxu0 0.0
    %538 = vmatprep.subr.mxu0 0.0
    %539 = vmatpush1.msra.mxu0 0.0
    %540 = vmatprep.mubr.f32.mxu0 0.0
    %541 = vmatmul.mubr.f32.gmra.mrb[0].mxu0 %v194
    %v542 = vpop.f32.mrb[0].mxu0
    %v543 = vadd.f32 0.0, %v542
    %v544 = vpop.f32.mrb[0].mxu0
    %545 = vmatprep.mubr.f32.mxu0 0.0
    %546 = vmatmul.mubr.f32.gmra.mrb[0].mxu0 %v197
    %v547 = vpop.f32.mrb[0].mxu0
    %v548 = vadd.f32 0.0, %v547
    %v549 = vpop.f32.mrb[0].mxu0
    %550 = vmatprep.mubr.f32.mxu0 0.0
    %551 = vmatmul.mubr.f32.gmra.mrb[0].mxu0 %v200
    %v552 = vpop.f32.mrb[0].mxu0
    %v553 = vadd.f32 0.0, %v552
    %v554 = vpop.f32.mrb[0].mxu0
    %555 = vmatprep.mubr.f32.mxu0 0.0
    %556 = vmatmul.mubr.f32.gmra.mrb[0].mxu0 %v203
    %v557 = vpop.f32.mrb[0].mxu0
    %v558 = vadd.f32 0.0, %v557
    %v559 = vpop.f32.mrb[0].mxu0
    %560 = vdwg.mxu0
    %v561 = vmul.f32 %v543, %v159
    %v562 = vmul.f32 %v548, %v160
    %v563 = vmul.f32 %v553, %v161
    %v564 = vmul.f32 %v558, %v162
    %v565 = vadd.f32 %v472, %v561
    %v566 = vadd.f32 %v473, %v562
    %v567 = vadd.f32 %v474, %v563
    %v568 = vadd.f32 %v475, %v564
    %569 = vmatprep.subr.mxu0 0.0
    %570 = vmatpush1.msra.mxu0 %v175
    %571 = vmatprep.subr.mxu0 0.0
    %572 = vmatpush1.msra.mxu0 %v176
    %573 = vmatprep.subr.mxu0 0.0
    %574 = vmatpush1.msra.mxu0 0.0
    %575 = vmatprep.subr.mxu0 0.0
    %576 = vmatpush1.msra.mxu0 0.0
    %577 = vmatprep.subr.mxu0 0.0
    %578 = vmatpush1.msra.mxu0 0.0
    %579 = vmatprep.subr.mxu0 0.0
    %580 = vmatpush1.msra.mxu0 0.0
    %581 = vmatprep.subr.mxu0 0.0
    %582 = vmatpush1.msra.mxu0 0.0
    %583 = vmatprep.subr.mxu0 0.0
    %584 = vmatpush1.msra.mxu0 0.0
    %585 = vmatprep.subr.mxu0 0.0
    %586 = vmatpush1.msra.mxu0 0.0
    %587 = vmatprep.subr.mxu0 0.0
    %588 = vmatpush1.msra.mxu0 0.0
    %589 = vmatprep.subr.mxu0 0.0
    %590 = vmatpush1.msra.mxu0 0.0
    %591 = vmatprep.subr.mxu0 0.0
    %592 = vmatpush1.msra.mxu0 0.0
    %593 = vmatprep.subr.mxu0 0.0
    %594 = vmatpush1.msra.mxu0 0.0
    %595 = vmatprep.subr.mxu0 0.0
    %596 = vmatpush1.msra.mxu0 0.0
    %597 = vmatprep.subr.mxu0 0.0
    %598 = vmatpush1.msra.mxu0 0.0
    %599 = vmatprep.subr.mxu0 0.0
    %600 = vmatpush1.msra.mxu0 0.0
    %601 = vmatprep.subr.mxu0 0.0
    %602 = vmatpush1.msra.mxu0 0.0
    %603 = vmatprep.subr.mxu0 0.0
    %604 = vmatpush1.msra.mxu0 0.0
    %605 = vmatprep.subr.mxu0 0.0
    %606 = vmatpush1.msra.mxu0 0.0
    %607 = vmatprep.subr.mxu0 0.0
    %608 = vmatpush1.msra.mxu0 0.0
    %609 = vmatprep.subr.mxu0 0.0
    %610 = vmatpush1.msra.mxu0 0.0
    %611 = vmatprep.subr.mxu0 0.0
    %612 = vmatpush1.msra.mxu0 0.0
    %613 = vmatprep.subr.mxu0 0.0
    %614 = vmatpush1.msra.mxu0 0.0
    %615 = vmatprep.subr.mxu0 0.0
    %616 = vmatpush1.msra.mxu0 0.0
    %617 = vmatprep.subr.mxu0 0.0
    %618 = vmatpush1.msra.mxu0 0.0
    %619 = vmatprep.subr.mxu0 0.0
    %620 = vmatpush1.msra.mxu0 0.0
    %621 = vmatprep.subr.mxu0 0.0
    %622 = vmatpush1.msra.mxu0 0.0
    %623 = vmatprep.subr.mxu0 0.0
    %624 = vmatpush1.msra.mxu0 0.0
    %625 = vmatprep.subr.mxu0 0.0
    %626 = vmatpush1.msra.mxu0 0.0
    %627 = vmatprep.subr.mxu0 0.0
    %628 = vmatpush1.msra.mxu0 0.0
    %629 = vmatprep.subr.mxu0 0.0
    %630 = vmatpush1.msra.mxu0 0.0
    %631 = vmatprep.subr.mxu0 0.0
    %632 = vmatpush1.msra.mxu0 0.0
    %633 = vmatprep.mubr.f32.mxu0 0.0
    %634 = vmatmul.mubr.f32.gmra.mrb[0].mxu0 %v194
    %v635 = vpop.f32.mrb[0].mxu0
    %v636 = vadd.f32 0.0, %v635
    %v637 = vpop.f32.mrb[0].mxu0
    %638 = vmatprep.mubr.f32.mxu0 0.0
    %639 = vmatmul.mubr.f32.gmra.mrb[0].mxu0 %v197
    %v640 = vpop.f32.mrb[0].mxu0
    %v641 = vadd.f32 0.0, %v640
    %v642 = vpop.f32.mrb[0].mxu0
    %643 = vmatprep.mubr.f32.mxu0 0.0
    %644 = vmatmul.mubr.f32.gmra.mrb[0].mxu0 %v200
    %v645 = vpop.f32.mrb[0].mxu0
    %v646 = vadd.f32 0.0, %v645
    %v647 = vpop.f32.mrb[0].mxu0
    %648 = vmatprep.mubr.f32.mxu0 0.0
    %649 = vmatmul.mubr.f32.gmra.mrb[0].mxu0 %v203
    %v650 = vpop.f32.mrb[0].mxu0
    %v651 = vadd.f32 0.0, %v650
    %v652 = vpop.f32.mrb[0].mxu0
    %653 = vdwg.mxu0
    %vm654 = vcmask 64512
    %v656 = vsel %vm654, %v383, 0
    %v659 = vsel %vm654, %v384, 0
    %v662 = vsel %vm654, %v385, 0
    %v665 = vsel %vm654, %v386, 0
    %v668 = vsel %vm654, %v565, 0
    %v671 = vsel %vm654, %v566, 0
    %v674 = vsel %vm654, %v567, 0
    %v677 = vsel %vm654, %v568, 0
    %679 = vmatprep.subr.mxu0 0.0
    %680 = vmatpush1.xpose.msra.mxu0 %v668
    %681 = vmatprep.subr.mxu0 0.0
    %682 = vmatpush1.xpose.msra.mxu0 %v671
    %683 = vmatprep.subr.mxu0 0.0
    %684 = vmatpush1.xpose.msra.mxu0 %v674
    %685 = vmatprep.subr.mxu0 0.0
    %686 = vmatpush1.xpose.msra.mxu0 %v677
    %687 = vmatprep.subr.mxu0 0.0
    %688 = vmatpush1.xpose.msra.mxu0 0.0
    %689 = vmatprep.subr.mxu0 0.0
    %690 = vmatpush1.xpose.msra.mxu0 0.0
    %691 = vmatprep.subr.mxu0 0.0
    %692 = vmatpush1.xpose.msra.mxu0 0.0
    %693 = vmatprep.subr.mxu0 0.0
    %694 = vmatpush1.xpose.msra.mxu0 0.0
    %695 = vmatprep.subr.mxu0 0.0
    %696 = vmatpush1.xpose.msra.mxu0 0.0
    %697 = vmatprep.subr.mxu0 0.0
    %698 = vmatpush1.xpose.msra.mxu0 0.0
    %699 = vmatprep.subr.mxu0 0.0
    %700 = vmatpush1.xpose.msra.mxu0 0.0
    %701 = vmatprep.subr.mxu0 0.0
    %702 = vmatpush1.xpose.msra.mxu0 0.0
    %703 = vmatprep.subr.mxu0 0.0
    %704 = vmatpush1.xpose.msra.mxu0 0.0
    %705 = vmatprep.subr.mxu0 0.0
    %706 = vmatpush1.xpose.msra.mxu0 0.0
    %707 = vmatprep.subr.mxu0 0.0
    %708 = vmatpush1.xpose.msra.mxu0 0.0
    %709 = vmatprep.subr.mxu0 0.0
    %710 = vmatpush1.xpose.msra.mxu0 0.0
    %711 = vmatprep.subr.mxu0 0.0
    %712 = vmatpush1.xpose.msra.mxu0 0.0
    %713 = vmatprep.subr.mxu0 0.0
    %714 = vmatpush1.xpose.msra.mxu0 0.0
    %715 = vmatprep.subr.mxu0 0.0
    %716 = vmatpush1.xpose.msra.mxu0 0.0
    %717 = vmatprep.subr.mxu0 0.0
    %718 = vmatpush1.xpose.msra.mxu0 0.0
    %719 = vmatprep.subr.mxu0 0.0
    %720 = vmatpush1.xpose.msra.mxu0 0.0
    %721 = vmatprep.subr.mxu0 0.0
    %722 = vmatpush1.xpose.msra.mxu0 0.0
    %723 = vmatprep.subr.mxu0 0.0
    %724 = vmatpush1.xpose.msra.mxu0 0.0
    %725 = vmatprep.subr.mxu0 0.0
    %726 = vmatpush1.xpose.msra.mxu0 0.0
    %727 = vmatprep.subr.mxu0 0.0
    %728 = vmatpush1.xpose.msra.mxu0 0.0
    %729 = vmatprep.subr.mxu0 0.0
    %730 = vmatpush1.xpose.msra.mxu0 0.0
    %731 = vmatprep.subr.mxu0 0.0
    %732 = vmatpush1.xpose.msra.mxu0 0.0
    %733 = vmatprep.subr.mxu0 0.0
    %734 = vmatpush1.xpose.msra.mxu0 0.0
    %735 = vmatprep.subr.mxu0 0.0
    %736 = vmatpush1.xpose.msra.mxu0 0.0
    %737 = vmatprep.subr.mxu0 0.0
    %738 = vmatpush1.xpose.msra.mxu0 0.0
    %739 = vmatprep.subr.mxu0 0.0
    %740 = vmatpush1.xpose.msra.mxu0 0.0
    %741 = vmatprep.subr.mxu0 0.0
    %742 = vmatpush1.xpose.msra.mxu0 0.0
    %743 = vmatprep.mubr.f32.mxu0 0.0
    %744 = vmatmul.mubr.f32.gmra.mrb[0].mxu0 %v656
    %v745 = vpop.f32.mrb[0].mxu0
    %v746 = vadd.f32 %v163, %v745
    %v747 = vpop.f32.mrb[0].mxu0
    %748 = vmatprep.mubr.f32.mxu0 0.0
    %749 = vmatmul.mubr.f32.gmra.mrb[0].mxu0 %v659
    %v750 = vpop.f32.mrb[0].mxu0
    %v751 = vadd.f32 %v164, %v750
    %v752 = vpop.f32.mrb[0].mxu0
    %753 = vmatprep.mubr.f32.mxu0 0.0
    %754 = vmatmul.mubr.f32.gmra.mrb[0].mxu0 %v662
    %v755 = vpop.f32.mrb[0].mxu0
    %v756 = vadd.f32 %v165, %v755
    %v757 = vpop.f32.mrb[0].mxu0
    %758 = vmatprep.mubr.f32.mxu0 0.0
    %759 = vmatmul.mubr.f32.gmra.mrb[0].mxu0 %v665
    %v760 = vpop.f32.mrb[0].mxu0
    %v761 = vadd.f32 %v166, %v760
    %v762 = vpop.f32.mrb[0].mxu0
    %763 = vdwg.mxu0
    %vm764 = vcmask 261120
    %v765 = vsel %vm764, %v746, -inf
    %766 = vmax.xlane.f32.xlu0 %v765
    %v767 = vpop.xlane.xlu0 %766
    %v768 = vsel %vm764, %v751, -inf
    %769 = vmax.xlane.f32.xlu0 %v768
    %v770 = vpop.xlane.xlu0 %769
    %v771 = vsel %vm764, %v756, -inf
    %772 = vmax.xlane.f32.xlu0 %v771
    %v773 = vpop.xlane.xlu0 %772
    %v774 = vsel %vm764, %v761, -inf
    %775 = vmax.xlane.f32.xlu0 %v774
    %v776 = vpop.xlane.xlu0 %775
    %v777 = vsub.f32 %v746, %v767
    %v778 = vsub.f32 %v751, %v770
    %v779 = vsub.f32 %v756, %v773
    %v780 = vsub.f32 %v761, %v776
    %v781 = vmul.f32 %v777, 1.442695
    %v782 = vpow.pop %v781
    %v783 = vmul.f32 %v778, 1.442695
    %v784 = vpow.pop %v783
    %v785 = vmul.f32 %v779, 1.442695
    %v786 = vpow.pop %v785
    %v787 = vmul.f32 %v780, 1.442695
    %v788 = vpow.pop %v787
    %v789 = vsel %vm764, %v782, 0.0
    %790 = vadd.xlane.f32.xlu0 %v789
    %v791 = vpop.xlane.xlu0 %790
    %v792 = vsel %vm764, %v784, 0.0
    %793 = vadd.xlane.f32.xlu0 %v792
    %v794 = vpop.xlane.xlu0 %793
    %v795 = vsel %vm764, %v786, 0.0
    %796 = vadd.xlane.f32.xlu0 %v795
    %v797 = vpop.xlane.xlu0 %796
    %v798 = vsel %vm764, %v788, 0.0
    %799 = vadd.xlane.f32.xlu0 %v798
    %v800 = vpop.xlane.xlu0 %799
    %v801 = vrcp.pop %v791
    %v802 = vrcp.pop %v794
    %v803 = vrcp.pop %v797
    %v804 = vrcp.pop %v800
    %v805 = vmul.f32 %v782, %v801
    %v806 = vmul.f32 %v784, %v802
    %v807 = vmul.f32 %v786, %v803
    %v808 = vmul.f32 %v788, %v804
    %v810 = vsel %vm764, %v805, 0
    %v813 = vsel %vm764, %v806, 0
    %v816 = vsel %vm764, %v807, 0
    %v819 = vsel %vm764, %v808, 0
    %821 = vmatprep.subr.mxu0 0.0
    %822 = vmatpush1.msra.mxu0 %v636
    %823 = vmatprep.subr.mxu0 0.0
    %824 = vmatpush1.msra.mxu0 %v641
    %825 = vmatprep.subr.mxu0 0.0
    %826 = vmatpush1.msra.mxu0 %v646
    %827 = vmatprep.subr.mxu0 0.0
    %828 = vmatpush1.msra.mxu0 %v651
    %829 = vmatprep.subr.mxu0 0.0
    %830 = vmatpush1.msra.mxu0 0.0
    %831 = vmatprep.subr.mxu0 0.0
    %832 = vmatpush1.msra.mxu0 0.0
    %833 = vmatprep.subr.mxu0 0.0
    %834 = vmatpush1.msra.mxu0 0.0
    %835 = vmatprep.subr.mxu0 0.0
    %836 = vmatpush1.msra.mxu0 0.0
    %837 = vmatprep.subr.mxu0 0.0
    %838 = vmatpush1.msra.mxu0 0.0
    %839 = vmatprep.subr.mxu0 0.0
    %840 = vmatpush1.msra.mxu0 0.0
    %841 = vmatprep.subr.mxu0 0.0
    %842 = vmatpush1.msra.mxu0 0.0
    %843 = vmatprep.subr.mxu0 0.0
    %844 = vmatpush1.msra.mxu0 0.0
    %845 = vmatprep.subr.mxu0 0.0
    %846 = vmatpush1.msra.mxu0 0.0
    %847 = vmatprep.subr.mxu0 0.0
    %848 = vmatpush1.msra.mxu0 0.0
    %849 = vmatprep.subr.mxu0 0.0
    %850 = vmatpush1.msra.mxu0 0.0
    %851 = vmatprep.subr.mxu0 0.0
    %852 = vmatpush1.msra.mxu0 0.0
    %853 = vmatprep.subr.mxu0 0.0
    %854 = vmatpush1.msra.mxu0 0.0
    %855 = vmatprep.subr.mxu0 0.0
    %856 = vmatpush1.msra.mxu0 0.0
    %857 = vmatprep.subr.mxu0 0.0
    %858 = vmatpush1.msra.mxu0 0.0
    %859 = vmatprep.subr.mxu0 0.0
    %860 = vmatpush1.msra.mxu0 0.0
    %861 = vmatprep.subr.mxu0 0.0
    %862 = vmatpush1.msra.mxu0 0.0
    %863 = vmatprep.subr.mxu0 0.0
    %864 = vmatpush1.msra.mxu0 0.0
    %865 = vmatprep.subr.mxu0 0.0
    %866 = vmatpush1.msra.mxu0 0.0
    %867 = vmatprep.subr.mxu0 0.0
    %868 = vmatpush1.msra.mxu0 0.0
    %869 = vmatprep.subr.mxu0 0.0
    %870 = vmatpush1.msra.mxu0 0.0
    %871 = vmatprep.subr.mxu0 0.0
    %872 = vmatpush1.msra.mxu0 0.0
    %873 = vmatprep.subr.mxu0 0.0
    %874 = vmatpush1.msra.mxu0 0.0
    %875 = vmatprep.subr.mxu0 0.0
    %876 = vmatpush1.msra.mxu0 0.0
    %877 = vmatprep.subr.mxu0 0.0
    %878 = vmatpush1.msra.mxu0 0.0
    %879 = vmatprep.subr.mxu0 0.0
    %880 = vmatpush1.msra.mxu0 0.0
    %881 = vmatprep.subr.mxu0 0.0
    %882 = vmatpush1.msra.mxu0 0.0
    %883 = vmatprep.subr.mxu0 0.0
    %884 = vmatpush1.msra.mxu0 0.0
    %885 = vmatprep.mubr.f32.mxu0 0.0
    %886 = vmatmul.mubr.f32.gmra.mrb[0].mxu0 %v810
    %v887 = vpop.f32.mrb[0].mxu0
    %v888 = vadd.f32 0.0, %v887
    %v889 = vpop.f32.mrb[0].mxu0
    %890 = vmatprep.mubr.f32.mxu0 0.0
    %891 = vmatmul.mubr.f32.gmra.mrb[0].mxu0 %v813
    %v892 = vpop.f32.mrb[0].mxu0
    %v893 = vadd.f32 0.0, %v892
    %v894 = vpop.f32.mrb[0].mxu0
    %895 = vmatprep.mubr.f32.mxu0 0.0
    %896 = vmatmul.mubr.f32.gmra.mrb[0].mxu0 %v816
    %v897 = vpop.f32.mrb[0].mxu0
    %v898 = vadd.f32 0.0, %v897
    %v899 = vpop.f32.mrb[0].mxu0
    %900 = vmatprep.mubr.f32.mxu0 0.0
    %901 = vmatmul.mubr.f32.gmra.mrb[0].mxu0 %v819
    %v902 = vpop.f32.mrb[0].mxu0
    %v903 = vadd.f32 0.0, %v902
    %v904 = vpop.f32.mrb[0].mxu0
    %905 = vdwg.mxu0
    %906 = vrot.lane.b32.xlu0 %v383, 120
    %v907 = vpop.permute.xlu0 %906
    %908 = vrot.lane.b32.xlu0 %v384, 120
    %v909 = vpop.permute.xlu0 %908
    %910 = vrot.lane.b32.xlu0 %v385, 120
    %v911 = vpop.permute.xlu0 %910
    %912 = vrot.lane.b32.xlu0 %v386, 120
    %v913 = vpop.permute.xlu0 %912
    %914 = vrot.lane.b32.xlu0 %v565, 120
    %v915 = vpop.permute.xlu0 %914
    %916 = vrot.lane.b32.xlu0 %v566, 120
    %v917 = vpop.permute.xlu0 %916
    %918 = vrot.lane.b32.xlu0 %v567, 120
    %v919 = vpop.permute.xlu0 %918
    %920 = vrot.lane.b32.xlu0 %v568, 120
    %v921 = vpop.permute.xlu0 %920
    %v922 = vsel %vm654, %v907, 0
    %v924 = vsel %vm654, %v909, 0
    %v926 = vsel %vm654, %v911, 0
    %v928 = vsel %vm654, %v913, 0
    %v930 = vsel %vm654, %v915, 0
    %v932 = vsel %vm654, %v917, 0
    %v934 = vsel %vm654, %v919, 0
    %v936 = vsel %vm654, %v921, 0
    %938 = vmatprep.subr.mxu0 0.0
    %939 = vmatpush1.xpose.msra.mxu0 %v930
    %940 = vmatprep.subr.mxu0 0.0
    %941 = vmatpush1.xpose.msra.mxu0 %v932
    %942 = vmatprep.subr.mxu0 0.0
    %943 = vmatpush1.xpose.msra.mxu0 %v934
    %944 = vmatprep.subr.mxu0 0.0
    %945 = vmatpush1.xpose.msra.mxu0 %v936
    %946 = vmatprep.subr.mxu0 0.0
    %947 = vmatpush1.xpose.msra.mxu0 0.0
    %948 = vmatprep.subr.mxu0 0.0
    %949 = vmatpush1.xpose.msra.mxu0 0.0
    %950 = vmatprep.subr.mxu0 0.0
    %951 = vmatpush1.xpose.msra.mxu0 0.0
    %952 = vmatprep.subr.mxu0 0.0
    %953 = vmatpush1.xpose.msra.mxu0 0.0
    %954 = vmatprep.subr.mxu0 0.0
    %955 = vmatpush1.xpose.msra.mxu0 0.0
    %956 = vmatprep.subr.mxu0 0.0
    %957 = vmatpush1.xpose.msra.mxu0 0.0
    %958 = vmatprep.subr.mxu0 0.0
    %959 = vmatpush1.xpose.msra.mxu0 0.0
    %960 = vmatprep.subr.mxu0 0.0
    %961 = vmatpush1.xpose.msra.mxu0 0.0
    %962 = vmatprep.subr.mxu0 0.0
    %963 = vmatpush1.xpose.msra.mxu0 0.0
    %964 = vmatprep.subr.mxu0 0.0
    %965 = vmatpush1.xpose.msra.mxu0 0.0
    %966 = vmatprep.subr.mxu0 0.0
    %967 = vmatpush1.xpose.msra.mxu0 0.0
    %968 = vmatprep.subr.mxu0 0.0
    %969 = vmatpush1.xpose.msra.mxu0 0.0
    %970 = vmatprep.subr.mxu0 0.0
    %971 = vmatpush1.xpose.msra.mxu0 0.0
    %972 = vmatprep.subr.mxu0 0.0
    %973 = vmatpush1.xpose.msra.mxu0 0.0
    %974 = vmatprep.subr.mxu0 0.0
    %975 = vmatpush1.xpose.msra.mxu0 0.0
    %976 = vmatprep.subr.mxu0 0.0
    %977 = vmatpush1.xpose.msra.mxu0 0.0
    %978 = vmatprep.subr.mxu0 0.0
    %979 = vmatpush1.xpose.msra.mxu0 0.0
    %980 = vmatprep.subr.mxu0 0.0
    %981 = vmatpush1.xpose.msra.mxu0 0.0
    %982 = vmatprep.subr.mxu0 0.0
    %983 = vmatpush1.xpose.msra.mxu0 0.0
    %984 = vmatprep.subr.mxu0 0.0
    %985 = vmatpush1.xpose.msra.mxu0 0.0
    %986 = vmatprep.subr.mxu0 0.0
    %987 = vmatpush1.xpose.msra.mxu0 0.0
    %988 = vmatprep.subr.mxu0 0.0
    %989 = vmatpush1.xpose.msra.mxu0 0.0
    %990 = vmatprep.subr.mxu0 0.0
    %991 = vmatpush1.xpose.msra.mxu0 0.0
    %992 = vmatprep.subr.mxu0 0.0
    %993 = vmatpush1.xpose.msra.mxu0 0.0
    %994 = vmatprep.subr.mxu0 0.0
    %995 = vmatpush1.xpose.msra.mxu0 0.0
    %996 = vmatprep.subr.mxu0 0.0
    %997 = vmatpush1.xpose.msra.mxu0 0.0
    %998 = vmatprep.subr.mxu0 0.0
    %999 = vmatpush1.xpose.msra.mxu0 0.0
    %1000 = vmatprep.subr.mxu0 0.0
    %1001 = vmatpush1.xpose.msra.mxu0 0.0
    %1002 = vmatprep.mubr.f32.mxu0 0.0
    %1003 = vmatmul.mubr.f32.gmra.mrb[0].mxu0 %v922
    %v1004 = vpop.f32.mrb[0].mxu0
    %v1005 = vadd.f32 %v163, %v1004
    %v1006 = vpop.f32.mrb[0].mxu0
    %1007 = vmatprep.mubr.f32.mxu0 0.0
    %1008 = vmatmul.mubr.f32.gmra.mrb[0].mxu0 %v924
    %v1009 = vpop.f32.mrb[0].mxu0
    %v1010 = vadd.f32 %v164, %v1009
    %v1011 = vpop.f32.mrb[0].mxu0
    %1012 = vmatprep.mubr.f32.mxu0 0.0
    %1013 = vmatmul.mubr.f32.gmra.mrb[0].mxu0 %v926
    %v1014 = vpop.f32.mrb[0].mxu0
    %v1015 = vadd.f32 %v165, %v1014
    %v1016 = vpop.f32.mrb[0].mxu0
    %1017 = vmatprep.mubr.f32.mxu0 0.0
    %1018 = vmatmul.mubr.f32.gmra.mrb[0].mxu0 %v928
    %v1019 = vpop.f32.mrb[0].mxu0
    %v1020 = vadd.f32 %v166, %v1019
    %v1021 = vpop.f32.mrb[0].mxu0
    %1022 = vdwg.mxu0
    %v1023 = vsel %vm764, %v1005, -inf
    %1024 = vmax.xlane.f32.xlu0 %v1023
    %v1025 = vpop.xlane.xlu0 %1024
    %v1026 = vsel %vm764, %v1010, -inf
    %1027 = vmax.xlane.f32.xlu0 %v1026
    %v1028 = vpop.xlane.xlu0 %1027
    %v1029 = vsel %vm764, %v1015, -inf
    %1030 = vmax.xlane.f32.xlu0 %v1029
    %v1031 = vpop.xlane.xlu0 %1030
    %v1032 = vsel %vm764, %v1020, -inf
    %1033 = vmax.xlane.f32.xlu0 %v1032
    %v1034 = vpop.xlane.xlu0 %1033
    %v1035 = vsub.f32 %v1005, %v1025
    %v1036 = vsub.f32 %v1010, %v1028
    %v1037 = vsub.f32 %v1015, %v1031
    %v1038 = vsub.f32 %v1020, %v1034
    %v1039 = vmul.f32 %v1035, 1.442695
    %v1040 = vpow.pop %v1039
    %v1041 = vmul.f32 %v1036, 1.442695
    %v1042 = vpow.pop %v1041
    %v1043 = vmul.f32 %v1037, 1.442695
    %v1044 = vpow.pop %v1043
    %v1045 = vmul.f32 %v1038, 1.442695
    %v1046 = vpow.pop %v1045
    %v1047 = vsel %vm764, %v1040, 0.0
    %1048 = vadd.xlane.f32.xlu0 %v1047
    %v1049 = vpop.xlane.xlu0 %1048
    %v1050 = vsel %vm764, %v1042, 0.0
    %1051 = vadd.xlane.f32.xlu0 %v1050
    %v1052 = vpop.xlane.xlu0 %1051
    %v1053 = vsel %vm764, %v1044, 0.0
    %1054 = vadd.xlane.f32.xlu0 %v1053
    %v1055 = vpop.xlane.xlu0 %1054
    %v1056 = vsel %vm764, %v1046, 0.0
    %1057 = vadd.xlane.f32.xlu0 %v1056
    %v1058 = vpop.xlane.xlu0 %1057
    %v1059 = vrcp.pop %v1049
    %v1060 = vrcp.pop %v1052
    %v1061 = vrcp.pop %v1055
    %v1062 = vrcp.pop %v1058
    %v1063 = vmul.f32 %v1040, %v1059
    %v1064 = vmul.f32 %v1042, %v1060
    %v1065 = vmul.f32 %v1044, %v1061
    %v1066 = vmul.f32 %v1046, %v1062
    %1071 = vrot.lane.b32.xlu0 %v636, 120
    %v1072 = vpop.permute.xlu0 %1071
    %1073 = vrot.lane.b32.xlu0 %v641, 120
    %v1074 = vpop.permute.xlu0 %1073
    %1075 = vrot.lane.b32.xlu0 %v646, 120
    %v1076 = vpop.permute.xlu0 %1075
    %1077 = vrot.lane.b32.xlu0 %v651, 120
    %v1078 = vpop.permute.xlu0 %1077
    %v1084 = vsel %vm764, %v1063, 0
    %v1087 = vsel %vm764, %v1064, 0
    %v1090 = vsel %vm764, %v1065, 0
    %v1093 = vsel %vm764, %v1066, 0
    %1095 = vmatprep.subr.mxu0 0.0
    %1096 = vmatpush1.msra.mxu0 %v1072
    %1097 = vmatprep.subr.mxu0 0.0
    %1098 = vmatpush1.msra.mxu0 %v1074
    %1099 = vmatprep.subr.mxu0 0.0
    %1100 = vmatpush1.msra.mxu0 %v1076
    %1101 = vmatprep.subr.mxu0 0.0
    %1102 = vmatpush1.msra.mxu0 %v1078
    %1103 = vmatprep.subr.mxu0 0.0
    %1104 = vmatpush1.msra.mxu0 0.0
    %1105 = vmatprep.subr.mxu0 0.0
    %1106 = vmatpush1.msra.mxu0 0.0
    %1107 = vmatprep.subr.mxu0 0.0
    %1108 = vmatpush1.msra.mxu0 0.0
    %1109 = vmatprep.subr.mxu0 0.0
    %1110 = vmatpush1.msra.mxu0 0.0
    %1111 = vmatprep.subr.mxu0 0.0
    %1112 = vmatpush1.msra.mxu0 0.0
    %1113 = vmatprep.subr.mxu0 0.0
    %1114 = vmatpush1.msra.mxu0 0.0
    %1115 = vmatprep.subr.mxu0 0.0
    %1116 = vmatpush1.msra.mxu0 0.0
    %1117 = vmatprep.subr.mxu0 0.0
    %1118 = vmatpush1.msra.mxu0 0.0
    %1119 = vmatprep.subr.mxu0 0.0
    %1120 = vmatpush1.msra.mxu0 0.0
    %1121 = vmatprep.subr.mxu0 0.0
    %1122 = vmatpush1.msra.mxu0 0.0
    %1123 = vmatprep.subr.mxu0 0.0
    %1124 = vmatpush1.msra.mxu0 0.0
    %1125 = vmatprep.subr.mxu0 0.0
    %1126 = vmatpush1.msra.mxu0 0.0
    %1127 = vmatprep.subr.mxu0 0.0
    %1128 = vmatpush1.msra.mxu0 0.0
    %1129 = vmatprep.subr.mxu0 0.0
    %1130 = vmatpush1.msra.mxu0 0.0
    %1131 = vmatprep.subr.mxu0 0.0
    %1132 = vmatpush1.msra.mxu0 0.0
    %1133 = vmatprep.subr.mxu0 0.0
    %1134 = vmatpush1.msra.mxu0 0.0
    %1135 = vmatprep.subr.mxu0 0.0
    %1136 = vmatpush1.msra.mxu0 0.0
    %1137 = vmatprep.subr.mxu0 0.0
    %1138 = vmatpush1.msra.mxu0 0.0
    %1139 = vmatprep.subr.mxu0 0.0
    %1140 = vmatpush1.msra.mxu0 0.0
    %1141 = vmatprep.subr.mxu0 0.0
    %1142 = vmatpush1.msra.mxu0 0.0
    %1143 = vmatprep.subr.mxu0 0.0
    %1144 = vmatpush1.msra.mxu0 0.0
    %1145 = vmatprep.subr.mxu0 0.0
    %1146 = vmatpush1.msra.mxu0 0.0
    %1147 = vmatprep.subr.mxu0 0.0
    %1148 = vmatpush1.msra.mxu0 0.0
    %1149 = vmatprep.subr.mxu0 0.0
    %1150 = vmatpush1.msra.mxu0 0.0
    %1151 = vmatprep.subr.mxu0 0.0
    %1152 = vmatpush1.msra.mxu0 0.0
    %1153 = vmatprep.subr.mxu0 0.0
    %1154 = vmatpush1.msra.mxu0 0.0
    %1155 = vmatprep.subr.mxu0 0.0
    %1156 = vmatpush1.msra.mxu0 0.0
    %1157 = vmatprep.subr.mxu0 0.0
    %1158 = vmatpush1.msra.mxu0 0.0
    %1159 = vmatprep.mubr.f32.mxu0 0.0
    %1160 = vmatmul.mubr.f32.gmra.mrb[0].mxu0 %v1084
    %v1161 = vpop.f32.mrb[0].mxu0
    %v1162 = vadd.f32 0.0, %v1161
    %v1163 = vpop.f32.mrb[0].mxu0
    %1164 = vmatprep.mubr.f32.mxu0 0.0
    %1165 = vmatmul.mubr.f32.gmra.mrb[0].mxu0 %v1087
    %v1166 = vpop.f32.mrb[0].mxu0
    %v1167 = vadd.f32 0.0, %v1166
    %v1168 = vpop.f32.mrb[0].mxu0
    %1169 = vmatprep.mubr.f32.mxu0 0.0
    %1170 = vmatmul.mubr.f32.gmra.mrb[0].mxu0 %v1090
    %v1171 = vpop.f32.mrb[0].mxu0
    %v1172 = vadd.f32 0.0, %v1171
    %v1173 = vpop.f32.mrb[0].mxu0
    %1174 = vmatprep.mubr.f32.mxu0 0.0
    %1175 = vmatmul.mubr.f32.gmra.mrb[0].mxu0 %v1093
    %v1176 = vpop.f32.mrb[0].mxu0
    %v1177 = vadd.f32 0.0, %v1176
    %v1178 = vpop.f32.mrb[0].mxu0
    %1179 = vdwg.mxu0
    %1180 = vrot.lane.b32.xlu0 %v383, 112
    %v1181 = vpop.permute.xlu0 %1180
    %1182 = vrot.lane.b32.xlu0 %v384, 112
    %v1183 = vpop.permute.xlu0 %1182
    %1184 = vrot.lane.b32.xlu0 %v385, 112
    %v1185 = vpop.permute.xlu0 %1184
    %1186 = vrot.lane.b32.xlu0 %v386, 112
    %v1187 = vpop.permute.xlu0 %1186
    %1188 = vrot.lane.b32.xlu0 %v565, 112
    %v1189 = vpop.permute.xlu0 %1188
    %1190 = vrot.lane.b32.xlu0 %v566, 112
    %v1191 = vpop.permute.xlu0 %1190
    %1192 = vrot.lane.b32.xlu0 %v567, 112
    %v1193 = vpop.permute.xlu0 %1192
    %1194 = vrot.lane.b32.xlu0 %v568, 112
    %v1195 = vpop.permute.xlu0 %1194
    %v1196 = vsel %vm654, %v1181, 0
    %v1198 = vsel %vm654, %v1183, 0
    %v1200 = vsel %vm654, %v1185, 0
    %v1202 = vsel %vm654, %v1187, 0
    %v1204 = vsel %vm654, %v1189, 0
    %v1206 = vsel %vm654, %v1191, 0
    %v1208 = vsel %vm654, %v1193, 0
    %v1210 = vsel %vm654, %v1195, 0
    %1212 = vmatprep.subr.mxu0 0.0
    %1213 = vmatpush1.xpose.msra.mxu0 %v1204
    %1214 = vmatprep.subr.mxu0 0.0
    %1215 = vmatpush1.xpose.msra.mxu0 %v1206
    %1216 = vmatprep.subr.mxu0 0.0
    %1217 = vmatpush1.xpose.msra.mxu0 %v1208
    %1218 = vmatprep.subr.mxu0 0.0
    %1219 = vmatpush1.xpose.msra.mxu0 %v1210
    %1220 = vmatprep.subr.mxu0 0.0
    %1221 = vmatpush1.xpose.msra.mxu0 0.0
    %1222 = vmatprep.subr.mxu0 0.0
    %1223 = vmatpush1.xpose.msra.mxu0 0.0
    %1224 = vmatprep.subr.mxu0 0.0
    %1225 = vmatpush1.xpose.msra.mxu0 0.0
    %1226 = vmatprep.subr.mxu0 0.0
    %1227 = vmatpush1.xpose.msra.mxu0 0.0
    %1228 = vmatprep.subr.mxu0 0.0
    %1229 = vmatpush1.xpose.msra.mxu0 0.0
    %1230 = vmatprep.subr.mxu0 0.0
    %1231 = vmatpush1.xpose.msra.mxu0 0.0
    %1232 = vmatprep.subr.mxu0 0.0
    %1233 = vmatpush1.xpose.msra.mxu0 0.0
    %1234 = vmatprep.subr.mxu0 0.0
    %1235 = vmatpush1.xpose.msra.mxu0 0.0
    %1236 = vmatprep.subr.mxu0 0.0
    %1237 = vmatpush1.xpose.msra.mxu0 0.0
    %1238 = vmatprep.subr.mxu0 0.0
    %1239 = vmatpush1.xpose.msra.mxu0 0.0
    %1240 = vmatprep.subr.mxu0 0.0
    %1241 = vmatpush1.xpose.msra.mxu0 0.0
    %1242 = vmatprep.subr.mxu0 0.0
    %1243 = vmatpush1.xpose.msra.mxu0 0.0
    %1244 = vmatprep.subr.mxu0 0.0
    %1245 = vmatpush1.xpose.msra.mxu0 0.0
    %1246 = vmatprep.subr.mxu0 0.0
    %1247 = vmatpush1.xpose.msra.mxu0 0.0
    %1248 = vmatprep.subr.mxu0 0.0
    %1249 = vmatpush1.xpose.msra.mxu0 0.0
    %1250 = vmatprep.subr.mxu0 0.0
    %1251 = vmatpush1.xpose.msra.mxu0 0.0
    %1252 = vmatprep.subr.mxu0 0.0
    %1253 = vmatpush1.xpose.msra.mxu0 0.0
    %1254 = vmatprep.subr.mxu0 0.0
    %1255 = vmatpush1.xpose.msra.mxu0 0.0
    %1256 = vmatprep.subr.mxu0 0.0
    %1257 = vmatpush1.xpose.msra.mxu0 0.0
    %1258 = vmatprep.subr.mxu0 0.0
    %1259 = vmatpush1.xpose.msra.mxu0 0.0
    %1260 = vmatprep.subr.mxu0 0.0
    %1261 = vmatpush1.xpose.msra.mxu0 0.0
    %1262 = vmatprep.subr.mxu0 0.0
    %1263 = vmatpush1.xpose.msra.mxu0 0.0
    %1264 = vmatprep.subr.mxu0 0.0
    %1265 = vmatpush1.xpose.msra.mxu0 0.0
    %1266 = vmatprep.subr.mxu0 0.0
    %1267 = vmatpush1.xpose.msra.mxu0 0.0
    %1268 = vmatprep.subr.mxu0 0.0
    %1269 = vmatpush1.xpose.msra.mxu0 0.0
    %1270 = vmatprep.subr.mxu0 0.0
    %1271 = vmatpush1.xpose.msra.mxu0 0.0
    %1272 = vmatprep.subr.mxu0 0.0
    %1273 = vmatpush1.xpose.msra.mxu0 0.0
    %1274 = vmatprep.subr.mxu0 0.0
    %1275 = vmatpush1.xpose.msra.mxu0 0.0
    %1276 = vmatprep.mubr.f32.mxu0 0.0
    %1277 = vmatmul.mubr.f32.gmra.mrb[0].mxu0 %v1196
    %v1278 = vpop.f32.mrb[0].mxu0
    %v1279 = vadd.f32 %v163, %v1278
    %v1280 = vpop.f32.mrb[0].mxu0
    %1281 = vmatprep.mubr.f32.mxu0 0.0
    %1282 = vmatmul.mubr.f32.gmra.mrb[0].mxu0 %v1198
    %v1283 = vpop.f32.mrb[0].mxu0
    %v1284 = vadd.f32 %v164, %v1283
    %v1285 = vpop.f32.mrb[0].mxu0
    %1286 = vmatprep.mubr.f32.mxu0 0.0
    %1287 = vmatmul.mubr.f32.gmra.mrb[0].mxu0 %v1200
    %v1288 = vpop.f32.mrb[0].mxu0
    %v1289 = vadd.f32 %v165, %v1288
    %v1290 = vpop.f32.mrb[0].mxu0
    %1291 = vmatprep.mubr.f32.mxu0 0.0
    %1292 = vmatmul.mubr.f32.gmra.mrb[0].mxu0 %v1202
    %v1293 = vpop.f32.mrb[0].mxu0
    %v1294 = vadd.f32 %v166, %v1293
    %v1295 = vpop.f32.mrb[0].mxu0
    %1296 = vdwg.mxu0
    %v1297 = vsel %vm764, %v1279, -inf
    %1298 = vmax.xlane.f32.xlu0 %v1297
    %v1299 = vpop.xlane.xlu0 %1298
    %v1300 = vsel %vm764, %v1284, -inf
    %1301 = vmax.xlane.f32.xlu0 %v1300
    %v1302 = vpop.xlane.xlu0 %1301
    %v1303 = vsel %vm764, %v1289, -inf
    %1304 = vmax.xlane.f32.xlu0 %v1303
    %v1305 = vpop.xlane.xlu0 %1304
    %v1306 = vsel %vm764, %v1294, -inf
    %1307 = vmax.xlane.f32.xlu0 %v1306
    %v1308 = vpop.xlane.xlu0 %1307
    %v1309 = vsub.f32 %v1279, %v1299
    %v1310 = vsub.f32 %v1284, %v1302
    %v1311 = vsub.f32 %v1289, %v1305
    %v1312 = vsub.f32 %v1294, %v1308
    %v1313 = vmul.f32 %v1309, 1.442695
    %v1314 = vpow.pop %v1313
    %v1315 = vmul.f32 %v1310, 1.442695
    %v1316 = vpow.pop %v1315
    %v1317 = vmul.f32 %v1311, 1.442695
    %v1318 = vpow.pop %v1317
    %v1319 = vmul.f32 %v1312, 1.442695
    %v1320 = vpow.pop %v1319
    %v1321 = vsel %vm764, %v1314, 0.0
    %1322 = vadd.xlane.f32.xlu0 %v1321
    %v1323 = vpop.xlane.xlu0 %1322
    %v1324 = vsel %vm764, %v1316, 0.0
    %1325 = vadd.xlane.f32.xlu0 %v1324
    %v1326 = vpop.xlane.xlu0 %1325
    %v1327 = vsel %vm764, %v1318, 0.0
    %1328 = vadd.xlane.f32.xlu0 %v1327
    %v1329 = vpop.xlane.xlu0 %1328
    %v1330 = vsel %vm764, %v1320, 0.0
    %1331 = vadd.xlane.f32.xlu0 %v1330
    %v1332 = vpop.xlane.xlu0 %1331
    %v1333 = vrcp.pop %v1323
    %v1334 = vrcp.pop %v1326
    %v1335 = vrcp.pop %v1329
    %v1336 = vrcp.pop %v1332
    %v1337 = vmul.f32 %v1314, %v1333
    %v1338 = vmul.f32 %v1316, %v1334
    %v1339 = vmul.f32 %v1318, %v1335
    %v1340 = vmul.f32 %v1320, %v1336
    %1341 = vrot.lane.b32.xlu0 %v636, 112
    %v1342 = vpop.permute.xlu0 %1341
    %1343 = vrot.lane.b32.xlu0 %v641, 112
    %v1344 = vpop.permute.xlu0 %1343
    %1345 = vrot.lane.b32.xlu0 %v646, 112
    %v1346 = vpop.permute.xlu0 %1345
    %1347 = vrot.lane.b32.xlu0 %v651, 112
    %v1348 = vpop.permute.xlu0 %1347
    %v1354 = vsel %vm764, %v1337, 0
    %v1357 = vsel %vm764, %v1338, 0
    %v1360 = vsel %vm764, %v1339, 0
    %v1363 = vsel %vm764, %v1340, 0
    %1365 = vmatprep.subr.mxu0 0.0
    %1366 = vmatpush1.msra.mxu0 %v1342
    %1367 = vmatprep.subr.mxu0 0.0
    %1368 = vmatpush1.msra.mxu0 %v1344
    %1369 = vmatprep.subr.mxu0 0.0
    %1370 = vmatpush1.msra.mxu0 %v1346
    %1371 = vmatprep.subr.mxu0 0.0
    %1372 = vmatpush1.msra.mxu0 %v1348
    %1373 = vmatprep.subr.mxu0 0.0
    %1374 = vmatpush1.msra.mxu0 0.0
    %1375 = vmatprep.subr.mxu0 0.0
    %1376 = vmatpush1.msra.mxu0 0.0
    %1377 = vmatprep.subr.mxu0 0.0
    %1378 = vmatpush1.msra.mxu0 0.0
    %1379 = vmatprep.subr.mxu0 0.0
    %1380 = vmatpush1.msra.mxu0 0.0
    %1381 = vmatprep.subr.mxu0 0.0
    %1382 = vmatpush1.msra.mxu0 0.0
    %1383 = vmatprep.subr.mxu0 0.0
    %1384 = vmatpush1.msra.mxu0 0.0
    %1385 = vmatprep.subr.mxu0 0.0
    %1386 = vmatpush1.msra.mxu0 0.0
    %1387 = vmatprep.subr.mxu0 0.0
    %1388 = vmatpush1.msra.mxu0 0.0
    %1389 = vmatprep.subr.mxu0 0.0
    %1390 = vmatpush1.msra.mxu0 0.0
    %1391 = vmatprep.subr.mxu0 0.0
    %1392 = vmatpush1.msra.mxu0 0.0
    %1393 = vmatprep.subr.mxu0 0.0
    %1394 = vmatpush1.msra.mxu0 0.0
    %1395 = vmatprep.subr.mxu0 0.0
    %1396 = vmatpush1.msra.mxu0 0.0
    %1397 = vmatprep.subr.mxu0 0.0
    %1398 = vmatpush1.msra.mxu0 0.0
    %1399 = vmatprep.subr.mxu0 0.0
    %1400 = vmatpush1.msra.mxu0 0.0
    %1401 = vmatprep.subr.mxu0 0.0
    %1402 = vmatpush1.msra.mxu0 0.0
    %1403 = vmatprep.subr.mxu0 0.0
    %1404 = vmatpush1.msra.mxu0 0.0
    %1405 = vmatprep.subr.mxu0 0.0
    %1406 = vmatpush1.msra.mxu0 0.0
    %1407 = vmatprep.subr.mxu0 0.0
    %1408 = vmatpush1.msra.mxu0 0.0
    %1409 = vmatprep.subr.mxu0 0.0
    %1410 = vmatpush1.msra.mxu0 0.0
    %1411 = vmatprep.subr.mxu0 0.0
    %1412 = vmatpush1.msra.mxu0 0.0
    %1413 = vmatprep.subr.mxu0 0.0
    %1414 = vmatpush1.msra.mxu0 0.0
    %1415 = vmatprep.subr.mxu0 0.0
    %1416 = vmatpush1.msra.mxu0 0.0
    %1417 = vmatprep.subr.mxu0 0.0
    %1418 = vmatpush1.msra.mxu0 0.0
    %1419 = vmatprep.subr.mxu0 0.0
    %1420 = vmatpush1.msra.mxu0 0.0
    %1421 = vmatprep.subr.mxu0 0.0
    %1422 = vmatpush1.msra.mxu0 0.0
    %1423 = vmatprep.subr.mxu0 0.0
    %1424 = vmatpush1.msra.mxu0 0.0
    %1425 = vmatprep.subr.mxu0 0.0
    %1426 = vmatpush1.msra.mxu0 0.0
    %1427 = vmatprep.subr.mxu0 0.0
    %1428 = vmatpush1.msra.mxu0 0.0
    %1429 = vmatprep.mubr.f32.mxu0 0.0
    %1430 = vmatmul.mubr.f32.gmra.mrb[0].mxu0 %v1354
    %v1431 = vpop.f32.mrb[0].mxu0
    %v1432 = vadd.f32 0.0, %v1431
    %v1433 = vpop.f32.mrb[0].mxu0
    %1434 = vmatprep.mubr.f32.mxu0 0.0
    %1435 = vmatmul.mubr.f32.gmra.mrb[0].mxu0 %v1357
    %v1436 = vpop.f32.mrb[0].mxu0
    %v1437 = vadd.f32 0.0, %v1436
    %v1438 = vpop.f32.mrb[0].mxu0
    %1439 = vmatprep.mubr.f32.mxu0 0.0
    %1440 = vmatmul.mubr.f32.gmra.mrb[0].mxu0 %v1360
    %v1441 = vpop.f32.mrb[0].mxu0
    %v1442 = vadd.f32 0.0, %v1441
    %v1443 = vpop.f32.mrb[0].mxu0
    %1444 = vmatprep.mubr.f32.mxu0 0.0
    %1445 = vmatmul.mubr.f32.gmra.mrb[0].mxu0 %v1363
    %v1446 = vpop.f32.mrb[0].mxu0
    %v1447 = vadd.f32 0.0, %v1446
    %v1448 = vpop.f32.mrb[0].mxu0
    %1449 = vdwg.mxu0
    %1450 = vrot.lane.b32.xlu0 %v383, 104
    %v1451 = vpop.permute.xlu0 %1450
    %1452 = vrot.lane.b32.xlu0 %v384, 104
    %v1453 = vpop.permute.xlu0 %1452
    %1454 = vrot.lane.b32.xlu0 %v385, 104
    %v1455 = vpop.permute.xlu0 %1454
    %1456 = vrot.lane.b32.xlu0 %v386, 104
    %v1457 = vpop.permute.xlu0 %1456
    %1458 = vrot.lane.b32.xlu0 %v565, 104
    %v1459 = vpop.permute.xlu0 %1458
    %1460 = vrot.lane.b32.xlu0 %v566, 104
    %v1461 = vpop.permute.xlu0 %1460
    %1462 = vrot.lane.b32.xlu0 %v567, 104
    %v1463 = vpop.permute.xlu0 %1462
    %1464 = vrot.lane.b32.xlu0 %v568, 104
    %v1465 = vpop.permute.xlu0 %1464
    %v1466 = vsel %vm654, %v1451, 0
    %v1468 = vsel %vm654, %v1453, 0
    %v1470 = vsel %vm654, %v1455, 0
    %v1472 = vsel %vm654, %v1457, 0
    %v1474 = vsel %vm654, %v1459, 0
    %v1476 = vsel %vm654, %v1461, 0
    %v1478 = vsel %vm654, %v1463, 0
    %v1480 = vsel %vm654, %v1465, 0
    %1482 = vmatprep.subr.mxu0 0.0
    %1483 = vmatpush1.xpose.msra.mxu0 %v1474
    %1484 = vmatprep.subr.mxu0 0.0
    %1485 = vmatpush1.xpose.msra.mxu0 %v1476
    %1486 = vmatprep.subr.mxu0 0.0
    %1487 = vmatpush1.xpose.msra.mxu0 %v1478
    %1488 = vmatprep.subr.mxu0 0.0
    %1489 = vmatpush1.xpose.msra.mxu0 %v1480
    %1490 = vmatprep.subr.mxu0 0.0
    %1491 = vmatpush1.xpose.msra.mxu0 0.0
    %1492 = vmatprep.subr.mxu0 0.0
    %1493 = vmatpush1.xpose.msra.mxu0 0.0
    %1494 = vmatprep.subr.mxu0 0.0
    %1495 = vmatpush1.xpose.msra.mxu0 0.0
    %1496 = vmatprep.subr.mxu0 0.0
    %1497 = vmatpush1.xpose.msra.mxu0 0.0
    %1498 = vmatprep.subr.mxu0 0.0
    %1499 = vmatpush1.xpose.msra.mxu0 0.0
    %1500 = vmatprep.subr.mxu0 0.0
    %1501 = vmatpush1.xpose.msra.mxu0 0.0
    %1502 = vmatprep.subr.mxu0 0.0
    %1503 = vmatpush1.xpose.msra.mxu0 0.0
    %1504 = vmatprep.subr.mxu0 0.0
    %1505 = vmatpush1.xpose.msra.mxu0 0.0
    %1506 = vmatprep.subr.mxu0 0.0
    %1507 = vmatpush1.xpose.msra.mxu0 0.0
    %1508 = vmatprep.subr.mxu0 0.0
    %1509 = vmatpush1.xpose.msra.mxu0 0.0
    %1510 = vmatprep.subr.mxu0 0.0
    %1511 = vmatpush1.xpose.msra.mxu0 0.0
    %1512 = vmatprep.subr.mxu0 0.0
    %1513 = vmatpush1.xpose.msra.mxu0 0.0
    %1514 = vmatprep.subr.mxu0 0.0
    %1515 = vmatpush1.xpose.msra.mxu0 0.0
    %1516 = vmatprep.subr.mxu0 0.0
    %1517 = vmatpush1.xpose.msra.mxu0 0.0
    %1518 = vmatprep.subr.mxu0 0.0
    %1519 = vmatpush1.xpose.msra.mxu0 0.0
    %1520 = vmatprep.subr.mxu0 0.0
    %1521 = vmatpush1.xpose.msra.mxu0 0.0
    %1522 = vmatprep.subr.mxu0 0.0
    %1523 = vmatpush1.xpose.msra.mxu0 0.0
    %1524 = vmatprep.subr.mxu0 0.0
    %1525 = vmatpush1.xpose.msra.mxu0 0.0
    %1526 = vmatprep.subr.mxu0 0.0
    %1527 = vmatpush1.xpose.msra.mxu0 0.0
    %1528 = vmatprep.subr.mxu0 0.0
    %1529 = vmatpush1.xpose.msra.mxu0 0.0
    %1530 = vmatprep.subr.mxu0 0.0
    %1531 = vmatpush1.xpose.msra.mxu0 0.0
    %1532 = vmatprep.subr.mxu0 0.0
    %1533 = vmatpush1.xpose.msra.mxu0 0.0
    %1534 = vmatprep.subr.mxu0 0.0
    %1535 = vmatpush1.xpose.msra.mxu0 0.0
    %1536 = vmatprep.subr.mxu0 0.0
    %1537 = vmatpush1.xpose.msra.mxu0 0.0
    %1538 = vmatprep.subr.mxu0 0.0
    %1539 = vmatpush1.xpose.msra.mxu0 0.0
    %1540 = vmatprep.subr.mxu0 0.0
    %1541 = vmatpush1.xpose.msra.mxu0 0.0
    %1542 = vmatprep.subr.mxu0 0.0
    %1543 = vmatpush1.xpose.msra.mxu0 0.0
    %1544 = vmatprep.subr.mxu0 0.0
    %1545 = vmatpush1.xpose.msra.mxu0 0.0
    %1546 = vmatprep.mubr.f32.mxu0 0.0
    %1547 = vmatmul.mubr.f32.gmra.mrb[0].mxu0 %v1466
    %v1548 = vpop.f32.mrb[0].mxu0
    %v1549 = vadd.f32 %v163, %v1548
    %v1550 = vpop.f32.mrb[0].mxu0
    %1551 = vmatprep.mubr.f32.mxu0 0.0
    %1552 = vmatmul.mubr.f32.gmra.mrb[0].mxu0 %v1468
    %v1553 = vpop.f32.mrb[0].mxu0
    %v1554 = vadd.f32 %v164, %v1553
    %v1555 = vpop.f32.mrb[0].mxu0
    %1556 = vmatprep.mubr.f32.mxu0 0.0
    %1557 = vmatmul.mubr.f32.gmra.mrb[0].mxu0 %v1470
    %v1558 = vpop.f32.mrb[0].mxu0
    %v1559 = vadd.f32 %v165, %v1558
    %v1560 = vpop.f32.mrb[0].mxu0
    %1561 = vmatprep.mubr.f32.mxu0 0.0
    %1562 = vmatmul.mubr.f32.gmra.mrb[0].mxu0 %v1472
    %v1563 = vpop.f32.mrb[0].mxu0
    %v1564 = vadd.f32 %v166, %v1563
    %v1565 = vpop.f32.mrb[0].mxu0
    %1566 = vdwg.mxu0
    %v1567 = vsel %vm764, %v1549, -inf
    %1568 = vmax.xlane.f32.xlu0 %v1567
    %v1569 = vpop.xlane.xlu0 %1568
    %v1570 = vsel %vm764, %v1554, -inf
    %1571 = vmax.xlane.f32.xlu0 %v1570
    %v1572 = vpop.xlane.xlu0 %1571
    %v1573 = vsel %vm764, %v1559, -inf
    %1574 = vmax.xlane.f32.xlu0 %v1573
    %v1575 = vpop.xlane.xlu0 %1574
    %v1576 = vsel %vm764, %v1564, -inf
    %1577 = vmax.xlane.f32.xlu0 %v1576
    %v1578 = vpop.xlane.xlu0 %1577
    %v1579 = vsub.f32 %v1549, %v1569
    %v1580 = vsub.f32 %v1554, %v1572
    %v1581 = vsub.f32 %v1559, %v1575
    %v1582 = vsub.f32 %v1564, %v1578
    %v1583 = vmul.f32 %v1579, 1.442695
    %v1584 = vpow.pop %v1583
    %v1585 = vmul.f32 %v1580, 1.442695
    %v1586 = vpow.pop %v1585
    %v1587 = vmul.f32 %v1581, 1.442695
    %v1588 = vpow.pop %v1587
    %v1589 = vmul.f32 %v1582, 1.442695
    %v1590 = vpow.pop %v1589
    %v1591 = vsel %vm764, %v1584, 0.0
    %1592 = vadd.xlane.f32.xlu0 %v1591
    %v1593 = vpop.xlane.xlu0 %1592
    %v1594 = vsel %vm764, %v1586, 0.0
    %1595 = vadd.xlane.f32.xlu0 %v1594
    %v1596 = vpop.xlane.xlu0 %1595
    %v1597 = vsel %vm764, %v1588, 0.0
    %1598 = vadd.xlane.f32.xlu0 %v1597
    %v1599 = vpop.xlane.xlu0 %1598
    %v1600 = vsel %vm764, %v1590, 0.0
    %1601 = vadd.xlane.f32.xlu0 %v1600
    %v1602 = vpop.xlane.xlu0 %1601
    %v1603 = vrcp.pop %v1593
    %v1604 = vrcp.pop %v1596
    %v1605 = vrcp.pop %v1599
    %v1606 = vrcp.pop %v1602
    %v1607 = vmul.f32 %v1584, %v1603
    %v1608 = vmul.f32 %v1586, %v1604
    %v1609 = vmul.f32 %v1588, %v1605
    %v1610 = vmul.f32 %v1590, %v1606
    %1611 = vrot.lane.b32.xlu0 %v636, 104
    %v1612 = vpop.permute.xlu0 %1611
    %1613 = vrot.lane.b32.xlu0 %v641, 104
    %v1614 = vpop.permute.xlu0 %1613
    %1615 = vrot.lane.b32.xlu0 %v646, 104
    %v1616 = vpop.permute.xlu0 %1615
    %1617 = vrot.lane.b32.xlu0 %v651, 104
    %v1618 = vpop.permute.xlu0 %1617
    %v1624 = vsel %vm764, %v1607, 0
    %v1627 = vsel %vm764, %v1608, 0
    %v1630 = vsel %vm764, %v1609, 0
    %v1633 = vsel %vm764, %v1610, 0
    %1635 = vmatprep.subr.mxu0 0.0
    %1636 = vmatpush1.msra.mxu0 %v1612
    %1637 = vmatprep.subr.mxu0 0.0
    %1638 = vmatpush1.msra.mxu0 %v1614
    %1639 = vmatprep.subr.mxu0 0.0
    %1640 = vmatpush1.msra.mxu0 %v1616
    %1641 = vmatprep.subr.mxu0 0.0
    %1642 = vmatpush1.msra.mxu0 %v1618
    %1643 = vmatprep.subr.mxu0 0.0
    %1644 = vmatpush1.msra.mxu0 0.0
    %1645 = vmatprep.subr.mxu0 0.0
    %1646 = vmatpush1.msra.mxu0 0.0
    %1647 = vmatprep.subr.mxu0 0.0
    %1648 = vmatpush1.msra.mxu0 0.0
    %1649 = vmatprep.subr.mxu0 0.0
    %1650 = vmatpush1.msra.mxu0 0.0
    %1651 = vmatprep.subr.mxu0 0.0
    %1652 = vmatpush1.msra.mxu0 0.0
    %1653 = vmatprep.subr.mxu0 0.0
    %1654 = vmatpush1.msra.mxu0 0.0
    %1655 = vmatprep.subr.mxu0 0.0
    %1656 = vmatpush1.msra.mxu0 0.0
    %1657 = vmatprep.subr.mxu0 0.0
    %1658 = vmatpush1.msra.mxu0 0.0
    %1659 = vmatprep.subr.mxu0 0.0
    %1660 = vmatpush1.msra.mxu0 0.0
    %1661 = vmatprep.subr.mxu0 0.0
    %1662 = vmatpush1.msra.mxu0 0.0
    %1663 = vmatprep.subr.mxu0 0.0
    %1664 = vmatpush1.msra.mxu0 0.0
    %1665 = vmatprep.subr.mxu0 0.0
    %1666 = vmatpush1.msra.mxu0 0.0
    %1667 = vmatprep.subr.mxu0 0.0
    %1668 = vmatpush1.msra.mxu0 0.0
    %1669 = vmatprep.subr.mxu0 0.0
    %1670 = vmatpush1.msra.mxu0 0.0
    %1671 = vmatprep.subr.mxu0 0.0
    %1672 = vmatpush1.msra.mxu0 0.0
    %1673 = vmatprep.subr.mxu0 0.0
    %1674 = vmatpush1.msra.mxu0 0.0
    %1675 = vmatprep.subr.mxu0 0.0
    %1676 = vmatpush1.msra.mxu0 0.0
    %1677 = vmatprep.subr.mxu0 0.0
    %1678 = vmatpush1.msra.mxu0 0.0
    %1679 = vmatprep.subr.mxu0 0.0
    %1680 = vmatpush1.msra.mxu0 0.0
    %1681 = vmatprep.subr.mxu0 0.0
    %1682 = vmatpush1.msra.mxu0 0.0
    %1683 = vmatprep.subr.mxu0 0.0
    %1684 = vmatpush1.msra.mxu0 0.0
    %1685 = vmatprep.subr.mxu0 0.0
    %1686 = vmatpush1.msra.mxu0 0.0
    %1687 = vmatprep.subr.mxu0 0.0
    %1688 = vmatpush1.msra.mxu0 0.0
    %1689 = vmatprep.subr.mxu0 0.0
    %1690 = vmatpush1.msra.mxu0 0.0
    %1691 = vmatprep.subr.mxu0 0.0
    %1692 = vmatpush1.msra.mxu0 0.0
    %1693 = vmatprep.subr.mxu0 0.0
    %1694 = vmatpush1.msra.mxu0 0.0
    %1695 = vmatprep.subr.mxu0 0.0
    %1696 = vmatpush1.msra.mxu0 0.0
    %1697 = vmatprep.subr.mxu0 0.0
    %1698 = vmatpush1.msra.mxu0 0.0
    %1699 = vmatprep.mubr.f32.mxu0 0.0
    %1700 = vmatmul.mubr.f32.gmra.mrb[0].mxu0 %v1624
    %v1701 = vpop.f32.mrb[0].mxu0
    %v1702 = vadd.f32 0.0, %v1701
    %v1703 = vpop.f32.mrb[0].mxu0
    %1704 = vmatprep.mubr.f32.mxu0 0.0
    %1705 = vmatmul.mubr.f32.gmra.mrb[0].mxu0 %v1627
    %v1706 = vpop.f32.mrb[0].mxu0
    %v1707 = vadd.f32 0.0, %v1706
    %v1708 = vpop.f32.mrb[0].mxu0
    %1709 = vmatprep.mubr.f32.mxu0 0.0
    %1710 = vmatmul.mubr.f32.gmra.mrb[0].mxu0 %v1630
    %v1711 = vpop.f32.mrb[0].mxu0
    %v1712 = vadd.f32 0.0, %v1711
    %v1713 = vpop.f32.mrb[0].mxu0
    %1714 = vmatprep.mubr.f32.mxu0 0.0
    %1715 = vmatmul.mubr.f32.gmra.mrb[0].mxu0 %v1633
    %v1716 = vpop.f32.mrb[0].mxu0
    %v1717 = vadd.f32 0.0, %v1716
    %v1718 = vpop.f32.mrb[0].mxu0
    %1719 = vdwg.mxu0
    %1724 = vrot.lane.b32.xlu0 %v1162, 8
    %v1725 = vpop.permute.xlu0 %1724
    %1726 = vrot.lane.b32.xlu0 %v1167, 8
    %v1727 = vpop.permute.xlu0 %1726
    %1728 = vrot.lane.b32.xlu0 %v1172, 8
    %v1729 = vpop.permute.xlu0 %1728
    %1730 = vrot.lane.b32.xlu0 %v1177, 8
    %v1731 = vpop.permute.xlu0 %1730
    %1740 = vrot.lane.b32.xlu0 %v1432, 16
    %v1741 = vpop.permute.xlu0 %1740
    %1742 = vrot.lane.b32.xlu0 %v1437, 16
    %v1743 = vpop.permute.xlu0 %1742
    %1744 = vrot.lane.b32.xlu0 %v1442, 16
    %v1745 = vpop.permute.xlu0 %1744
    %1746 = vrot.lane.b32.xlu0 %v1447, 16
    %v1747 = vpop.permute.xlu0 %1746
    %1756 = vrot.lane.b32.xlu0 %v1702, 24
    %v1757 = vpop.permute.xlu0 %1756
    %1758 = vrot.lane.b32.xlu0 %v1707, 24
    %v1759 = vpop.permute.xlu0 %1758
    %1760 = vrot.lane.b32.xlu0 %v1712, 24
    %v1761 = vpop.permute.xlu0 %1760
    %1762 = vrot.lane.b32.xlu0 %v1717, 24
    %v1763 = vpop.permute.xlu0 %1762
    %v1768 = vsel %vm654, %v888, %v1725
    %v1769 = vsel %vm654, %v893, %v1727
    %v1770 = vsel %vm654, %v898, %v1729
    %v1771 = vsel %vm654, %v903, %v1731
    %v1772 = vsel %vm192, %v1768, %v1741
    %v1773 = vsel %vm192, %v1769, %v1743
    %v1774 = vsel %vm192, %v1770, %v1745
    %v1775 = vsel %vm192, %v1771, %v1747
    %vm1776 = vcmask 195584
    %v1777 = vsel %vm1776, %v1772, %v1757
    %v1778 = vsel %vm1776, %v1773, %v1759
    %v1779 = vsel %vm1776, %v1774, %v1761
    %v1780 = vsel %vm1776, %v1775, %v1763
    %v1782 = vlaneseq
    %v1783 = vshrl.u32 %v1782, 7
    %v1784 = vsub.s32 0, %v1783
    %v1785 = vrot.slane %v181, %v1784
    %v1788 = vsel %vm764, %v1777, 0
    %v1791 = vsel %vm764, %v1778, 0
    %v1794 = vsel %vm764, %v1779, 0
    %v1797 = vsel %vm764, %v1780, 0
    %1799 = vmatprep.subr.mxu0 0.0
    %1800 = vmatpush1.msra.mxu0 %v177
    %1801 = vmatprep.subr.mxu0 0.0
    %1802 = vmatpush1.msra.mxu0 %v178
    %1803 = vmatprep.subr.mxu0 0.0
    %1804 = vmatpush1.msra.mxu0 %v179
    %1805 = vmatprep.subr.mxu0 0.0
    %1806 = vmatpush1.msra.mxu0 %v180
    %1807 = vmatprep.subr.mxu0 0.0
    %1808 = vmatpush1.msra.mxu0 0.0
    %1809 = vmatprep.subr.mxu0 0.0
    %1810 = vmatpush1.msra.mxu0 0.0
    %1811 = vmatprep.subr.mxu0 0.0
    %1812 = vmatpush1.msra.mxu0 0.0
    %1813 = vmatprep.subr.mxu0 0.0
    %1814 = vmatpush1.msra.mxu0 0.0
    %1815 = vmatprep.subr.mxu0 0.0
    %1816 = vmatpush1.msra.mxu0 0.0
    %1817 = vmatprep.subr.mxu0 0.0
    %1818 = vmatpush1.msra.mxu0 0.0
    %1819 = vmatprep.subr.mxu0 0.0
    %1820 = vmatpush1.msra.mxu0 0.0
    %1821 = vmatprep.subr.mxu0 0.0
    %1822 = vmatpush1.msra.mxu0 0.0
    %1823 = vmatprep.subr.mxu0 0.0
    %1824 = vmatpush1.msra.mxu0 0.0
    %1825 = vmatprep.subr.mxu0 0.0
    %1826 = vmatpush1.msra.mxu0 0.0
    %1827 = vmatprep.subr.mxu0 0.0
    %1828 = vmatpush1.msra.mxu0 0.0
    %1829 = vmatprep.subr.mxu0 0.0
    %1830 = vmatpush1.msra.mxu0 0.0
    %1831 = vmatprep.subr.mxu0 0.0
    %1832 = vmatpush1.msra.mxu0 0.0
    %1833 = vmatprep.subr.mxu0 0.0
    %1834 = vmatpush1.msra.mxu0 0.0
    %1835 = vmatprep.subr.mxu0 0.0
    %1836 = vmatpush1.msra.mxu0 0.0
    %1837 = vmatprep.subr.mxu0 0.0
    %1838 = vmatpush1.msra.mxu0 0.0
    %1839 = vmatprep.subr.mxu0 0.0
    %1840 = vmatpush1.msra.mxu0 0.0
    %1841 = vmatprep.subr.mxu0 0.0
    %1842 = vmatpush1.msra.mxu0 0.0
    %1843 = vmatprep.subr.mxu0 0.0
    %1844 = vmatpush1.msra.mxu0 0.0
    %1845 = vmatprep.subr.mxu0 0.0
    %1846 = vmatpush1.msra.mxu0 0.0
    %1847 = vmatprep.subr.mxu0 0.0
    %1848 = vmatpush1.msra.mxu0 0.0
    %1849 = vmatprep.subr.mxu0 0.0
    %1850 = vmatpush1.msra.mxu0 0.0
    %1851 = vmatprep.subr.mxu0 0.0
    %1852 = vmatpush1.msra.mxu0 0.0
    %1853 = vmatprep.subr.mxu0 0.0
    %1854 = vmatpush1.msra.mxu0 0.0
    %1855 = vmatprep.subr.mxu0 0.0
    %1856 = vmatpush1.msra.mxu0 0.0
    %1857 = vmatprep.subr.mxu0 0.0
    %1858 = vmatpush1.msra.mxu0 0.0
    %1859 = vmatprep.subr.mxu0 0.0
    %1860 = vmatpush1.msra.mxu0 0.0
    %1861 = vmatprep.subr.mxu0 0.0
    %1862 = vmatpush1.msra.mxu0 0.0
    %1863 = vmatprep.mubr.f32.mxu0 0.0
    %1864 = vmatmul.mubr.f32.gmra.mrb[0].mxu0 %v1788
    %v1865 = vpop.f32.mrb[0].mxu0
    %v1866 = vadd.f32 %v1785, %v1865
    %v1867 = vpop.f32.mrb[0].mxu0
    %1868 = vmatprep.mubr.f32.mxu0 0.0
    %1869 = vmatmul.mubr.f32.gmra.mrb[0].mxu0 %v1791
    %v1870 = vpop.f32.mrb[0].mxu0
    %v1871 = vadd.f32 %v1785, %v1870
    %v1872 = vpop.f32.mrb[0].mxu0
    %1873 = vmatprep.mubr.f32.mxu0 0.0
    %1874 = vmatmul.mubr.f32.gmra.mrb[0].mxu0 %v1794
    %v1875 = vpop.f32.mrb[0].mxu0
    %v1876 = vadd.f32 %v1785, %v1875
    %v1877 = vpop.f32.mrb[0].mxu0
    %1878 = vmatprep.mubr.f32.mxu0 0.0
    %1879 = vmatmul.mubr.f32.gmra.mrb[0].mxu0 %v1797
    %v1880 = vpop.f32.mrb[0].mxu0
    %v1881 = vadd.f32 %v1785, %v1880
    %v1882 = vpop.f32.mrb[0].mxu0
    %1883 = vdwg.mxu0
    %v1884 = vadd.f32 %v1866, %v151
    %v1885 = vadd.f32 %v1871, %v152
    %v1886 = vadd.f32 %v1876, %v153
    %v1887 = vadd.f32 %v1881, %v154
    %v1888 = vsel %vm192, %v1884, 0.0
    %1889 = vadd.xlane.f32.xlu0 %v1888
    %v1890 = vpop.xlane.xlu0 %1889
    %v1891 = vsel %vm192, %v1885, 0.0
    %1892 = vadd.xlane.f32.xlu0 %v1891
    %v1893 = vpop.xlane.xlu0 %1892
    %v1894 = vsel %vm192, %v1886, 0.0
    %1895 = vadd.xlane.f32.xlu0 %v1894
    %v1896 = vpop.xlane.xlu0 %1895
    %v1897 = vsel %vm192, %v1887, 0.0
    %1898 = vadd.xlane.f32.xlu0 %v1897
    %v1899 = vpop.xlane.xlu0 %1898
    %v1900 = vrcp.pop 16.0
    %v1901 = vmul.f32 %v1890, %v1900
    %v1902 = vmul.f32 %v1893, %v1900
    %v1903 = vmul.f32 %v1896, %v1900
    %v1904 = vmul.f32 %v1899, %v1900
    %v1905 = vsub.f32 %v1884, %v1901
    %v1906 = vsub.f32 %v1885, %v1902
    %v1907 = vsub.f32 %v1886, %v1903
    %v1908 = vsub.f32 %v1887, %v1904
    %v1909 = vmul.f32 %v1905, %v1905
    %v1910 = vmul.f32 %v1906, %v1906
    %v1911 = vmul.f32 %v1907, %v1907
    %v1912 = vmul.f32 %v1908, %v1908
    %v1913 = vsel %vm192, %v1909, 0.0
    %1914 = vadd.xlane.f32.xlu0 %v1913
    %v1915 = vpop.xlane.xlu0 %1914
    %v1916 = vsel %vm192, %v1910, 0.0
    %1917 = vadd.xlane.f32.xlu0 %v1916
    %v1918 = vpop.xlane.xlu0 %1917
    %v1919 = vsel %vm192, %v1911, 0.0
    %1920 = vadd.xlane.f32.xlu0 %v1919
    %v1921 = vpop.xlane.xlu0 %1920
    %v1922 = vsel %vm192, %v1912, 0.0
    %1923 = vadd.xlane.f32.xlu0 %v1922
    %v1924 = vpop.xlane.xlu0 %1923
    %v1925 = vmul.f32 %v1915, %v1900
    %v1926 = vmul.f32 %v1918, %v1900
    %v1927 = vmul.f32 %v1921, %v1900
    %v1928 = vmul.f32 %v1924, %v1900
    %v1929 = vadd.f32 %v1925, 1e-05
    %v1930 = vadd.f32 %v1926, 1e-05
    %v1931 = vadd.f32 %v1927, 1e-05
    %v1932 = vadd.f32 %v1928, 1e-05
    %v1933 = vrsqrt.pop %v1929
    %v1934 = vrsqrt.pop %v1930
    %v1935 = vrsqrt.pop %v1931
    %v1936 = vrsqrt.pop %v1932
    %v1937 = vmul.f32 %v1905, %v1933
    %v1938 = vmul.f32 %v1906, %v1934
    %v1939 = vmul.f32 %v1907, %v1935
    %v1940 = vmul.f32 %v1908, %v1936
    %v1942 = vlaneseq
    %v1943 = vshrl.u32 %v1942, 7
    %v1944 = vsub.s32 0, %v1943
    %v1945 = vrot.slane %v182, %v1944
    %v1947 = vmul.f32 %v1937, %v1945
    %v1948 = vmul.f32 %v1938, %v1945
    %v1949 = vmul.f32 %v1939, %v1945
    %v1950 = vmul.f32 %v1940, %v1945
    %v1952 = vlaneseq
    %v1953 = vshrl.u32 %v1952, 7
    %v1954 = vsub.s32 0, %v1953
    %v1955 = vrot.slane %v183, %v1954
    %v1957 = vadd.f32 %v1947, %v1955
    %v1958 = vadd.f32 %v1948, %v1955
    %v1959 = vadd.f32 %v1949, %v1955
    %v1960 = vadd.f32 %v1950, %v1955
    %v1962 = vlaneseq
    %v1963 = vshrl.u32 %v1962, 7
    %v1964 = vsub.s32 0, %v1963
    %v1965 = vrot.slane %v186, %v1964
    %v1968 = vsel %vm192, %v1957, 0
    %v1971 = vsel %vm192, %v1958, 0
    %v1974 = vsel %vm192, %v1959, 0
    %v1977 = vsel %vm192, %v1960, 0
    %1979 = vmatprep.subr.mxu0 0.0
    %1980 = vmatpush1.msra.mxu0 %v184
    %1981 = vmatprep.subr.mxu0 0.0
    %1982 = vmatpush1.msra.mxu0 %v185
    %1983 = vmatprep.subr.mxu0 0.0
    %1984 = vmatpush1.msra.mxu0 0.0
    %1985 = vmatprep.subr.mxu0 0.0
    %1986 = vmatpush1.msra.mxu0 0.0
    %1987 = vmatprep.subr.mxu0 0.0
    %1988 = vmatpush1.msra.mxu0 0.0
    %1989 = vmatprep.subr.mxu0 0.0
    %1990 = vmatpush1.msra.mxu0 0.0
    %1991 = vmatprep.subr.mxu0 0.0
    %1992 = vmatpush1.msra.mxu0 0.0
    %1993 = vmatprep.subr.mxu0 0.0
    %1994 = vmatpush1.msra.mxu0 0.0
    %1995 = vmatprep.subr.mxu0 0.0
    %1996 = vmatpush1.msra.mxu0 0.0
    %1997 = vmatprep.subr.mxu0 0.0
    %1998 = vmatpush1.msra.mxu0 0.0
    %1999 = vmatprep.subr.mxu0 0.0
    %2000 = vmatpush1.msra.mxu0 0.0
    %2001 = vmatprep.subr.mxu0 0.0
    %2002 = vmatpush1.msra.mxu0 0.0
    %2003 = vmatprep.subr.mxu0 0.0
    %2004 = vmatpush1.msra.mxu0 0.0
    %2005 = vmatprep.subr.mxu0 0.0
    %2006 = vmatpush1.msra.mxu0 0.0
    %2007 = vmatprep.subr.mxu0 0.0
    %2008 = vmatpush1.msra.mxu0 0.0
    %2009 = vmatprep.subr.mxu0 0.0
    %2010 = vmatpush1.msra.mxu0 0.0
    %2011 = vmatprep.subr.mxu0 0.0
    %2012 = vmatpush1.msra.mxu0 0.0
    %2013 = vmatprep.subr.mxu0 0.0
    %2014 = vmatpush1.msra.mxu0 0.0
    %2015 = vmatprep.subr.mxu0 0.0
    %2016 = vmatpush1.msra.mxu0 0.0
    %2017 = vmatprep.subr.mxu0 0.0
    %2018 = vmatpush1.msra.mxu0 0.0
    %2019 = vmatprep.subr.mxu0 0.0
    %2020 = vmatpush1.msra.mxu0 0.0
    %2021 = vmatprep.subr.mxu0 0.0
    %2022 = vmatpush1.msra.mxu0 0.0
    %2023 = vmatprep.subr.mxu0 0.0
    %2024 = vmatpush1.msra.mxu0 0.0
    %2025 = vmatprep.subr.mxu0 0.0
    %2026 = vmatpush1.msra.mxu0 0.0
    %2027 = vmatprep.subr.mxu0 0.0
    %2028 = vmatpush1.msra.mxu0 0.0
    %2029 = vmatprep.subr.mxu0 0.0
    %2030 = vmatpush1.msra.mxu0 0.0
    %2031 = vmatprep.subr.mxu0 0.0
    %2032 = vmatpush1.msra.mxu0 0.0
    %2033 = vmatprep.subr.mxu0 0.0
    %2034 = vmatpush1.msra.mxu0 0.0
    %2035 = vmatprep.subr.mxu0 0.0
    %2036 = vmatpush1.msra.mxu0 0.0
    %2037 = vmatprep.subr.mxu0 0.0
    %2038 = vmatpush1.msra.mxu0 0.0
    %2039 = vmatprep.subr.mxu0 0.0
    %2040 = vmatpush1.msra.mxu0 0.0
    %2041 = vmatprep.subr.mxu0 0.0
    %2042 = vmatpush1.msra.mxu0 0.0
    %2043 = vmatprep.mubr.f32.mxu0 0.0
    %2044 = vmatmul.mubr.f32.gmra.mrb[0].mxu0 %v1968
    %v2045 = vpop.f32.mrb[0].mxu0
    %v2046 = vadd.f32 %v1965, %v2045
    %v2047 = vpop.f32.mrb[0].mxu0
    %2048 = vmatprep.mubr.f32.mxu0 0.0
    %2049 = vmatmul.mubr.f32.gmra.mrb[0].mxu0 %v1971
    %v2050 = vpop.f32.mrb[0].mxu0
    %v2051 = vadd.f32 %v1965, %v2050
    %v2052 = vpop.f32.mrb[0].mxu0
    %2053 = vmatprep.mubr.f32.mxu0 0.0
    %2054 = vmatmul.mubr.f32.gmra.mrb[0].mxu0 %v1974
    %v2055 = vpop.f32.mrb[0].mxu0
    %v2056 = vadd.f32 %v1965, %v2055
    %v2057 = vpop.f32.mrb[0].mxu0
    %2058 = vmatprep.mubr.f32.mxu0 0.0
    %2059 = vmatmul.mubr.f32.gmra.mrb[0].mxu0 %v1977
    %v2060 = vpop.f32.mrb[0].mxu0
    %v2061 = vadd.f32 %v1965, %v2060
    %v2062 = vpop.f32.mrb[0].mxu0
    %2063 = vdwg.mxu0
    %v2064 = vmul.f32 %v2046, 0.5
    %v2065 = vmul.f32 %v2051, 0.5
    %v2066 = vmul.f32 %v2056, 0.5
    %v2067 = vmul.f32 %v2061, 0.5
    %v2068 = vmul.f32 %v2046, 0.70710677
    %v2069 = vmul.f32 %v2051, 0.70710677
    %v2070 = vmul.f32 %v2056, 0.70710677
    %v2071 = vmul.f32 %v2061, 0.70710677
    %v2072 = vand.u32 2147483647, %v2068
    %v2073 = vand.u32 2147483647, %v2069
    %v2074 = vand.u32 2147483647, %v2070
    %v2075 = vand.u32 2147483647, %v2071
    %v2076 = vmul.f32 %v2072, 0.3275911
    %v2077 = vmul.f32 %v2073, 0.3275911
    %v2078 = vmul.f32 %v2074, 0.3275911
    %v2079 = vmul.f32 %v2075, 0.3275911
    %v2080 = vadd.f32 %v2076, 1.0
    %v2081 = vadd.f32 %v2077, 1.0
    %v2082 = vadd.f32 %v2078, 1.0
    %v2083 = vadd.f32 %v2079, 1.0
    %v2084 = vrcp.pop %v2080
    %v2085 = vmul.f32 1.0, %v2084
    %v2086 = vrcp.pop %v2081
    %v2087 = vmul.f32 1.0, %v2086
    %v2088 = vrcp.pop %v2082
    %v2089 = vmul.f32 1.0, %v2088
    %v2090 = vrcp.pop %v2083
    %v2091 = vmul.f32 1.0, %v2090
    %v2092 = vmul.f32 %v2085, 1.0614054
    %v2093 = vmul.f32 %v2087, 1.0614054
    %v2094 = vmul.f32 %v2089, 1.0614054
    %v2095 = vmul.f32 %v2091, 1.0614054
    %v2096 = vadd.f32 %v2092, -1.4531521
    %v2097 = vadd.f32 %v2093, -1.4531521
    %v2098 = vadd.f32 %v2094, -1.4531521
    %v2099 = vadd.f32 %v2095, -1.4531521
    %v2100 = vmul.f32 %v2096, %v2085
    %v2101 = vmul.f32 %v2097, %v2087
    %v2102 = vmul.f32 %v2098, %v2089
    %v2103 = vmul.f32 %v2099, %v2091
    %v2104 = vadd.f32 %v2100, 1.4214138
    %v2105 = vadd.f32 %v2101, 1.4214138
    %v2106 = vadd.f32 %v2102, 1.4214138
    %v2107 = vadd.f32 %v2103, 1.4214138
    %v2108 = vmul.f32 %v2104, %v2085
    %v2109 = vmul.f32 %v2105, %v2087
    %v2110 = vmul.f32 %v2106, %v2089
    %v2111 = vmul.f32 %v2107, %v2091
    %v2112 = vadd.f32 %v2108, -0.28449672
    %v2113 = vadd.f32 %v2109, -0.28449672
    %v2114 = vadd.f32 %v2110, -0.28449672
    %v2115 = vadd.f32 %v2111, -0.28449672
    %v2116 = vmul.f32 %v2112, %v2085
    %v2117 = vmul.f32 %v2113, %v2087
    %v2118 = vmul.f32 %v2114, %v2089
    %v2119 = vmul.f32 %v2115, %v2091
    %v2120 = vadd.f32 %v2116, 0.2548296
    %v2121 = vadd.f32 %v2117, 0.2548296
    %v2122 = vadd.f32 %v2118, 0.2548296
    %v2123 = vadd.f32 %v2119, 0.2548296
    %v2124 = vmul.f32 %v2120, %v2085
    %v2125 = vmul.f32 %v2121, %v2087
    %v2126 = vmul.f32 %v2122, %v2089
    %v2127 = vmul.f32 %v2123, %v2091
    %v2128 = vsub.f32 0.0, %v2072
    %v2129 = vsub.f32 0.0, %v2073
    %v2130 = vsub.f32 0.0, %v2074
    %v2131 = vsub.f32 0.0, %v2075
    %v2132 = vmul.f32 %v2128, %v2072
    %v2133 = vmul.f32 %v2129, %v2073
    %v2134 = vmul.f32 %v2130, %v2074
    %v2135 = vmul.f32 %v2131, %v2075
    %v2136 = vmul.f32 %v2132, 1.442695
    %v2137 = vpow.pop %v2136
    %v2138 = vmul.f32 %v2133, 1.442695
    %v2139 = vpow.pop %v2138
    %v2140 = vmul.f32 %v2134, 1.442695
    %v2141 = vpow.pop %v2140
    %v2142 = vmul.f32 %v2135, 1.442695
    %v2143 = vpow.pop %v2142
    %v2144 = vmul.f32 %v2124, %v2137
    %v2145 = vmul.f32 %v2125, %v2139
    %v2146 = vmul.f32 %v2126, %v2141
    %v2147 = vmul.f32 %v2127, %v2143
    %v2148 = vsub.f32 1.0, %v2144
    %v2149 = vsub.f32 1.0, %v2145
    %v2150 = vsub.f32 1.0, %v2146
    %v2151 = vsub.f32 1.0, %v2147
    %vm2152 = vcmp.ge.f32.partialorder %v2068, 0.0
    %vm2153 = vcmp.ge.f32.partialorder %v2069, 0.0
    %vm2154 = vcmp.ge.f32.partialorder %v2070, 0.0
    %vm2155 = vcmp.ge.f32.partialorder %v2071, 0.0
    %v2156 = vsub.f32 0.0, %v2148
    %v2157 = vsub.f32 0.0, %v2149
    %v2158 = vsub.f32 0.0, %v2150
    %v2159 = vsub.f32 0.0, %v2151
    %v2160 = vsel %vm2152, %v2148, %v2156
    %v2161 = vsel %vm2153, %v2149, %v2157
    %v2162 = vsel %vm2154, %v2150, %v2158
    %v2163 = vsel %vm2155, %v2151, %v2159
    %v2164 = vadd.f32 %v2160, 1.0
    %v2165 = vadd.f32 %v2161, 1.0
    %v2166 = vadd.f32 %v2162, 1.0
    %v2167 = vadd.f32 %v2163, 1.0
    %v2168 = vmul.f32 %v2064, %v2164
    %v2169 = vmul.f32 %v2065, %v2165
    %v2170 = vmul.f32 %v2066, %v2166
    %v2171 = vmul.f32 %v2067, %v2167
    %v2173 = vlaneseq
    %v2174 = vshrl.u32 %v2173, 7
    %v2175 = vsub.s32 0, %v2174
    %v2176 = vrot.slane %v191, %v2175
    %v2179 = vsel %vm764, %v2168, 0
    %v2182 = vsel %vm764, %v2169, 0
    %v2185 = vsel %vm764, %v2170, 0
    %v2188 = vsel %vm764, %v2171, 0
    %2190 = vmatprep.subr.mxu0 0.0
    %2191 = vmatpush1.msra.mxu0 %v187
    %2192 = vmatprep.subr.mxu0 0.0
    %2193 = vmatpush1.msra.mxu0 %v188
    %2194 = vmatprep.subr.mxu0 0.0
    %2195 = vmatpush1.msra.mxu0 %v189
    %2196 = vmatprep.subr.mxu0 0.0
    %2197 = vmatpush1.msra.mxu0 %v190
    %2198 = vmatprep.subr.mxu0 0.0
    %2199 = vmatpush1.msra.mxu0 0.0
    %2200 = vmatprep.subr.mxu0 0.0
    %2201 = vmatpush1.msra.mxu0 0.0
    %2202 = vmatprep.subr.mxu0 0.0
    %2203 = vmatpush1.msra.mxu0 0.0
    %2204 = vmatprep.subr.mxu0 0.0
    %2205 = vmatpush1.msra.mxu0 0.0
    %2206 = vmatprep.subr.mxu0 0.0
    %2207 = vmatpush1.msra.mxu0 0.0
    %2208 = vmatprep.subr.mxu0 0.0
    %2209 = vmatpush1.msra.mxu0 0.0
    %2210 = vmatprep.subr.mxu0 0.0
    %2211 = vmatpush1.msra.mxu0 0.0
    %2212 = vmatprep.subr.mxu0 0.0
    %2213 = vmatpush1.msra.mxu0 0.0
    %2214 = vmatprep.subr.mxu0 0.0
    %2215 = vmatpush1.msra.mxu0 0.0
    %2216 = vmatprep.subr.mxu0 0.0
    %2217 = vmatpush1.msra.mxu0 0.0
    %2218 = vmatprep.subr.mxu0 0.0
    %2219 = vmatpush1.msra.mxu0 0.0
    %2220 = vmatprep.subr.mxu0 0.0
    %2221 = vmatpush1.msra.mxu0 0.0
    %2222 = vmatprep.subr.mxu0 0.0
    %2223 = vmatpush1.msra.mxu0 0.0
    %2224 = vmatprep.subr.mxu0 0.0
    %2225 = vmatpush1.msra.mxu0 0.0
    %2226 = vmatprep.subr.mxu0 0.0
    %2227 = vmatpush1.msra.mxu0 0.0
    %2228 = vmatprep.subr.mxu0 0.0
    %2229 = vmatpush1.msra.mxu0 0.0
    %2230 = vmatprep.subr.mxu0 0.0
    %2231 = vmatpush1.msra.mxu0 0.0
    %2232 = vmatprep.subr.mxu0 0.0
    %2233 = vmatpush1.msra.mxu0 0.0
    %2234 = vmatprep.subr.mxu0 0.0
    %2235 = vmatpush1.msra.mxu0 0.0
    %2236 = vmatprep.subr.mxu0 0.0
    %2237 = vmatpush1.msra.mxu0 0.0
    %2238 = vmatprep.subr.mxu0 0.0
    %2239 = vmatpush1.msra.mxu0 0.0
    %2240 = vmatprep.subr.mxu0 0.0
    %2241 = vmatpush1.msra.mxu0 0.0
    %2242 = vmatprep.subr.mxu0 0.0
    %2243 = vmatpush1.msra.mxu0 0.0
    %2244 = vmatprep.subr.mxu0 0.0
    %2245 = vmatpush1.msra.mxu0 0.0
    %2246 = vmatprep.subr.mxu0 0.0
    %2247 = vmatpush1.msra.mxu0 0.0
    %2248 = vmatprep.subr.mxu0 0.0
    %2249 = vmatpush1.msra.mxu0 0.0
    %2250 = vmatprep.subr.mxu0 0.0
    %2251 = vmatpush1.msra.mxu0 0.0
    %2252 = vmatprep.subr.mxu0 0.0
    %2253 = vmatpush1.msra.mxu0 0.0
    %2254 = vmatprep.mubr.f32.mxu0 0.0
    %2255 = vmatmul.mubr.f32.gmra.mrb[0].mxu0 %v2179
    %v2256 = vpop.f32.mrb[0].mxu0
    %v2257 = vadd.f32 %v2176, %v2256
    %v2258 = vpop.f32.mrb[0].mxu0
    %2259 = vmatprep.mubr.f32.mxu0 0.0
    %2260 = vmatmul.mubr.f32.gmra.mrb[0].mxu0 %v2182
    %v2261 = vpop.f32.mrb[0].mxu0
    %v2262 = vadd.f32 %v2176, %v2261
    %v2263 = vpop.f32.mrb[0].mxu0
    %2264 = vmatprep.mubr.f32.mxu0 0.0
    %2265 = vmatmul.mubr.f32.gmra.mrb[0].mxu0 %v2185
    %v2266 = vpop.f32.mrb[0].mxu0
    %v2267 = vadd.f32 %v2176, %v2266
    %v2268 = vpop.f32.mrb[0].mxu0
    %2269 = vmatprep.mubr.f32.mxu0 0.0
    %2270 = vmatmul.mubr.f32.gmra.mrb[0].mxu0 %v2188
    %v2271 = vpop.f32.mrb[0].mxu0
    %v2272 = vadd.f32 %v2176, %v2271
    %v2273 = vpop.f32.mrb[0].mxu0
    %2274 = vdwg.mxu0
    %v2275 = vadd.f32 %v2257, %v1884
    %v2276 = vadd.f32 %v2262, %v1885
    %v2277 = vadd.f32 %v2267, %v1886
    %v2278 = vadd.f32 %v2272, %v1887
    %s2279 = scalar_lea.vmem %s1, 16
    %v2280 = vld [vmem:[%s2279] sm:$0xff]
    %v2281 = vld [vmem:[%s2279 + $0x8] sm:$0xff]
    %s2282 = scalar_lea.vmem %s2, 16
    %v2283 = vld [vmem:[%s2282] sm:$0xff]
    %v2284 = vld [vmem:[%s2282 + $0x8] sm:$0xff]
    %s2285 = scalar_lea.vmem %s3, 16
    %v2286 = vld [vmem:[%s2285] sm:$0xff]
    %v2287 = vld [vmem:[%s2285 + $0x8] sm:$0xff]
    %s2288 = scalar_lea.vmem %s4, 16
    %v2289 = vld [vmem:[%s2288] sm:$0xff]
    %v2290 = vld [vmem:[%s2288 + $0x8] sm:$0xff]
    %s2291 = scalar_lea.vmem %s5, 16
    %v2292 = vld [vmem:[%s2291] sm:$0xff]
    %v2293 = vld [vmem:[%s2291 + $0x8] sm:$0xff]
    %s2294 = scalar_lea.vmem %s6, 32
    %v2295 = vld [vmem:[%s2294] sm:$0xff]
    %v2296 = vld [vmem:[%s2294 + $0x8] sm:$0xff]
    %v2297 = vld [vmem:[%s2294 + $0x10] sm:$0xff]
    %v2298 = vld [vmem:[%s2294 + $0x18] sm:$0xff]
    %s2299 = scalar_lea.vmem [#allocation2], 1
    %v2300 = vld [vmem:[%s2299] sm:$0x1]
    %s2301 = scalar_lea.vmem [#allocation4], 1
    %v2302 = vld [vmem:[%s2301] sm:$0x1]
    %s2303 = scalar_lea.vmem [#allocation6], 1
    %v2304 = vld [vmem:[%s2303] sm:$0x1]
    %s2305 = scalar_lea.vmem %s10, 16
    %v2306 = vld [vmem:[%s2305] sm:$0xff]
    %v2307 = vld [vmem:[%s2305 + $0x8] sm:$0xff]
    %s2308 = scalar_lea.vmem [#allocation7], 1
    %v2309 = vld [vmem:[%s2308] sm:$0x1]
    %s2310 = scalar_lea.vmem %s12, 32
    %v2311 = vld [vmem:[%s2310] sm:$0xff]
    %v2312 = vld [vmem:[%s2310 + $0x8] sm:$0xff]
    %v2313 = vld [vmem:[%s2310 + $0x10] sm:$0xff]
    %v2314 = vld [vmem:[%s2310 + $0x18] sm:$0xff]
    %s2315 = scalar_lea.vmem [#allocation9], 1
    %v2316 = vld [vmem:[%s2315] sm:$0x1]
    %v2318 = vsel %vm192, %v2275, 0
    %v2321 = vsel %vm192, %v2276, 0
    %v2324 = vsel %vm192, %v2277, 0
    %v2327 = vsel %vm192, %v2278, 0
    %2329 = vmatprep.subr.mxu0 0.0
    %2330 = vmatpush1.msra.mxu0 %v2280
    %2331 = vmatprep.subr.mxu0 0.0
    %2332 = vmatpush1.msra.mxu0 %v2281
    %2333 = vmatprep.subr.mxu0 0.0
    %2334 = vmatpush1.msra.mxu0 0.0
    %2335 = vmatprep.subr.mxu0 0.0
    %2336 = vmatpush1.msra.mxu0 0.0
    %2337 = vmatprep.subr.mxu0 0.0
    %2338 = vmatpush1.msra.mxu0 0.0
    %2339 = vmatprep.subr.mxu0 0.0
    %2340 = vmatpush1.msra.mxu0 0.0
    %2341 = vmatprep.subr.mxu0 0.0
    %2342 = vmatpush1.msra.mxu0 0.0
    %2343 = vmatprep.subr.mxu0 0.0
    %2344 = vmatpush1.msra.mxu0 0.0
    %2345 = vmatprep.subr.mxu0 0.0
    %2346 = vmatpush1.msra.mxu0 0.0
    %2347 = vmatprep.subr.mxu0 0.0
    %2348 = vmatpush1.msra.mxu0 0.0
    %2349 = vmatprep.subr.mxu0 0.0
    %2350 = vmatpush1.msra.mxu0 0.0
    %2351 = vmatprep.subr.mxu0 0.0
    %2352 = vmatpush1.msra.mxu0 0.0
    %2353 = vmatprep.subr.mxu0 0.0
    %2354 = vmatpush1.msra.mxu0 0.0
    %2355 = vmatprep.subr.mxu0 0.0
    %2356 = vmatpush1.msra.mxu0 0.0
    %2357 = vmatprep.subr.mxu0 0.0
    %2358 = vmatpush1.msra.mxu0 0.0
    %2359 = vmatprep.subr.mxu0 0.0
    %2360 = vmatpush1.msra.mxu0 0.0
    %2361 = vmatprep.subr.mxu0 0.0
    %2362 = vmatpush1.msra.mxu0 0.0
    %2363 = vmatprep.subr.mxu0 0.0
    %2364 = vmatpush1.msra.mxu0 0.0
    %2365 = vmatprep.subr.mxu0 0.0
    %2366 = vmatpush1.msra.mxu0 0.0
    %2367 = vmatprep.subr.mxu0 0.0
    %2368 = vmatpush1.msra.mxu0 0.0
    %2369 = vmatprep.subr.mxu0 0.0
    %2370 = vmatpush1.msra.mxu0 0.0
    %2371 = vmatprep.subr.mxu0 0.0
    %2372 = vmatpush1.msra.mxu0 0.0
    %2373 = vmatprep.subr.mxu0 0.0
    %2374 = vmatpush1.msra.mxu0 0.0
    %2375 = vmatprep.subr.mxu0 0.0
    %2376 = vmatpush1.msra.mxu0 0.0
    %2377 = vmatprep.subr.mxu0 0.0
    %2378 = vmatpush1.msra.mxu0 0.0
    %2379 = vmatprep.subr.mxu0 0.0
    %2380 = vmatpush1.msra.mxu0 0.0
    %2381 = vmatprep.subr.mxu0 0.0
    %2382 = vmatpush1.msra.mxu0 0.0
    %2383 = vmatprep.subr.mxu0 0.0
    %2384 = vmatpush1.msra.mxu0 0.0
    %2385 = vmatprep.subr.mxu0 0.0
    %2386 = vmatpush1.msra.mxu0 0.0
    %2387 = vmatprep.subr.mxu0 0.0
    %2388 = vmatpush1.msra.mxu0 0.0
    %2389 = vmatprep.subr.mxu0 0.0
    %2390 = vmatpush1.msra.mxu0 0.0
    %2391 = vmatprep.subr.mxu0 0.0
    %2392 = vmatpush1.msra.mxu0 0.0
    %2393 = vmatprep.mubr.f32.mxu0 0.0
    %2394 = vmatmul.mubr.f32.gmra.mrb[0].mxu0 %v2318
    %v2395 = vpop.f32.mrb[0].mxu0
    %v2396 = vadd.f32 0.0, %v2395
    %v2397 = vpop.f32.mrb[0].mxu0
    %2398 = vmatprep.mubr.f32.mxu0 0.0
    %2399 = vmatmul.mubr.f32.gmra.mrb[0].mxu0 %v2321
    %v2400 = vpop.f32.mrb[0].mxu0
    %v2401 = vadd.f32 0.0, %v2400
    %v2402 = vpop.f32.mrb[0].mxu0
    %2403 = vmatprep.mubr.f32.mxu0 0.0
    %2404 = vmatmul.mubr.f32.gmra.mrb[0].mxu0 %v2324
    %v2405 = vpop.f32.mrb[0].mxu0
    %v2406 = vadd.f32 0.0, %v2405
    %v2407 = vpop.f32.mrb[0].mxu0
    %2408 = vmatprep.mubr.f32.mxu0 0.0
    %2409 = vmatmul.mubr.f32.gmra.mrb[0].mxu0 %v2327
    %v2410 = vpop.f32.mrb[0].mxu0
    %v2411 = vadd.f32 0.0, %v2410
    %v2412 = vpop.f32.mrb[0].mxu0
    %2413 = vdwg.mxu0
    %v2414 = vmul.f32 %v2396, %v155
    %v2415 = vmul.f32 %v2401, %v156
    %v2416 = vmul.f32 %v2406, %v157
    %v2417 = vmul.f32 %v2411, %v158
    %2418 = vmatprep.subr.mxu0 0.0
    %2419 = vmatpush1.msra.mxu0 %v2283
    %2420 = vmatprep.subr.mxu0 0.0
    %2421 = vmatpush1.msra.mxu0 %v2284
    %2422 = vmatprep.subr.mxu0 0.0
    %2423 = vmatpush1.msra.mxu0 0.0
    %2424 = vmatprep.subr.mxu0 0.0
    %2425 = vmatpush1.msra.mxu0 0.0
    %2426 = vmatprep.subr.mxu0 0.0
    %2427 = vmatpush1.msra.mxu0 0.0
    %2428 = vmatprep.subr.mxu0 0.0
    %2429 = vmatpush1.msra.mxu0 0.0
    %2430 = vmatprep.subr.mxu0 0.0
    %2431 = vmatpush1.msra.mxu0 0.0
    %2432 = vmatprep.subr.mxu0 0.0
    %2433 = vmatpush1.msra.mxu0 0.0
    %2434 = vmatprep.subr.mxu0 0.0
    %2435 = vmatpush1.msra.mxu0 0.0
    %2436 = vmatprep.subr.mxu0 0.0
    %2437 = vmatpush1.msra.mxu0 0.0
    %2438 = vmatprep.subr.mxu0 0.0
    %2439 = vmatpush1.msra.mxu0 0.0
    %2440 = vmatprep.subr.mxu0 0.0
    %2441 = vmatpush1.msra.mxu0 0.0
    %2442 = vmatprep.subr.mxu0 0.0
    %2443 = vmatpush1.msra.mxu0 0.0
    %2444 = vmatprep.subr.mxu0 0.0
    %2445 = vmatpush1.msra.mxu0 0.0
    %2446 = vmatprep.subr.mxu0 0.0
    %2447 = vmatpush1.msra.mxu0 0.0
    %2448 = vmatprep.subr.mxu0 0.0
    %2449 = vmatpush1.msra.mxu0 0.0
    %2450 = vmatprep.subr.mxu0 0.0
    %2451 = vmatpush1.msra.mxu0 0.0
    %2452 = vmatprep.subr.mxu0 0.0
    %2453 = vmatpush1.msra.mxu0 0.0
    %2454 = vmatprep.subr.mxu0 0.0
    %2455 = vmatpush1.msra.mxu0 0.0
    %2456 = vmatprep.subr.mxu0 0.0
    %2457 = vmatpush1.msra.mxu0 0.0
    %2458 = vmatprep.subr.mxu0 0.0
    %2459 = vmatpush1.msra.mxu0 0.0
    %2460 = vmatprep.subr.mxu0 0.0
    %2461 = vmatpush1.msra.mxu0 0.0
    %2462 = vmatprep.subr.mxu0 0.0
    %2463 = vmatpush1.msra.mxu0 0.0
    %2464 = vmatprep.subr.mxu0 0.0
    %2465 = vmatpush1.msra.mxu0 0.0
    %2466 = vmatprep.subr.mxu0 0.0
    %2467 = vmatpush1.msra.mxu0 0.0
    %2468 = vmatprep.subr.mxu0 0.0
    %2469 = vmatpush1.msra.mxu0 0.0
    %2470 = vmatprep.subr.mxu0 0.0
    %2471 = vmatpush1.msra.mxu0 0.0
    %2472 = vmatprep.subr.mxu0 0.0
    %2473 = vmatpush1.msra.mxu0 0.0
    %2474 = vmatprep.subr.mxu0 0.0
    %2475 = vmatpush1.msra.mxu0 0.0
    %2476 = vmatprep.subr.mxu0 0.0
    %2477 = vmatpush1.msra.mxu0 0.0
    %2478 = vmatprep.subr.mxu0 0.0
    %2479 = vmatpush1.msra.mxu0 0.0
    %2480 = vmatprep.subr.mxu0 0.0
    %2481 = vmatpush1.msra.mxu0 0.0
    %2482 = vmatprep.mubr.f32.mxu0 0.0
    %2483 = vmatmul.mubr.f32.gmra.mrb[0].mxu0 %v2318
    %v2484 = vpop.f32.mrb[0].mxu0
    %v2485 = vadd.f32 0.0, %v2484
    %v2486 = vpop.f32.mrb[0].mxu0
    %2487 = vmatprep.mubr.f32.mxu0 0.0
    %2488 = vmatmul.mubr.f32.gmra.mrb[0].mxu0 %v2321
    %v2489 = vpop.f32.mrb[0].mxu0
    %v2490 = vadd.f32 0.0, %v2489
    %v2491 = vpop.f32.mrb[0].mxu0
    %2492 = vmatprep.mubr.f32.mxu0 0.0
    %2493 = vmatmul.mubr.f32.gmra.mrb[0].mxu0 %v2324
    %v2494 = vpop.f32.mrb[0].mxu0
    %v2495 = vadd.f32 0.0, %v2494
    %v2496 = vpop.f32.mrb[0].mxu0
    %2497 = vmatprep.mubr.f32.mxu0 0.0
    %2498 = vmatmul.mubr.f32.gmra.mrb[0].mxu0 %v2327
    %v2499 = vpop.f32.mrb[0].mxu0
    %v2500 = vadd.f32 0.0, %v2499
    %v2501 = vpop.f32.mrb[0].mxu0
    %2502 = vdwg.mxu0
    %v2503 = vmul.f32 %v2485, %v159
    %v2504 = vmul.f32 %v2490, %v160
    %v2505 = vmul.f32 %v2495, %v161
    %v2506 = vmul.f32 %v2500, %v162
    %v2507 = vadd.f32 %v2414, %v2503
    %v2508 = vadd.f32 %v2415, %v2504
    %v2509 = vadd.f32 %v2416, %v2505
    %v2510 = vadd.f32 %v2417, %v2506
    %2511 = vmatprep.subr.mxu0 0.0
    %2512 = vmatpush1.msra.mxu0 %v2286
    %2513 = vmatprep.subr.mxu0 0.0
    %2514 = vmatpush1.msra.mxu0 %v2287
    %2515 = vmatprep.subr.mxu0 0.0
    %2516 = vmatpush1.msra.mxu0 0.0
    %2517 = vmatprep.subr.mxu0 0.0
    %2518 = vmatpush1.msra.mxu0 0.0
    %2519 = vmatprep.subr.mxu0 0.0
    %2520 = vmatpush1.msra.mxu0 0.0
    %2521 = vmatprep.subr.mxu0 0.0
    %2522 = vmatpush1.msra.mxu0 0.0
    %2523 = vmatprep.subr.mxu0 0.0
    %2524 = vmatpush1.msra.mxu0 0.0
    %2525 = vmatprep.subr.mxu0 0.0
    %2526 = vmatpush1.msra.mxu0 0.0
    %2527 = vmatprep.subr.mxu0 0.0
    %2528 = vmatpush1.msra.mxu0 0.0
    %2529 = vmatprep.subr.mxu0 0.0
    %2530 = vmatpush1.msra.mxu0 0.0
    %2531 = vmatprep.subr.mxu0 0.0
    %2532 = vmatpush1.msra.mxu0 0.0
    %2533 = vmatprep.subr.mxu0 0.0
    %2534 = vmatpush1.msra.mxu0 0.0
    %2535 = vmatprep.subr.mxu0 0.0
    %2536 = vmatpush1.msra.mxu0 0.0
    %2537 = vmatprep.subr.mxu0 0.0
    %2538 = vmatpush1.msra.mxu0 0.0
    %2539 = vmatprep.subr.mxu0 0.0
    %2540 = vmatpush1.msra.mxu0 0.0
    %2541 = vmatprep.subr.mxu0 0.0
    %2542 = vmatpush1.msra.mxu0 0.0
    %2543 = vmatprep.subr.mxu0 0.0
    %2544 = vmatpush1.msra.mxu0 0.0
    %2545 = vmatprep.subr.mxu0 0.0
    %2546 = vmatpush1.msra.mxu0 0.0
    %2547 = vmatprep.subr.mxu0 0.0
    %2548 = vmatpush1.msra.mxu0 0.0
    %2549 = vmatprep.subr.mxu0 0.0
    %2550 = vmatpush1.msra.mxu0 0.0
    %2551 = vmatprep.subr.mxu0 0.0
    %2552 = vmatpush1.msra.mxu0 0.0
    %2553 = vmatprep.subr.mxu0 0.0
    %2554 = vmatpush1.msra.mxu0 0.0
    %2555 = vmatprep.subr.mxu0 0.0
    %2556 = vmatpush1.msra.mxu0 0.0
    %2557 = vmatprep.subr.mxu0 0.0
    %2558 = vmatpush1.msra.mxu0 0.0
    %2559 = vmatprep.subr.mxu0 0.0
    %2560 = vmatpush1.msra.mxu0 0.0
    %2561 = vmatprep.subr.mxu0 0.0
    %2562 = vmatpush1.msra.mxu0 0.0
    %2563 = vmatprep.subr.mxu0 0.0
    %2564 = vmatpush1.msra.mxu0 0.0
    %2565 = vmatprep.subr.mxu0 0.0
    %2566 = vmatpush1.msra.mxu0 0.0
    %2567 = vmatprep.subr.mxu0 0.0
    %2568 = vmatpush1.msra.mxu0 0.0
    %2569 = vmatprep.subr.mxu0 0.0
    %2570 = vmatpush1.msra.mxu0 0.0
    %2571 = vmatprep.subr.mxu0 0.0
    %2572 = vmatpush1.msra.mxu0 0.0
    %2573 = vmatprep.subr.mxu0 0.0
    %2574 = vmatpush1.msra.mxu0 0.0
    %2575 = vmatprep.mubr.f32.mxu0 0.0
    %2576 = vmatmul.mubr.f32.gmra.mrb[0].mxu0 %v2318
    %v2577 = vpop.f32.mrb[0].mxu0
    %v2578 = vadd.f32 0.0, %v2577
    %v2579 = vpop.f32.mrb[0].mxu0
    %2580 = vmatprep.mubr.f32.mxu0 0.0
    %2581 = vmatmul.mubr.f32.gmra.mrb[0].mxu0 %v2321
    %v2582 = vpop.f32.mrb[0].mxu0
    %v2583 = vadd.f32 0.0, %v2582
    %v2584 = vpop.f32.mrb[0].mxu0
    %2585 = vmatprep.mubr.f32.mxu0 0.0
    %2586 = vmatmul.mubr.f32.gmra.mrb[0].mxu0 %v2324
    %v2587 = vpop.f32.mrb[0].mxu0
    %v2588 = vadd.f32 0.0, %v2587
    %v2589 = vpop.f32.mrb[0].mxu0
    %2590 = vmatprep.mubr.f32.mxu0 0.0
    %2591 = vmatmul.mubr.f32.gmra.mrb[0].mxu0 %v2327
    %v2592 = vpop.f32.mrb[0].mxu0
    %v2593 = vadd.f32 0.0, %v2592
    %v2594 = vpop.f32.mrb[0].mxu0
    %2595 = vdwg.mxu0
    %v2596 = vmul.f32 %v2578, %v155
    %v2597 = vmul.f32 %v2583, %v156
    %v2598 = vmul.f32 %v2588, %v157
    %v2599 = vmul.f32 %v2593, %v158
    %2600 = vmatprep.subr.mxu0 0.0
    %2601 = vmatpush1.msra.mxu0 %v2289
    %2602 = vmatprep.subr.mxu0 0.0
    %2603 = vmatpush1.msra.mxu0 %v2290
    %2604 = vmatprep.subr.mxu0 0.0
    %2605 = vmatpush1.msra.mxu0 0.0
    %2606 = vmatprep.subr.mxu0 0.0
    %2607 = vmatpush1.msra.mxu0 0.0
    %2608 = vmatprep.subr.mxu0 0.0
    %2609 = vmatpush1.msra.mxu0 0.0
    %2610 = vmatprep.subr.mxu0 0.0
    %2611 = vmatpush1.msra.mxu0 0.0
    %2612 = vmatprep.subr.mxu0 0.0
    %2613 = vmatpush1.msra.mxu0 0.0
    %2614 = vmatprep.subr.mxu0 0.0
    %2615 = vmatpush1.msra.mxu0 0.0
    %2616 = vmatprep.subr.mxu0 0.0
    %2617 = vmatpush1.msra.mxu0 0.0
    %2618 = vmatprep.subr.mxu0 0.0
    %2619 = vmatpush1.msra.mxu0 0.0
    %2620 = vmatprep.subr.mxu0 0.0
    %2621 = vmatpush1.msra.mxu0 0.0
    %2622 = vmatprep.subr.mxu0 0.0
    %2623 = vmatpush1.msra.mxu0 0.0
    %2624 = vmatprep.subr.mxu0 0.0
    %2625 = vmatpush1.msra.mxu0 0.0
    %2626 = vmatprep.subr.mxu0 0.0
    %2627 = vmatpush1.msra.mxu0 0.0
    %2628 = vmatprep.subr.mxu0 0.0
    %2629 = vmatpush1.msra.mxu0 0.0
    %2630 = vmatprep.subr.mxu0 0.0
    %2631 = vmatpush1.msra.mxu0 0.0
    %2632 = vmatprep.subr.mxu0 0.0
    %2633 = vmatpush1.msra.mxu0 0.0
    %2634 = vmatprep.subr.mxu0 0.0
    %2635 = vmatpush1.msra.mxu0 0.0
    %2636 = vmatprep.subr.mxu0 0.0
    %2637 = vmatpush1.msra.mxu0 0.0
    %2638 = vmatprep.subr.mxu0 0.0
    %2639 = vmatpush1.msra.mxu0 0.0
    %2640 = vmatprep.subr.mxu0 0.0
    %2641 = vmatpush1.msra.mxu0 0.0
    %2642 = vmatprep.subr.mxu0 0.0
    %2643 = vmatpush1.msra.mxu0 0.0
    %2644 = vmatprep.subr.mxu0 0.0
    %2645 = vmatpush1.msra.mxu0 0.0
    %2646 = vmatprep.subr.mxu0 0.0
    %2647 = vmatpush1.msra.mxu0 0.0
    %2648 = vmatprep.subr.mxu0 0.0
    %2649 = vmatpush1.msra.mxu0 0.0
    %2650 = vmatprep.subr.mxu0 0.0
    %2651 = vmatpush1.msra.mxu0 0.0
    %2652 = vmatprep.subr.mxu0 0.0
    %2653 = vmatpush1.msra.mxu0 0.0
    %2654 = vmatprep.subr.mxu0 0.0
    %2655 = vmatpush1.msra.mxu0 0.0
    %2656 = vmatprep.subr.mxu0 0.0
    %2657 = vmatpush1.msra.mxu0 0.0
    %2658 = vmatprep.subr.mxu0 0.0
    %2659 = vmatpush1.msra.mxu0 0.0
    %2660 = vmatprep.subr.mxu0 0.0
    %2661 = vmatpush1.msra.mxu0 0.0
    %2662 = vmatprep.subr.mxu0 0.0
    %2663 = vmatpush1.msra.mxu0 0.0
    %2664 = vmatprep.mubr.f32.mxu0 0.0
    %2665 = vmatmul.mubr.f32.gmra.mrb[0].mxu0 %v2318
    %v2666 = vpop.f32.mrb[0].mxu0
    %v2667 = vadd.f32 0.0, %v2666
    %v2668 = vpop.f32.mrb[0].mxu0
    %2669 = vmatprep.mubr.f32.mxu0 0.0
    %2670 = vmatmul.mubr.f32.gmra.mrb[0].mxu0 %v2321
    %v2671 = vpop.f32.mrb[0].mxu0
    %v2672 = vadd.f32 0.0, %v2671
    %v2673 = vpop.f32.mrb[0].mxu0
    %2674 = vmatprep.mubr.f32.mxu0 0.0
    %2675 = vmatmul.mubr.f32.gmra.mrb[0].mxu0 %v2324
    %v2676 = vpop.f32.mrb[0].mxu0
    %v2677 = vadd.f32 0.0, %v2676
    %v2678 = vpop.f32.mrb[0].mxu0
    %2679 = vmatprep.mubr.f32.mxu0 0.0
    %2680 = vmatmul.mubr.f32.gmra.mrb[0].mxu0 %v2327
    %v2681 = vpop.f32.mrb[0].mxu0
    %v2682 = vadd.f32 0.0, %v2681
    %v2683 = vpop.f32.mrb[0].mxu0
    %2684 = vdwg.mxu0
    %v2685 = vmul.f32 %v2667, %v159
    %v2686 = vmul.f32 %v2672, %v160
    %v2687 = vmul.f32 %v2677, %v161
    %v2688 = vmul.f32 %v2682, %v162
    %v2689 = vadd.f32 %v2596, %v2685
    %v2690 = vadd.f32 %v2597, %v2686
    %v2691 = vadd.f32 %v2598, %v2687
    %v2692 = vadd.f32 %v2599, %v2688
    %2693 = vmatprep.subr.mxu0 0.0
    %2694 = vmatpush1.msra.mxu0 %v2292
    %2695 = vmatprep.subr.mxu0 0.0
    %2696 = vmatpush1.msra.mxu0 %v2293
    %2697 = vmatprep.subr.mxu0 0.0
    %2698 = vmatpush1.msra.mxu0 0.0
    %2699 = vmatprep.subr.mxu0 0.0
    %2700 = vmatpush1.msra.mxu0 0.0
    %2701 = vmatprep.subr.mxu0 0.0
    %2702 = vmatpush1.msra.mxu0 0.0
    %2703 = vmatprep.subr.mxu0 0.0
    %2704 = vmatpush1.msra.mxu0 0.0
    %2705 = vmatprep.subr.mxu0 0.0
    %2706 = vmatpush1.msra.mxu0 0.0
    %2707 = vmatprep.subr.mxu0 0.0
    %2708 = vmatpush1.msra.mxu0 0.0
    %2709 = vmatprep.subr.mxu0 0.0
    %2710 = vmatpush1.msra.mxu0 0.0
    %2711 = vmatprep.subr.mxu0 0.0
    %2712 = vmatpush1.msra.mxu0 0.0
    %2713 = vmatprep.subr.mxu0 0.0
    %2714 = vmatpush1.msra.mxu0 0.0
    %2715 = vmatprep.subr.mxu0 0.0
    %2716 = vmatpush1.msra.mxu0 0.0
    %2717 = vmatprep.subr.mxu0 0.0
    %2718 = vmatpush1.msra.mxu0 0.0
    %2719 = vmatprep.subr.mxu0 0.0
    %2720 = vmatpush1.msra.mxu0 0.0
    %2721 = vmatprep.subr.mxu0 0.0
    %2722 = vmatpush1.msra.mxu0 0.0
    %2723 = vmatprep.subr.mxu0 0.0
    %2724 = vmatpush1.msra.mxu0 0.0
    %2725 = vmatprep.subr.mxu0 0.0
    %2726 = vmatpush1.msra.mxu0 0.0
    %2727 = vmatprep.subr.mxu0 0.0
    %2728 = vmatpush1.msra.mxu0 0.0
    %2729 = vmatprep.subr.mxu0 0.0
    %2730 = vmatpush1.msra.mxu0 0.0
    %2731 = vmatprep.subr.mxu0 0.0
    %2732 = vmatpush1.msra.mxu0 0.0
    %2733 = vmatprep.subr.mxu0 0.0
    %2734 = vmatpush1.msra.mxu0 0.0
    %2735 = vmatprep.subr.mxu0 0.0
    %2736 = vmatpush1.msra.mxu0 0.0
    %2737 = vmatprep.subr.mxu0 0.0
    %2738 = vmatpush1.msra.mxu0 0.0
    %2739 = vmatprep.subr.mxu0 0.0
    %2740 = vmatpush1.msra.mxu0 0.0
    %2741 = vmatprep.subr.mxu0 0.0
    %2742 = vmatpush1.msra.mxu0 0.0
    %2743 = vmatprep.subr.mxu0 0.0
    %2744 = vmatpush1.msra.mxu0 0.0
    %2745 = vmatprep.subr.mxu0 0.0
    %2746 = vmatpush1.msra.mxu0 0.0
    %2747 = vmatprep.subr.mxu0 0.0
    %2748 = vmatpush1.msra.mxu0 0.0
    %2749 = vmatprep.subr.mxu0 0.0
    %2750 = vmatpush1.msra.mxu0 0.0
    %2751 = vmatprep.subr.mxu0 0.0
    %2752 = vmatpush1.msra.mxu0 0.0
    %2753 = vmatprep.subr.mxu0 0.0
    %2754 = vmatpush1.msra.mxu0 0.0
    %2755 = vmatprep.subr.mxu0 0.0
    %2756 = vmatpush1.msra.mxu0 0.0
    %2757 = vmatprep.mubr.f32.mxu0 0.0
    %2758 = vmatmul.mubr.f32.gmra.mrb[0].mxu0 %v2318
    %v2759 = vpop.f32.mrb[0].mxu0
    %v2760 = vadd.f32 0.0, %v2759
    %v2761 = vpop.f32.mrb[0].mxu0
    %2762 = vmatprep.mubr.f32.mxu0 0.0
    %2763 = vmatmul.mubr.f32.gmra.mrb[0].mxu0 %v2321
    %v2764 = vpop.f32.mrb[0].mxu0
    %v2765 = vadd.f32 0.0, %v2764
    %v2766 = vpop.f32.mrb[0].mxu0
    %2767 = vmatprep.mubr.f32.mxu0 0.0
    %2768 = vmatmul.mubr.f32.gmra.mrb[0].mxu0 %v2324
    %v2769 = vpop.f32.mrb[0].mxu0
    %v2770 = vadd.f32 0.0, %v2769
    %v2771 = vpop.f32.mrb[0].mxu0
    %2772 = vmatprep.mubr.f32.mxu0 0.0
    %2773 = vmatmul.mubr.f32.gmra.mrb[0].mxu0 %v2327
    %v2774 = vpop.f32.mrb[0].mxu0
    %v2775 = vadd.f32 0.0, %v2774
    %v2776 = vpop.f32.mrb[0].mxu0
    %2777 = vdwg.mxu0
    %v2779 = vsel %vm654, %v2507, 0
    %v2782 = vsel %vm654, %v2508, 0
    %v2785 = vsel %vm654, %v2509, 0
    %v2788 = vsel %vm654, %v2510, 0
    %v2791 = vsel %vm654, %v2689, 0
    %v2794 = vsel %vm654, %v2690, 0
    %v2797 = vsel %vm654, %v2691, 0
    %v2800 = vsel %vm654, %v2692, 0
    %2802 = vmatprep.subr.mxu0 0.0
    %2803 = vmatpush1.xpose.msra.mxu0 %v2791
    %2804 = vmatprep.subr.mxu0 0.0
    %2805 = vmatpush1.xpose.msra.mxu0 %v2794
    %2806 = vmatprep.subr.mxu0 0.0
    %2807 = vmatpush1.xpose.msra.mxu0 %v2797
    %2808 = vmatprep.subr.mxu0 0.0
    %2809 = vmatpush1.xpose.msra.mxu0 %v2800
    %2810 = vmatprep.subr.mxu0 0.0
    %2811 = vmatpush1.xpose.msra.mxu0 0.0
    %2812 = vmatprep.subr.mxu0 0.0
    %2813 = vmatpush1.xpose.msra.mxu0 0.0
    %2814 = vmatprep.subr.mxu0 0.0
    %2815 = vmatpush1.xpose.msra.mxu0 0.0
    %2816 = vmatprep.subr.mxu0 0.0
    %2817 = vmatpush1.xpose.msra.mxu0 0.0
    %2818 = vmatprep.subr.mxu0 0.0
    %2819 = vmatpush1.xpose.msra.mxu0 0.0
    %2820 = vmatprep.subr.mxu0 0.0
    %2821 = vmatpush1.xpose.msra.mxu0 0.0
    %2822 = vmatprep.subr.mxu0 0.0
    %2823 = vmatpush1.xpose.msra.mxu0 0.0
    %2824 = vmatprep.subr.mxu0 0.0
    %2825 = vmatpush1.xpose.msra.mxu0 0.0
    %2826 = vmatprep.subr.mxu0 0.0
    %2827 = vmatpush1.xpose.msra.mxu0 0.0
    %2828 = vmatprep.subr.mxu0 0.0
    %2829 = vmatpush1.xpose.msra.mxu0 0.0
    %2830 = vmatprep.subr.mxu0 0.0
    %2831 = vmatpush1.xpose.msra.mxu0 0.0
    %2832 = vmatprep.subr.mxu0 0.0
    %2833 = vmatpush1.xpose.msra.mxu0 0.0
    %2834 = vmatprep.subr.mxu0 0.0
    %2835 = vmatpush1.xpose.msra.mxu0 0.0
    %2836 = vmatprep.subr.mxu0 0.0
    %2837 = vmatpush1.xpose.msra.mxu0 0.0
    %2838 = vmatprep.subr.mxu0 0.0
    %2839 = vmatpush1.xpose.msra.mxu0 0.0
    %2840 = vmatprep.subr.mxu0 0.0
    %2841 = vmatpush1.xpose.msra.mxu0 0.0
    %2842 = vmatprep.subr.mxu0 0.0
    %2843 = vmatpush1.xpose.msra.mxu0 0.0
    %2844 = vmatprep.subr.mxu0 0.0
    %2845 = vmatpush1.xpose.msra.mxu0 0.0
    %2846 = vmatprep.subr.mxu0 0.0
    %2847 = vmatpush1.xpose.msra.mxu0 0.0
    %2848 = vmatprep.subr.mxu0 0.0
    %2849 = vmatpush1.xpose.msra.mxu0 0.0
    %2850 = vmatprep.subr.mxu0 0.0
    %2851 = vmatpush1.xpose.msra.mxu0 0.0
    %2852 = vmatprep.subr.mxu0 0.0
    %2853 = vmatpush1.xpose.msra.mxu0 0.0
    %2854 = vmatprep.subr.mxu0 0.0
    %2855 = vmatpush1.xpose.msra.mxu0 0.0
    %2856 = vmatprep.subr.mxu0 0.0
    %2857 = vmatpush1.xpose.msra.mxu0 0.0
    %2858 = vmatprep.subr.mxu0 0.0
    %2859 = vmatpush1.xpose.msra.mxu0 0.0
    %2860 = vmatprep.subr.mxu0 0.0
    %2861 = vmatpush1.xpose.msra.mxu0 0.0
    %2862 = vmatprep.subr.mxu0 0.0
    %2863 = vmatpush1.xpose.msra.mxu0 0.0
    %2864 = vmatprep.subr.mxu0 0.0
    %2865 = vmatpush1.xpose.msra.mxu0 0.0
    %2866 = vmatprep.mubr.f32.mxu0 0.0
    %2867 = vmatmul.mubr.f32.gmra.mrb[0].mxu0 %v2779
    %v2868 = vpop.f32.mrb[0].mxu0
    %v2869 = vadd.f32 %v163, %v2868
    %v2870 = vpop.f32.mrb[0].mxu0
    %2871 = vmatprep.mubr.f32.mxu0 0.0
    %2872 = vmatmul.mubr.f32.gmra.mrb[0].mxu0 %v2782
    %v2873 = vpop.f32.mrb[0].mxu0
    %v2874 = vadd.f32 %v164, %v2873
    %v2875 = vpop.f32.mrb[0].mxu0
    %2876 = vmatprep.mubr.f32.mxu0 0.0
    %2877 = vmatmul.mubr.f32.gmra.mrb[0].mxu0 %v2785
    %v2878 = vpop.f32.mrb[0].mxu0
    %v2879 = vadd.f32 %v165, %v2878
    %v2880 = vpop.f32.mrb[0].mxu0
    %2881 = vmatprep.mubr.f32.mxu0 0.0
    %2882 = vmatmul.mubr.f32.gmra.mrb[0].mxu0 %v2788
    %v2883 = vpop.f32.mrb[0].mxu0
    %v2884 = vadd.f32 %v166, %v2883
    %v2885 = vpop.f32.mrb[0].mxu0
    %2886 = vdwg.mxu0
    %v2887 = vsel %vm764, %v2869, -inf
    %2888 = vmax.xlane.f32.xlu0 %v2887
    %v2889 = vpop.xlane.xlu0 %2888
    %v2890 = vsel %vm764, %v2874, -inf
    %2891 = vmax.xlane.f32.xlu0 %v2890
    %v2892 = vpop.xlane.xlu0 %2891
    %v2893 = vsel %vm764, %v2879, -inf
    %2894 = vmax.xlane.f32.xlu0 %v2893
    %v2895 = vpop.xlane.xlu0 %2894
    %v2896 = vsel %vm764, %v2884, -inf
    %2897 = vmax.xlane.f32.xlu0 %v2896
    %v2898 = vpop.xlane.xlu0 %2897
    %v2899 = vsub.f32 %v2869, %v2889
    %v2900 = vsub.f32 %v2874, %v2892
    %v2901 = vsub.f32 %v2879, %v2895
    %v2902 = vsub.f32 %v2884, %v2898
    %v2903 = vmul.f32 %v2899, 1.442695
    %v2904 = vpow.pop %v2903
    %v2905 = vmul.f32 %v2900, 1.442695
    %v2906 = vpow.pop %v2905
    %v2907 = vmul.f32 %v2901, 1.442695
    %v2908 = vpow.pop %v2907
    %v2909 = vmul.f32 %v2902, 1.442695
    %v2910 = vpow.pop %v2909
    %v2911 = vsel %vm764, %v2904, 0.0
    %2912 = vadd.xlane.f32.xlu0 %v2911
    %v2913 = vpop.xlane.xlu0 %2912
    %v2914 = vsel %vm764, %v2906, 0.0
    %2915 = vadd.xlane.f32.xlu0 %v2914
    %v2916 = vpop.xlane.xlu0 %2915
    %v2917 = vsel %vm764, %v2908, 0.0
    %2918 = vadd.xlane.f32.xlu0 %v2917
    %v2919 = vpop.xlane.xlu0 %2918
    %v2920 = vsel %vm764, %v2910, 0.0
    %2921 = vadd.xlane.f32.xlu0 %v2920
    %v2922 = vpop.xlane.xlu0 %2921
    %v2923 = vrcp.pop %v2913
    %v2924 = vrcp.pop %v2916
    %v2925 = vrcp.pop %v2919
    %v2926 = vrcp.pop %v2922
    %v2927 = vmul.f32 %v2904, %v2923
    %v2928 = vmul.f32 %v2906, %v2924
    %v2929 = vmul.f32 %v2908, %v2925
    %v2930 = vmul.f32 %v2910, %v2926
    %v2932 = vsel %vm764, %v2927, 0
    %v2935 = vsel %vm764, %v2928, 0
    %v2938 = vsel %vm764, %v2929, 0
    %v2941 = vsel %vm764, %v2930, 0
    %2943 = vmatprep.subr.mxu0 0.0
    %2944 = vmatpush1.msra.mxu0 %v2760
    %2945 = vmatprep.subr.mxu0 0.0
    %2946 = vmatpush1.msra.mxu0 %v2765
    %2947 = vmatprep.subr.mxu0 0.0
    %2948 = vmatpush1.msra.mxu0 %v2770
    %2949 = vmatprep.subr.mxu0 0.0
    %2950 = vmatpush1.msra.mxu0 %v2775
    %2951 = vmatprep.subr.mxu0 0.0
    %2952 = vmatpush1.msra.mxu0 0.0
    %2953 = vmatprep.subr.mxu0 0.0
    %2954 = vmatpush1.msra.mxu0 0.0
    %2955 = vmatprep.subr.mxu0 0.0
    %2956 = vmatpush1.msra.mxu0 0.0
    %2957 = vmatprep.subr.mxu0 0.0
    %2958 = vmatpush1.msra.mxu0 0.0
    %2959 = vmatprep.subr.mxu0 0.0
    %2960 = vmatpush1.msra.mxu0 0.0
    %2961 = vmatprep.subr.mxu0 0.0
    %2962 = vmatpush1.msra.mxu0 0.0
    %2963 = vmatprep.subr.mxu0 0.0
    %2964 = vmatpush1.msra.mxu0 0.0
    %2965 = vmatprep.subr.mxu0 0.0
    %2966 = vmatpush1.msra.mxu0 0.0
    %2967 = vmatprep.subr.mxu0 0.0
    %2968 = vmatpush1.msra.mxu0 0.0
    %2969 = vmatprep.subr.mxu0 0.0
    %2970 = vmatpush1.msra.mxu0 0.0
    %2971 = vmatprep.subr.mxu0 0.0
    %2972 = vmatpush1.msra.mxu0 0.0
    %2973 = vmatprep.subr.mxu0 0.0
    %2974 = vmatpush1.msra.mxu0 0.0
    %2975 = vmatprep.subr.mxu0 0.0
    %2976 = vmatpush1.msra.mxu0 0.0
    %2977 = vmatprep.subr.mxu0 0.0
    %2978 = vmatpush1.msra.mxu0 0.0
    %2979 = vmatprep.subr.mxu0 0.0
    %2980 = vmatpush1.msra.mxu0 0.0
    %2981 = vmatprep.subr.mxu0 0.0
    %2982 = vmatpush1.msra.mxu0 0.0
    %2983 = vmatprep.subr.mxu0 0.0
    %2984 = vmatpush1.msra.mxu0 0.0
    %2985 = vmatprep.subr.mxu0 0.0
    %2986 = vmatpush1.msra.mxu0 0.0
    %2987 = vmatprep.subr.mxu0 0.0
    %2988 = vmatpush1.msra.mxu0 0.0
    %2989 = vmatprep.subr.mxu0 0.0
    %2990 = vmatpush1.msra.mxu0 0.0
    %2991 = vmatprep.subr.mxu0 0.0
    %2992 = vmatpush1.msra.mxu0 0.0
    %2993 = vmatprep.subr.mxu0 0.0
    %2994 = vmatpush1.msra.mxu0 0.0
    %2995 = vmatprep.subr.mxu0 0.0
    %2996 = vmatpush1.msra.mxu0 0.0
    %2997 = vmatprep.subr.mxu0 0.0
    %2998 = vmatpush1.msra.mxu0 0.0
    %2999 = vmatprep.subr.mxu0 0.0
    %3000 = vmatpush1.msra.mxu0 0.0
    %3001 = vmatprep.subr.mxu0 0.0
    %3002 = vmatpush1.msra.mxu0 0.0
    %3003 = vmatprep.subr.mxu0 0.0
    %3004 = vmatpush1.msra.mxu0 0.0
    %3005 = vmatprep.subr.mxu0 0.0
    %3006 = vmatpush1.msra.mxu0 0.0
    %3007 = vmatprep.mubr.f32.mxu0 0.0
    %3008 = vmatmul.mubr.f32.gmra.mrb[0].mxu0 %v2932
    %v3009 = vpop.f32.mrb[0].mxu0
    %v3010 = vadd.f32 0.0, %v3009
    %v3011 = vpop.f32.mrb[0].mxu0
    %3012 = vmatprep.mubr.f32.mxu0 0.0
    %3013 = vmatmul.mubr.f32.gmra.mrb[0].mxu0 %v2935
    %v3014 = vpop.f32.mrb[0].mxu0
    %v3015 = vadd.f32 0.0, %v3014
    %v3016 = vpop.f32.mrb[0].mxu0
    %3017 = vmatprep.mubr.f32.mxu0 0.0
    %3018 = vmatmul.mubr.f32.gmra.mrb[0].mxu0 %v2938
    %v3019 = vpop.f32.mrb[0].mxu0
    %v3020 = vadd.f32 0.0, %v3019
    %v3021 = vpop.f32.mrb[0].mxu0
    %3022 = vmatprep.mubr.f32.mxu0 0.0
    %3023 = vmatmul.mubr.f32.gmra.mrb[0].mxu0 %v2941
    %v3024 = vpop.f32.mrb[0].mxu0
    %v3025 = vadd.f32 0.0, %v3024
    %v3026 = vpop.f32.mrb[0].mxu0
    %3027 = vdwg.mxu0
    %3028 = vrot.lane.b32.xlu0 %v2507, 120
    %v3029 = vpop.permute.xlu0 %3028
    %3030 = vrot.lane.b32.xlu0 %v2508, 120
    %v3031 = vpop.permute.xlu0 %3030
    %3032 = vrot.lane.b32.xlu0 %v2509, 120
    %v3033 = vpop.permute.xlu0 %3032
    %3034 = vrot.lane.b32.xlu0 %v2510, 120
    %v3035 = vpop.permute.xlu0 %3034
    %3036 = vrot.lane.b32.xlu0 %v2689, 120
    %v3037 = vpop.permute.xlu0 %3036
    %3038 = vrot.lane.b32.xlu0 %v2690, 120
    %v3039 = vpop.permute.xlu0 %3038
    %3040 = vrot.lane.b32.xlu0 %v2691, 120
    %v3041 = vpop.permute.xlu0 %3040
    %3042 = vrot.lane.b32.xlu0 %v2692, 120
    %v3043 = vpop.permute.xlu0 %3042
    %v3044 = vsel %vm654, %v3029, 0
    %v3046 = vsel %vm654, %v3031, 0
    %v3048 = vsel %vm654, %v3033, 0
    %v3050 = vsel %vm654, %v3035, 0
    %v3052 = vsel %vm654, %v3037, 0
    %v3054 = vsel %vm654, %v3039, 0
    %v3056 = vsel %vm654, %v3041, 0
    %v3058 = vsel %vm654, %v3043, 0
    %3060 = vmatprep.subr.mxu0 0.0
    %3061 = vmatpush1.xpose.msra.mxu0 %v3052
    %3062 = vmatprep.subr.mxu0 0.0
    %3063 = vmatpush1.xpose.msra.mxu0 %v3054
    %3064 = vmatprep.subr.mxu0 0.0
    %3065 = vmatpush1.xpose.msra.mxu0 %v3056
    %3066 = vmatprep.subr.mxu0 0.0
    %3067 = vmatpush1.xpose.msra.mxu0 %v3058
    %3068 = vmatprep.subr.mxu0 0.0
    %3069 = vmatpush1.xpose.msra.mxu0 0.0
    %3070 = vmatprep.subr.mxu0 0.0
    %3071 = vmatpush1.xpose.msra.mxu0 0.0
    %3072 = vmatprep.subr.mxu0 0.0
    %3073 = vmatpush1.xpose.msra.mxu0 0.0
    %3074 = vmatprep.subr.mxu0 0.0
    %3075 = vmatpush1.xpose.msra.mxu0 0.0
    %3076 = vmatprep.subr.mxu0 0.0
    %3077 = vmatpush1.xpose.msra.mxu0 0.0
    %3078 = vmatprep.subr.mxu0 0.0
    %3079 = vmatpush1.xpose.msra.mxu0 0.0
    %3080 = vmatprep.subr.mxu0 0.0
    %3081 = vmatpush1.xpose.msra.mxu0 0.0
    %3082 = vmatprep.subr.mxu0 0.0
    %3083 = vmatpush1.xpose.msra.mxu0 0.0
    %3084 = vmatprep.subr.mxu0 0.0
    %3085 = vmatpush1.xpose.msra.mxu0 0.0
    %3086 = vmatprep.subr.mxu0 0.0
    %3087 = vmatpush1.xpose.msra.mxu0 0.0
    %3088 = vmatprep.subr.mxu0 0.0
    %3089 = vmatpush1.xpose.msra.mxu0 0.0
    %3090 = vmatprep.subr.mxu0 0.0
    %3091 = vmatpush1.xpose.msra.mxu0 0.0
    %3092 = vmatprep.subr.mxu0 0.0
    %3093 = vmatpush1.xpose.msra.mxu0 0.0
    %3094 = vmatprep.subr.mxu0 0.0
    %3095 = vmatpush1.xpose.msra.mxu0 0.0
    %3096 = vmatprep.subr.mxu0 0.0
    %3097 = vmatpush1.xpose.msra.mxu0 0.0
    %3098 = vmatprep.subr.mxu0 0.0
    %3099 = vmatpush1.xpose.msra.mxu0 0.0
    %3100 = vmatprep.subr.mxu0 0.0
    %3101 = vmatpush1.xpose.msra.mxu0 0.0
    %3102 = vmatprep.subr.mxu0 0.0
    %3103 = vmatpush1.xpose.msra.mxu0 0.0
    %3104 = vmatprep.subr.mxu0 0.0
    %3105 = vmatpush1.xpose.msra.mxu0 0.0
    %3106 = vmatprep.subr.mxu0 0.0
    %3107 = vmatpush1.xpose.msra.mxu0 0.0
    %3108 = vmatprep.subr.mxu0 0.0
    %3109 = vmatpush1.xpose.msra.mxu0 0.0
    %3110 = vmatprep.subr.mxu0 0.0
    %3111 = vmatpush1.xpose.msra.mxu0 0.0
    %3112 = vmatprep.subr.mxu0 0.0
    %3113 = vmatpush1.xpose.msra.mxu0 0.0
    %3114 = vmatprep.subr.mxu0 0.0
    %3115 = vmatpush1.xpose.msra.mxu0 0.0
    %3116 = vmatprep.subr.mxu0 0.0
    %3117 = vmatpush1.xpose.msra.mxu0 0.0
    %3118 = vmatprep.subr.mxu0 0.0
    %3119 = vmatpush1.xpose.msra.mxu0 0.0
    %3120 = vmatprep.subr.mxu0 0.0
    %3121 = vmatpush1.xpose.msra.mxu0 0.0
    %3122 = vmatprep.subr.mxu0 0.0
    %3123 = vmatpush1.xpose.msra.mxu0 0.0
    %3124 = vmatprep.mubr.f32.mxu0 0.0
    %3125 = vmatmul.mubr.f32.gmra.mrb[0].mxu0 %v3044
    %v3126 = vpop.f32.mrb[0].mxu0
    %v3127 = vadd.f32 %v163, %v3126
    %v3128 = vpop.f32.mrb[0].mxu0
    %3129 = vmatprep.mubr.f32.mxu0 0.0
    %3130 = vmatmul.mubr.f32.gmra.mrb[0].mxu0 %v3046
    %v3131 = vpop.f32.mrb[0].mxu0
    %v3132 = vadd.f32 %v164, %v3131
    %v3133 = vpop.f32.mrb[0].mxu0
    %3134 = vmatprep.mubr.f32.mxu0 0.0
    %3135 = vmatmul.mubr.f32.gmra.mrb[0].mxu0 %v3048
    %v3136 = vpop.f32.mrb[0].mxu0
    %v3137 = vadd.f32 %v165, %v3136
    %v3138 = vpop.f32.mrb[0].mxu0
    %3139 = vmatprep.mubr.f32.mxu0 0.0
    %3140 = vmatmul.mubr.f32.gmra.mrb[0].mxu0 %v3050
    %v3141 = vpop.f32.mrb[0].mxu0
    %v3142 = vadd.f32 %v166, %v3141
    %v3143 = vpop.f32.mrb[0].mxu0
    %3144 = vdwg.mxu0
    %v3145 = vsel %vm764, %v3127, -inf
    %3146 = vmax.xlane.f32.xlu0 %v3145
    %v3147 = vpop.xlane.xlu0 %3146
    %v3148 = vsel %vm764, %v3132, -inf
    %3149 = vmax.xlane.f32.xlu0 %v3148
    %v3150 = vpop.xlane.xlu0 %3149
    %v3151 = vsel %vm764, %v3137, -inf
    %3152 = vmax.xlane.f32.xlu0 %v3151
    %v3153 = vpop.xlane.xlu0 %3152
    %v3154 = vsel %vm764, %v3142, -inf
    %3155 = vmax.xlane.f32.xlu0 %v3154
    %v3156 = vpop.xlane.xlu0 %3155
    %v3157 = vsub.f32 %v3127, %v3147
    %v3158 = vsub.f32 %v3132, %v3150
    %v3159 = vsub.f32 %v3137, %v3153
    %v3160 = vsub.f32 %v3142, %v3156
    %v3161 = vmul.f32 %v3157, 1.442695
    %v3162 = vpow.pop %v3161
    %v3163 = vmul.f32 %v3158, 1.442695
    %v3164 = vpow.pop %v3163
    %v3165 = vmul.f32 %v3159, 1.442695
    %v3166 = vpow.pop %v3165
    %v3167 = vmul.f32 %v3160, 1.442695
    %v3168 = vpow.pop %v3167
    %v3169 = vsel %vm764, %v3162, 0.0
    %3170 = vadd.xlane.f32.xlu0 %v3169
    %v3171 = vpop.xlane.xlu0 %3170
    %v3172 = vsel %vm764, %v3164, 0.0
    %3173 = vadd.xlane.f32.xlu0 %v3172
    %v3174 = vpop.xlane.xlu0 %3173
    %v3175 = vsel %vm764, %v3166, 0.0
    %3176 = vadd.xlane.f32.xlu0 %v3175
    %v3177 = vpop.xlane.xlu0 %3176
    %v3178 = vsel %vm764, %v3168, 0.0
    %3179 = vadd.xlane.f32.xlu0 %v3178
    %v3180 = vpop.xlane.xlu0 %3179
    %v3181 = vrcp.pop %v3171
    %v3182 = vrcp.pop %v3174
    %v3183 = vrcp.pop %v3177
    %v3184 = vrcp.pop %v3180
    %v3185 = vmul.f32 %v3162, %v3181
    %v3186 = vmul.f32 %v3164, %v3182
    %v3187 = vmul.f32 %v3166, %v3183
    %v3188 = vmul.f32 %v3168, %v3184
    %3193 = vrot.lane.b32.xlu0 %v2760, 120
    %v3194 = vpop.permute.xlu0 %3193
    %3195 = vrot.lane.b32.xlu0 %v2765, 120
    %v3196 = vpop.permute.xlu0 %3195
    %3197 = vrot.lane.b32.xlu0 %v2770, 120
    %v3198 = vpop.permute.xlu0 %3197
    %3199 = vrot.lane.b32.xlu0 %v2775, 120
    %v3200 = vpop.permute.xlu0 %3199
    %v3206 = vsel %vm764, %v3185, 0
    %v3209 = vsel %vm764, %v3186, 0
    %v3212 = vsel %vm764, %v3187, 0
    %v3215 = vsel %vm764, %v3188, 0
    %3217 = vmatprep.subr.mxu0 0.0
    %3218 = vmatpush1.msra.mxu0 %v3194
    %3219 = vmatprep.subr.mxu0 0.0
    %3220 = vmatpush1.msra.mxu0 %v3196
    %3221 = vmatprep.subr.mxu0 0.0
    %3222 = vmatpush1.msra.mxu0 %v3198
    %3223 = vmatprep.subr.mxu0 0.0
    %3224 = vmatpush1.msra.mxu0 %v3200
    %3225 = vmatprep.subr.mxu0 0.0
    %3226 = vmatpush1.msra.mxu0 0.0
    %3227 = vmatprep.subr.mxu0 0.0
    %3228 = vmatpush1.msra.mxu0 0.0
    %3229 = vmatprep.subr.mxu0 0.0
    %3230 = vmatpush1.msra.mxu0 0.0
    %3231 = vmatprep.subr.mxu0 0.0
    %3232 = vmatpush1.msra.mxu0 0.0
    %3233 = vmatprep.subr.mxu0 0.0
    %3234 = vmatpush1.msra.mxu0 0.0
    %3235 = vmatprep.subr.mxu0 0.0
    %3236 = vmatpush1.msra.mxu0 0.0
    %3237 = vmatprep.subr.mxu0 0.0
    %3238 = vmatpush1.msra.mxu0 0.0
    %3239 = vmatprep.subr.mxu0 0.0
    %3240 = vmatpush1.msra.mxu0 0.0
    %3241 = vmatprep.subr.mxu0 0.0
    %3242 = vmatpush1.msra.mxu0 0.0
    %3243 = vmatprep.subr.mxu0 0.0
    %3244 = vmatpush1.msra.mxu0 0.0
    %3245 = vmatprep.subr.mxu0 0.0
    %3246 = vmatpush1.msra.mxu0 0.0
    %3247 = vmatprep.subr.mxu0 0.0
    %3248 = vmatpush1.msra.mxu0 0.0
    %3249 = vmatprep.subr.mxu0 0.0
    %3250 = vmatpush1.msra.mxu0 0.0
    %3251 = vmatprep.subr.mxu0 0.0
    %3252 = vmatpush1.msra.mxu0 0.0
    %3253 = vmatprep.subr.mxu0 0.0
    %3254 = vmatpush1.msra.mxu0 0.0
    %3255 = vmatprep.subr.mxu0 0.0
    %3256 = vmatpush1.msra.mxu0 0.0
    %3257 = vmatprep.subr.mxu0 0.0
    %3258 = vmatpush1.msra.mxu0 0.0
    %3259 = vmatprep.subr.mxu0 0.0
    %3260 = vmatpush1.msra.mxu0 0.0
    %3261 = vmatprep.subr.mxu0 0.0
    %3262 = vmatpush1.msra.mxu0 0.0
    %3263 = vmatprep.subr.mxu0 0.0
    %3264 = vmatpush1.msra.mxu0 0.0
    %3265 = vmatprep.subr.mxu0 0.0
    %3266 = vmatpush1.msra.mxu0 0.0
    %3267 = vmatprep.subr.mxu0 0.0
    %3268 = vmatpush1.msra.mxu0 0.0
    %3269 = vmatprep.subr.mxu0 0.0
    %3270 = vmatpush1.msra.mxu0 0.0
    %3271 = vmatprep.subr.mxu0 0.0
    %3272 = vmatpush1.msra.mxu0 0.0
    %3273 = vmatprep.subr.mxu0 0.0
    %3274 = vmatpush1.msra.mxu0 0.0
    %3275 = vmatprep.subr.mxu0 0.0
    %3276 = vmatpush1.msra.mxu0 0.0
    %3277 = vmatprep.subr.mxu0 0.0
    %3278 = vmatpush1.msra.mxu0 0.0
    %3279 = vmatprep.subr.mxu0 0.0
    %3280 = vmatpush1.msra.mxu0 0.0
    %3281 = vmatprep.mubr.f32.mxu0 0.0
    %3282 = vmatmul.mubr.f32.gmra.mrb[0].mxu0 %v3206
    %v3283 = vpop.f32.mrb[0].mxu0
    %v3284 = vadd.f32 0.0, %v3283
    %v3285 = vpop.f32.mrb[0].mxu0
    %3286 = vmatprep.mubr.f32.mxu0 0.0
    %3287 = vmatmul.mubr.f32.gmra.mrb[0].mxu0 %v3209
    %v3288 = vpop.f32.mrb[0].mxu0
    %v3289 = vadd.f32 0.0, %v3288
    %v3290 = vpop.f32.mrb[0].mxu0
    %3291 = vmatprep.mubr.f32.mxu0 0.0
    %3292 = vmatmul.mubr.f32.gmra.mrb[0].mxu0 %v3212
    %v3293 = vpop.f32.mrb[0].mxu0
    %v3294 = vadd.f32 0.0, %v3293
    %v3295 = vpop.f32.mrb[0].mxu0
    %3296 = vmatprep.mubr.f32.mxu0 0.0
    %3297 = vmatmul.mubr.f32.gmra.mrb[0].mxu0 %v3215
    %v3298 = vpop.f32.mrb[0].mxu0
    %v3299 = vadd.f32 0.0, %v3298
    %v3300 = vpop.f32.mrb[0].mxu0
    %3301 = vdwg.mxu0
    %3302 = vrot.lane.b32.xlu0 %v2507, 112
    %v3303 = vpop.permute.xlu0 %3302
    %3304 = vrot.lane.b32.xlu0 %v2508, 112
    %v3305 = vpop.permute.xlu0 %3304
    %3306 = vrot.lane.b32.xlu0 %v2509, 112
    %v3307 = vpop.permute.xlu0 %3306
    %3308 = vrot.lane.b32.xlu0 %v2510, 112
    %v3309 = vpop.permute.xlu0 %3308
    %3310 = vrot.lane.b32.xlu0 %v2689, 112
    %v3311 = vpop.permute.xlu0 %3310
    %3312 = vrot.lane.b32.xlu0 %v2690, 112
    %v3313 = vpop.permute.xlu0 %3312
    %3314 = vrot.lane.b32.xlu0 %v2691, 112
    %v3315 = vpop.permute.xlu0 %3314
    %3316 = vrot.lane.b32.xlu0 %v2692, 112
    %v3317 = vpop.permute.xlu0 %3316
    %v3318 = vsel %vm654, %v3303, 0
    %v3320 = vsel %vm654, %v3305, 0
    %v3322 = vsel %vm654, %v3307, 0
    %v3324 = vsel %vm654, %v3309, 0
    %v3326 = vsel %vm654, %v3311, 0
    %v3328 = vsel %vm654, %v3313, 0
    %v3330 = vsel %vm654, %v3315, 0
    %v3332 = vsel %vm654, %v3317, 0
    %3334 = vmatprep.subr.mxu0 0.0
    %3335 = vmatpush1.xpose.msra.mxu0 %v3326
    %3336 = vmatprep.subr.mxu0 0.0
    %3337 = vmatpush1.xpose.msra.mxu0 %v3328
    %3338 = vmatprep.subr.mxu0 0.0
    %3339 = vmatpush1.xpose.msra.mxu0 %v3330
    %3340 = vmatprep.subr.mxu0 0.0
    %3341 = vmatpush1.xpose.msra.mxu0 %v3332
    %3342 = vmatprep.subr.mxu0 0.0
    %3343 = vmatpush1.xpose.msra.mxu0 0.0
    %3344 = vmatprep.subr.mxu0 0.0
    %3345 = vmatpush1.xpose.msra.mxu0 0.0
    %3346 = vmatprep.subr.mxu0 0.0
    %3347 = vmatpush1.xpose.msra.mxu0 0.0
    %3348 = vmatprep.subr.mxu0 0.0
    %3349 = vmatpush1.xpose.msra.mxu0 0.0
    %3350 = vmatprep.subr.mxu0 0.0
    %3351 = vmatpush1.xpose.msra.mxu0 0.0
    %3352 = vmatprep.subr.mxu0 0.0
    %3353 = vmatpush1.xpose.msra.mxu0 0.0
    %3354 = vmatprep.subr.mxu0 0.0
    %3355 = vmatpush1.xpose.msra.mxu0 0.0
    %3356 = vmatprep.subr.mxu0 0.0
    %3357 = vmatpush1.xpose.msra.mxu0 0.0
    %3358 = vmatprep.subr.mxu0 0.0
    %3359 = vmatpush1.xpose.msra.mxu0 0.0
    %3360 = vmatprep.subr.mxu0 0.0
    %3361 = vmatpush1.xpose.msra.mxu0 0.0
    %3362 = vmatprep.subr.mxu0 0.0
    %3363 = vmatpush1.xpose.msra.mxu0 0.0
    %3364 = vmatprep.subr.mxu0 0.0
    %3365 = vmatpush1.xpose.msra.mxu0 0.0
    %3366 = vmatprep.subr.mxu0 0.0
    %3367 = vmatpush1.xpose.msra.mxu0 0.0
    %3368 = vmatprep.subr.mxu0 0.0
    %3369 = vmatpush1.xpose.msra.mxu0 0.0
    %3370 = vmatprep.subr.mxu0 0.0
    %3371 = vmatpush1.xpose.msra.mxu0 0.0
    %3372 = vmatprep.subr.mxu0 0.0
    %3373 = vmatpush1.xpose.msra.mxu0 0.0
    %3374 = vmatprep.subr.mxu0 0.0
    %3375 = vmatpush1.xpose.msra.mxu0 0.0
    %3376 = vmatprep.subr.mxu0 0.0
    %3377 = vmatpush1.xpose.msra.mxu0 0.0
    %3378 = vmatprep.subr.mxu0 0.0
    %3379 = vmatpush1.xpose.msra.mxu0 0.0
    %3380 = vmatprep.subr.mxu0 0.0
    %3381 = vmatpush1.xpose.msra.mxu0 0.0
    %3382 = vmatprep.subr.mxu0 0.0
    %3383 = vmatpush1.xpose.msra.mxu0 0.0
    %3384 = vmatprep.subr.mxu0 0.0
    %3385 = vmatpush1.xpose.msra.mxu0 0.0
    %3386 = vmatprep.subr.mxu0 0.0
    %3387 = vmatpush1.xpose.msra.mxu0 0.0
    %3388 = vmatprep.subr.mxu0 0.0
    %3389 = vmatpush1.xpose.msra.mxu0 0.0
    %3390 = vmatprep.subr.mxu0 0.0
    %3391 = vmatpush1.xpose.msra.mxu0 0.0
    %3392 = vmatprep.subr.mxu0 0.0
    %3393 = vmatpush1.xpose.msra.mxu0 0.0
    %3394 = vmatprep.subr.mxu0 0.0
    %3395 = vmatpush1.xpose.msra.mxu0 0.0
    %3396 = vmatprep.subr.mxu0 0.0
    %3397 = vmatpush1.xpose.msra.mxu0 0.0
    %3398 = vmatprep.mubr.f32.mxu0 0.0
    %3399 = vmatmul.mubr.f32.gmra.mrb[0].mxu0 %v3318
    %v3400 = vpop.f32.mrb[0].mxu0
    %v3401 = vadd.f32 %v163, %v3400
    %v3402 = vpop.f32.mrb[0].mxu0
    %3403 = vmatprep.mubr.f32.mxu0 0.0
    %3404 = vmatmul.mubr.f32.gmra.mrb[0].mxu0 %v3320
    %v3405 = vpop.f32.mrb[0].mxu0
    %v3406 = vadd.f32 %v164, %v3405
    %v3407 = vpop.f32.mrb[0].mxu0
    %3408 = vmatprep.mubr.f32.mxu0 0.0
    %3409 = vmatmul.mubr.f32.gmra.mrb[0].mxu0 %v3322
    %v3410 = vpop.f32.mrb[0].mxu0
    %v3411 = vadd.f32 %v165, %v3410
    %v3412 = vpop.f32.mrb[0].mxu0
    %3413 = vmatprep.mubr.f32.mxu0 0.0
    %3414 = vmatmul.mubr.f32.gmra.mrb[0].mxu0 %v3324
    %v3415 = vpop.f32.mrb[0].mxu0
    %v3416 = vadd.f32 %v166, %v3415
    %v3417 = vpop.f32.mrb[0].mxu0
    %3418 = vdwg.mxu0
    %v3419 = vsel %vm764, %v3401, -inf
    %3420 = vmax.xlane.f32.xlu0 %v3419
    %v3421 = vpop.xlane.xlu0 %3420
    %v3422 = vsel %vm764, %v3406, -inf
    %3423 = vmax.xlane.f32.xlu0 %v3422
    %v3424 = vpop.xlane.xlu0 %3423
    %v3425 = vsel %vm764, %v3411, -inf
    %3426 = vmax.xlane.f32.xlu0 %v3425
    %v3427 = vpop.xlane.xlu0 %3426
    %v3428 = vsel %vm764, %v3416, -inf
    %3429 = vmax.xlane.f32.xlu0 %v3428
    %v3430 = vpop.xlane.xlu0 %3429
    %v3431 = vsub.f32 %v3401, %v3421
    %v3432 = vsub.f32 %v3406, %v3424
    %v3433 = vsub.f32 %v3411, %v3427
    %v3434 = vsub.f32 %v3416, %v3430
    %v3435 = vmul.f32 %v3431, 1.442695
    %v3436 = vpow.pop %v3435
    %v3437 = vmul.f32 %v3432, 1.442695
    %v3438 = vpow.pop %v3437
    %v3439 = vmul.f32 %v3433, 1.442695
    %v3440 = vpow.pop %v3439
    %v3441 = vmul.f32 %v3434, 1.442695
    %v3442 = vpow.pop %v3441
    %v3443 = vsel %vm764, %v3436, 0.0
    %3444 = vadd.xlane.f32.xlu0 %v3443
    %v3445 = vpop.xlane.xlu0 %3444
    %v3446 = vsel %vm764, %v3438, 0.0
    %3447 = vadd.xlane.f32.xlu0 %v3446
    %v3448 = vpop.xlane.xlu0 %3447
    %v3449 = vsel %vm764, %v3440, 0.0
    %3450 = vadd.xlane.f32.xlu0 %v3449
    %v3451 = vpop.xlane.xlu0 %3450
    %v3452 = vsel %vm764, %v3442, 0.0
    %3453 = vadd.xlane.f32.xlu0 %v3452
    %v3454 = vpop.xlane.xlu0 %3453
    %v3455 = vrcp.pop %v3445
    %v3456 = vrcp.pop %v3448
    %v3457 = vrcp.pop %v3451
    %v3458 = vrcp.pop %v3454
    %v3459 = vmul.f32 %v3436, %v3455
    %v3460 = vmul.f32 %v3438, %v3456
    %v3461 = vmul.f32 %v3440, %v3457
    %v3462 = vmul.f32 %v3442, %v3458
    %3463 = vrot.lane.b32.xlu0 %v2760, 112
    %v3464 = vpop.permute.xlu0 %3463
    %3465 = vrot.lane.b32.xlu0 %v2765, 112
    %v3466 = vpop.permute.xlu0 %3465
    %3467 = vrot.lane.b32.xlu0 %v2770, 112
    %v3468 = vpop.permute.xlu0 %3467
    %3469 = vrot.lane.b32.xlu0 %v2775, 112
    %v3470 = vpop.permute.xlu0 %3469
    %v3476 = vsel %vm764, %v3459, 0
    %v3479 = vsel %vm764, %v3460, 0
    %v3482 = vsel %vm764, %v3461, 0
    %v3485 = vsel %vm764, %v3462, 0
    %3487 = vmatprep.subr.mxu0 0.0
    %3488 = vmatpush1.msra.mxu0 %v3464
    %3489 = vmatprep.subr.mxu0 0.0
    %3490 = vmatpush1.msra.mxu0 %v3466
    %3491 = vmatprep.subr.mxu0 0.0
    %3492 = vmatpush1.msra.mxu0 %v3468
    %3493 = vmatprep.subr.mxu0 0.0
    %3494 = vmatpush1.msra.mxu0 %v3470
    %3495 = vmatprep.subr.mxu0 0.0
    %3496 = vmatpush1.msra.mxu0 0.0
    %3497 = vmatprep.subr.mxu0 0.0
    %3498 = vmatpush1.msra.mxu0 0.0
    %3499 = vmatprep.subr.mxu0 0.0
    %3500 = vmatpush1.msra.mxu0 0.0
    %3501 = vmatprep.subr.mxu0 0.0
    %3502 = vmatpush1.msra.mxu0 0.0
    %3503 = vmatprep.subr.mxu0 0.0
    %3504 = vmatpush1.msra.mxu0 0.0
    %3505 = vmatprep.subr.mxu0 0.0
    %3506 = vmatpush1.msra.mxu0 0.0
    %3507 = vmatprep.subr.mxu0 0.0
    %3508 = vmatpush1.msra.mxu0 0.0
    %3509 = vmatprep.subr.mxu0 0.0
    %3510 = vmatpush1.msra.mxu0 0.0
    %3511 = vmatprep.subr.mxu0 0.0
    %3512 = vmatpush1.msra.mxu0 0.0
    %3513 = vmatprep.subr.mxu0 0.0
    %3514 = vmatpush1.msra.mxu0 0.0
    %3515 = vmatprep.subr.mxu0 0.0
    %3516 = vmatpush1.msra.mxu0 0.0
    %3517 = vmatprep.subr.mxu0 0.0
    %3518 = vmatpush1.msra.mxu0 0.0
    %3519 = vmatprep.subr.mxu0 0.0
    %3520 = vmatpush1.msra.mxu0 0.0
    %3521 = vmatprep.subr.mxu0 0.0
    %3522 = vmatpush1.msra.mxu0 0.0
    %3523 = vmatprep.subr.mxu0 0.0
    %3524 = vmatpush1.msra.mxu0 0.0
    %3525 = vmatprep.subr.mxu0 0.0
    %3526 = vmatpush1.msra.mxu0 0.0
    %3527 = vmatprep.subr.mxu0 0.0
    %3528 = vmatpush1.msra.mxu0 0.0
    %3529 = vmatprep.subr.mxu0 0.0
    %3530 = vmatpush1.msra.mxu0 0.0
    %3531 = vmatprep.subr.mxu0 0.0
    %3532 = vmatpush1.msra.mxu0 0.0
    %3533 = vmatprep.subr.mxu0 0.0
    %3534 = vmatpush1.msra.mxu0 0.0
    %3535 = vmatprep.subr.mxu0 0.0
    %3536 = vmatpush1.msra.mxu0 0.0
    %3537 = vmatprep.subr.mxu0 0.0
    %3538 = vmatpush1.msra.mxu0 0.0
    %3539 = vmatprep.subr.mxu0 0.0
    %3540 = vmatpush1.msra.mxu0 0.0
    %3541 = vmatprep.subr.mxu0 0.0
    %3542 = vmatpush1.msra.mxu0 0.0
    %3543 = vmatprep.subr.mxu0 0.0
    %3544 = vmatpush1.msra.mxu0 0.0
    %3545 = vmatprep.subr.mxu0 0.0
    %3546 = vmatpush1.msra.mxu0 0.0
    %3547 = vmatprep.subr.mxu0 0.0
    %3548 = vmatpush1.msra.mxu0 0.0
    %3549 = vmatprep.subr.mxu0 0.0
    %3550 = vmatpush1.msra.mxu0 0.0
    %3551 = vmatprep.mubr.f32.mxu0 0.0
    %3552 = vmatmul.mubr.f32.gmra.mrb[0].mxu0 %v3476
    %v3553 = vpop.f32.mrb[0].mxu0
    %v3554 = vadd.f32 0.0, %v3553
    %v3555 = vpop.f32.mrb[0].mxu0
    %3556 = vmatprep.mubr.f32.mxu0 0.0
    %3557 = vmatmul.mubr.f32.gmra.mrb[0].mxu0 %v3479
    %v3558 = vpop.f32.mrb[0].mxu0
    %v3559 = vadd.f32 0.0, %v3558
    %v3560 = vpop.f32.mrb[0].mxu0
    %3561 = vmatprep.mubr.f32.mxu0 0.0
    %3562 = vmatmul.mubr.f32.gmra.mrb[0].mxu0 %v3482
    %v3563 = vpop.f32.mrb[0].mxu0
    %v3564 = vadd.f32 0.0, %v3563
    %v3565 = vpop.f32.mrb[0].mxu0
    %3566 = vmatprep.mubr.f32.mxu0 0.0
    %3567 = vmatmul.mubr.f32.gmra.mrb[0].mxu0 %v3485
    %v3568 = vpop.f32.mrb[0].mxu0
    %v3569 = vadd.f32 0.0, %v3568
    %v3570 = vpop.f32.mrb[0].mxu0
    %3571 = vdwg.mxu0
    %3572 = vrot.lane.b32.xlu0 %v2507, 104
    %v3573 = vpop.permute.xlu0 %3572
    %3574 = vrot.lane.b32.xlu0 %v2508, 104
    %v3575 = vpop.permute.xlu0 %3574
    %3576 = vrot.lane.b32.xlu0 %v2509, 104
    %v3577 = vpop.permute.xlu0 %3576
    %3578 = vrot.lane.b32.xlu0 %v2510, 104
    %v3579 = vpop.permute.xlu0 %3578
    %3580 = vrot.lane.b32.xlu0 %v2689, 104
    %v3581 = vpop.permute.xlu0 %3580
    %3582 = vrot.lane.b32.xlu0 %v2690, 104
    %v3583 = vpop.permute.xlu0 %3582
    %3584 = vrot.lane.b32.xlu0 %v2691, 104
    %v3585 = vpop.permute.xlu0 %3584
    %3586 = vrot.lane.b32.xlu0 %v2692, 104
    %v3587 = vpop.permute.xlu0 %3586
    %v3588 = vsel %vm654, %v3573, 0
    %v3590 = vsel %vm654, %v3575, 0
    %v3592 = vsel %vm654, %v3577, 0
    %v3594 = vsel %vm654, %v3579, 0
    %v3596 = vsel %vm654, %v3581, 0
    %v3598 = vsel %vm654, %v3583, 0
    %v3600 = vsel %vm654, %v3585, 0
    %v3602 = vsel %vm654, %v3587, 0
    %3604 = vmatprep.subr.mxu0 0.0
    %3605 = vmatpush1.xpose.msra.mxu0 %v3596
    %3606 = vmatprep.subr.mxu0 0.0
    %3607 = vmatpush1.xpose.msra.mxu0 %v3598
    %3608 = vmatprep.subr.mxu0 0.0
    %3609 = vmatpush1.xpose.msra.mxu0 %v3600
    %3610 = vmatprep.subr.mxu0 0.0
    %3611 = vmatpush1.xpose.msra.mxu0 %v3602
    %3612 = vmatprep.subr.mxu0 0.0
    %3613 = vmatpush1.xpose.msra.mxu0 0.0
    %3614 = vmatprep.subr.mxu0 0.0
    %3615 = vmatpush1.xpose.msra.mxu0 0.0
    %3616 = vmatprep.subr.mxu0 0.0
    %3617 = vmatpush1.xpose.msra.mxu0 0.0
    %3618 = vmatprep.subr.mxu0 0.0
    %3619 = vmatpush1.xpose.msra.mxu0 0.0
    %3620 = vmatprep.subr.mxu0 0.0
    %3621 = vmatpush1.xpose.msra.mxu0 0.0
    %3622 = vmatprep.subr.mxu0 0.0
    %3623 = vmatpush1.xpose.msra.mxu0 0.0
    %3624 = vmatprep.subr.mxu0 0.0
    %3625 = vmatpush1.xpose.msra.mxu0 0.0
    %3626 = vmatprep.subr.mxu0 0.0
    %3627 = vmatpush1.xpose.msra.mxu0 0.0
    %3628 = vmatprep.subr.mxu0 0.0
    %3629 = vmatpush1.xpose.msra.mxu0 0.0
    %3630 = vmatprep.subr.mxu0 0.0
    %3631 = vmatpush1.xpose.msra.mxu0 0.0
    %3632 = vmatprep.subr.mxu0 0.0
    %3633 = vmatpush1.xpose.msra.mxu0 0.0
    %3634 = vmatprep.subr.mxu0 0.0
    %3635 = vmatpush1.xpose.msra.mxu0 0.0
    %3636 = vmatprep.subr.mxu0 0.0
    %3637 = vmatpush1.xpose.msra.mxu0 0.0
    %3638 = vmatprep.subr.mxu0 0.0
    %3639 = vmatpush1.xpose.msra.mxu0 0.0
    %3640 = vmatprep.subr.mxu0 0.0
    %3641 = vmatpush1.xpose.msra.mxu0 0.0
    %3642 = vmatprep.subr.mxu0 0.0
    %3643 = vmatpush1.xpose.msra.mxu0 0.0
    %3644 = vmatprep.subr.mxu0 0.0
    %3645 = vmatpush1.xpose.msra.mxu0 0.0
    %3646 = vmatprep.subr.mxu0 0.0
    %3647 = vmatpush1.xpose.msra.mxu0 0.0
    %3648 = vmatprep.subr.mxu0 0.0
    %3649 = vmatpush1.xpose.msra.mxu0 0.0
    %3650 = vmatprep.subr.mxu0 0.0
    %3651 = vmatpush1.xpose.msra.mxu0 0.0
    %3652 = vmatprep.subr.mxu0 0.0
    %3653 = vmatpush1.xpose.msra.mxu0 0.0
    %3654 = vmatprep.subr.mxu0 0.0
    %3655 = vmatpush1.xpose.msra.mxu0 0.0
    %3656 = vmatprep.subr.mxu0 0.0
    %3657 = vmatpush1.xpose.msra.mxu0 0.0
    %3658 = vmatprep.subr.mxu0 0.0
    %3659 = vmatpush1.xpose.msra.mxu0 0.0
    %3660 = vmatprep.subr.mxu0 0.0
    %3661 = vmatpush1.xpose.msra.mxu0 0.0
    %3662 = vmatprep.subr.mxu0 0.0
    %3663 = vmatpush1.xpose.msra.mxu0 0.0
    %3664 = vmatprep.subr.mxu0 0.0
    %3665 = vmatpush1.xpose.msra.mxu0 0.0
    %3666 = vmatprep.subr.mxu0 0.0
    %3667 = vmatpush1.xpose.msra.mxu0 0.0
    %3668 = vmatprep.mubr.f32.mxu0 0.0
    %3669 = vmatmul.mubr.f32.gmra.mrb[0].mxu0 %v3588
    %v3670 = vpop.f32.mrb[0].mxu0
    %v3671 = vadd.f32 %v163, %v3670
    %v3672 = vpop.f32.mrb[0].mxu0
    %3673 = vmatprep.mubr.f32.mxu0 0.0
    %3674 = vmatmul.mubr.f32.gmra.mrb[0].mxu0 %v3590
    %v3675 = vpop.f32.mrb[0].mxu0
    %v3676 = vadd.f32 %v164, %v3675
    %v3677 = vpop.f32.mrb[0].mxu0
    %3678 = vmatprep.mubr.f32.mxu0 0.0
    %3679 = vmatmul.mubr.f32.gmra.mrb[0].mxu0 %v3592
    %v3680 = vpop.f32.mrb[0].mxu0
    %v3681 = vadd.f32 %v165, %v3680
    %v3682 = vpop.f32.mrb[0].mxu0
    %3683 = vmatprep.mubr.f32.mxu0 0.0
    %3684 = vmatmul.mubr.f32.gmra.mrb[0].mxu0 %v3594
    %v3685 = vpop.f32.mrb[0].mxu0
    %v3686 = vadd.f32 %v166, %v3685
    %v3687 = vpop.f32.mrb[0].mxu0
    %3688 = vdwg.mxu0
    %v3689 = vsel %vm764, %v3671, -inf
    %3690 = vmax.xlane.f32.xlu0 %v3689
    %v3691 = vpop.xlane.xlu0 %3690
    %v3692 = vsel %vm764, %v3676, -inf
    %3693 = vmax.xlane.f32.xlu0 %v3692
    %v3694 = vpop.xlane.xlu0 %3693
    %v3695 = vsel %vm764, %v3681, -inf
    %3696 = vmax.xlane.f32.xlu0 %v3695
    %v3697 = vpop.xlane.xlu0 %3696
    %v3698 = vsel %vm764, %v3686, -inf
    %3699 = vmax.xlane.f32.xlu0 %v3698
    %v3700 = vpop.xlane.xlu0 %3699
    %v3701 = vsub.f32 %v3671, %v3691
    %v3702 = vsub.f32 %v3676, %v3694
    %v3703 = vsub.f32 %v3681, %v3697
    %v3704 = vsub.f32 %v3686, %v3700
    %v3705 = vmul.f32 %v3701, 1.442695
    %v3706 = vpow.pop %v3705
    %v3707 = vmul.f32 %v3702, 1.442695
    %v3708 = vpow.pop %v3707
    %v3709 = vmul.f32 %v3703, 1.442695
    %v3710 = vpow.pop %v3709
    %v3711 = vmul.f32 %v3704, 1.442695
    %v3712 = vpow.pop %v3711
    %v3713 = vsel %vm764, %v3706, 0.0
    %3714 = vadd.xlane.f32.xlu0 %v3713
    %v3715 = vpop.xlane.xlu0 %3714
    %v3716 = vsel %vm764, %v3708, 0.0
    %3717 = vadd.xlane.f32.xlu0 %v3716
    %v3718 = vpop.xlane.xlu0 %3717
    %v3719 = vsel %vm764, %v3710, 0.0
    %3720 = vadd.xlane.f32.xlu0 %v3719
    %v3721 = vpop.xlane.xlu0 %3720
    %v3722 = vsel %vm764, %v3712, 0.0
    %3723 = vadd.xlane.f32.xlu0 %v3722
    %v3724 = vpop.xlane.xlu0 %3723
    %v3725 = vrcp.pop %v3715
    %v3726 = vrcp.pop %v3718
    %v3727 = vrcp.pop %v3721
    %v3728 = vrcp.pop %v3724
    %v3729 = vmul.f32 %v3706, %v3725
    %v3730 = vmul.f32 %v3708, %v3726
    %v3731 = vmul.f32 %v3710, %v3727
    %v3732 = vmul.f32 %v3712, %v3728
    %3733 = vrot.lane.b32.xlu0 %v2760, 104
    %v3734 = vpop.permute.xlu0 %3733
    %3735 = vrot.lane.b32.xlu0 %v2765, 104
    %v3736 = vpop.permute.xlu0 %3735
    %3737 = vrot.lane.b32.xlu0 %v2770, 104
    %v3738 = vpop.permute.xlu0 %3737
    %3739 = vrot.lane.b32.xlu0 %v2775, 104
    %v3740 = vpop.permute.xlu0 %3739
    %v3746 = vsel %vm764, %v3729, 0
    %v3749 = vsel %vm764, %v3730, 0
    %v3752 = vsel %vm764, %v3731, 0
    %v3755 = vsel %vm764, %v3732, 0
    %3757 = vmatprep.subr.mxu0 0.0
    %3758 = vmatpush1.msra.mxu0 %v3734
    %3759 = vmatprep.subr.mxu0 0.0
    %3760 = vmatpush1.msra.mxu0 %v3736
    %3761 = vmatprep.subr.mxu0 0.0
    %3762 = vmatpush1.msra.mxu0 %v3738
    %3763 = vmatprep.subr.mxu0 0.0
    %3764 = vmatpush1.msra.mxu0 %v3740
    %3765 = vmatprep.subr.mxu0 0.0
    %3766 = vmatpush1.msra.mxu0 0.0
    %3767 = vmatprep.subr.mxu0 0.0
    %3768 = vmatpush1.msra.mxu0 0.0
    %3769 = vmatprep.subr.mxu0 0.0
    %3770 = vmatpush1.msra.mxu0 0.0
    %3771 = vmatprep.subr.mxu0 0.0
    %3772 = vmatpush1.msra.mxu0 0.0
    %3773 = vmatprep.subr.mxu0 0.0
    %3774 = vmatpush1.msra.mxu0 0.0
    %3775 = vmatprep.subr.mxu0 0.0
    %3776 = vmatpush1.msra.mxu0 0.0
    %3777 = vmatprep.subr.mxu0 0.0
    %3778 = vmatpush1.msra.mxu0 0.0
    %3779 = vmatprep.subr.mxu0 0.0
    %3780 = vmatpush1.msra.mxu0 0.0
    %3781 = vmatprep.subr.mxu0 0.0
    %3782 = vmatpush1.msra.mxu0 0.0
    %3783 = vmatprep.subr.mxu0 0.0
    %3784 = vmatpush1.msra.mxu0 0.0
    %3785 = vmatprep.subr.mxu0 0.0
    %3786 = vmatpush1.msra.mxu0 0.0
    %3787 = vmatprep.subr.mxu0 0.0
    %3788 = vmatpush1.msra.mxu0 0.0
    %3789 = vmatprep.subr.mxu0 0.0
    %3790 = vmatpush1.msra.mxu0 0.0
    %3791 = vmatprep.subr.mxu0 0.0
    %3792 = vmatpush1.msra.mxu0 0.0
    %3793 = vmatprep.subr.mxu0 0.0
    %3794 = vmatpush1.msra.mxu0 0.0
    %3795 = vmatprep.subr.mxu0 0.0
    %3796 = vmatpush1.msra.mxu0 0.0
    %3797 = vmatprep.subr.mxu0 0.0
    %3798 = vmatpush1.msra.mxu0 0.0
    %3799 = vmatprep.subr.mxu0 0.0
    %3800 = vmatpush1.msra.mxu0 0.0
    %3801 = vmatprep.subr.mxu0 0.0
    %3802 = vmatpush1.msra.mxu0 0.0
    %3803 = vmatprep.subr.mxu0 0.0
    %3804 = vmatpush1.msra.mxu0 0.0
    %3805 = vmatprep.subr.mxu0 0.0
    %3806 = vmatpush1.msra.mxu0 0.0
    %3807 = vmatprep.subr.mxu0 0.0
    %3808 = vmatpush1.msra.mxu0 0.0
    %3809 = vmatprep.subr.mxu0 0.0
    %3810 = vmatpush1.msra.mxu0 0.0
    %3811 = vmatprep.subr.mxu0 0.0
    %3812 = vmatpush1.msra.mxu0 0.0
    %3813 = vmatprep.subr.mxu0 0.0
    %3814 = vmatpush1.msra.mxu0 0.0
    %3815 = vmatprep.subr.mxu0 0.0
    %3816 = vmatpush1.msra.mxu0 0.0
    %3817 = vmatprep.subr.mxu0 0.0
    %3818 = vmatpush1.msra.mxu0 0.0
    %3819 = vmatprep.subr.mxu0 0.0
    %3820 = vmatpush1.msra.mxu0 0.0
    %3821 = vmatprep.mubr.f32.mxu0 0.0
    %3822 = vmatmul.mubr.f32.gmra.mrb[0].mxu0 %v3746
    %v3823 = vpop.f32.mrb[0].mxu0
    %v3824 = vadd.f32 0.0, %v3823
    %v3825 = vpop.f32.mrb[0].mxu0
    %3826 = vmatprep.mubr.f32.mxu0 0.0
    %3827 = vmatmul.mubr.f32.gmra.mrb[0].mxu0 %v3749
    %v3828 = vpop.f32.mrb[0].mxu0
    %v3829 = vadd.f32 0.0, %v3828
    %v3830 = vpop.f32.mrb[0].mxu0
    %3831 = vmatprep.mubr.f32.mxu0 0.0
    %3832 = vmatmul.mubr.f32.gmra.mrb[0].mxu0 %v3752
    %v3833 = vpop.f32.mrb[0].mxu0
    %v3834 = vadd.f32 0.0, %v3833
    %v3835 = vpop.f32.mrb[0].mxu0
    %3836 = vmatprep.mubr.f32.mxu0 0.0
    %3837 = vmatmul.mubr.f32.gmra.mrb[0].mxu0 %v3755
    %v3838 = vpop.f32.mrb[0].mxu0
    %v3839 = vadd.f32 0.0, %v3838
    %v3840 = vpop.f32.mrb[0].mxu0
    %3841 = vdwg.mxu0
    %3846 = vrot.lane.b32.xlu0 %v3284, 8
    %v3847 = vpop.permute.xlu0 %3846
    %3848 = vrot.lane.b32.xlu0 %v3289, 8
    %v3849 = vpop.permute.xlu0 %3848
    %3850 = vrot.lane.b32.xlu0 %v3294, 8
    %v3851 = vpop.permute.xlu0 %3850
    %3852 = vrot.lane.b32.xlu0 %v3299, 8
    %v3853 = vpop.permute.xlu0 %3852
    %3862 = vrot.lane.b32.xlu0 %v3554, 16
    %v3863 = vpop.permute.xlu0 %3862
    %3864 = vrot.lane.b32.xlu0 %v3559, 16
    %v3865 = vpop.permute.xlu0 %3864
    %3866 = vrot.lane.b32.xlu0 %v3564, 16
    %v3867 = vpop.permute.xlu0 %3866
    %3868 = vrot.lane.b32.xlu0 %v3569, 16
    %v3869 = vpop.permute.xlu0 %3868
    %3878 = vrot.lane.b32.xlu0 %v3824, 24
    %v3879 = vpop.permute.xlu0 %3878
    %3880 = vrot.lane.b32.xlu0 %v3829, 24
    %v3881 = vpop.permute.xlu0 %3880
    %3882 = vrot.lane.b32.xlu0 %v3834, 24
    %v3883 = vpop.permute.xlu0 %3882
    %3884 = vrot.lane.b32.xlu0 %v3839, 24
    %v3885 = vpop.permute.xlu0 %3884
    %v3890 = vsel %vm654, %v3010, %v3847
    %v3891 = vsel %vm654, %v3015, %v3849
    %v3892 = vsel %vm654, %v3020, %v3851
    %v3893 = vsel %vm654, %v3025, %v3853
    %v3894 = vsel %vm192, %v3890, %v3863
    %v3895 = vsel %vm192, %v3891, %v3865
    %v3896 = vsel %vm192, %v3892, %v3867
    %v3897 = vsel %vm192, %v3893, %v3869
    %v3898 = vsel %vm1776, %v3894, %v3879
    %v3899 = vsel %vm1776, %v3895, %v3881
    %v3900 = vsel %vm1776, %v3896, %v3883
    %v3901 = vsel %vm1776, %v3897, %v3885
    %v3903 = vlaneseq
    %v3904 = vshrl.u32 %v3903, 7
    %v3905 = vsub.s32 0, %v3904
    %v3906 = vrot.slane %v2300, %v3905
    %v3909 = vsel %vm764, %v3898, 0
    %v3912 = vsel %vm764, %v3899, 0
    %v3915 = vsel %vm764, %v3900, 0
    %v3918 = vsel %vm764, %v3901, 0
    %3920 = vmatprep.subr.mxu0 0.0
    %3921 = vmatpush1.msra.mxu0 %v2295
    %3922 = vmatprep.subr.mxu0 0.0
    %3923 = vmatpush1.msra.mxu0 %v2296
    %3924 = vmatprep.subr.mxu0 0.0
    %3925 = vmatpush1.msra.mxu0 %v2297
    %3926 = vmatprep.subr.mxu0 0.0
    %3927 = vmatpush1.msra.mxu0 %v2298
    %3928 = vmatprep.subr.mxu0 0.0
    %3929 = vmatpush1.msra.mxu0 0.0
    %3930 = vmatprep.subr.mxu0 0.0
    %3931 = vmatpush1.msra.mxu0 0.0
    %3932 = vmatprep.subr.mxu0 0.0
    %3933 = vmatpush1.msra.mxu0 0.0
    %3934 = vmatprep.subr.mxu0 0.0
    %3935 = vmatpush1.msra.mxu0 0.0
    %3936 = vmatprep.subr.mxu0 0.0
    %3937 = vmatpush1.msra.mxu0 0.0
    %3938 = vmatprep.subr.mxu0 0.0
    %3939 = vmatpush1.msra.mxu0 0.0
    %3940 = vmatprep.subr.mxu0 0.0
    %3941 = vmatpush1.msra.mxu0 0.0
    %3942 = vmatprep.subr.mxu0 0.0
    %3943 = vmatpush1.msra.mxu0 0.0
    %3944 = vmatprep.subr.mxu0 0.0
    %3945 = vmatpush1.msra.mxu0 0.0
    %3946 = vmatprep.subr.mxu0 0.0
    %3947 = vmatpush1.msra.mxu0 0.0
    %3948 = vmatprep.subr.mxu0 0.0
    %3949 = vmatpush1.msra.mxu0 0.0
    %3950 = vmatprep.subr.mxu0 0.0
    %3951 = vmatpush1.msra.mxu0 0.0
    %3952 = vmatprep.subr.mxu0 0.0
    %3953 = vmatpush1.msra.mxu0 0.0
    %3954 = vmatprep.subr.mxu0 0.0
    %3955 = vmatpush1.msra.mxu0 0.0
    %3956 = vmatprep.subr.mxu0 0.0
    %3957 = vmatpush1.msra.mxu0 0.0
    %3958 = vmatprep.subr.mxu0 0.0
    %3959 = vmatpush1.msra.mxu0 0.0
    %3960 = vmatprep.subr.mxu0 0.0
    %3961 = vmatpush1.msra.mxu0 0.0
    %3962 = vmatprep.subr.mxu0 0.0
    %3963 = vmatpush1.msra.mxu0 0.0
    %3964 = vmatprep.subr.mxu0 0.0
    %3965 = vmatpush1.msra.mxu0 0.0
    %3966 = vmatprep.subr.mxu0 0.0
    %3967 = vmatpush1.msra.mxu0 0.0
    %3968 = vmatprep.subr.mxu0 0.0
    %3969 = vmatpush1.msra.mxu0 0.0
    %3970 = vmatprep.subr.mxu0 0.0
    %3971 = vmatpush1.msra.mxu0 0.0
    %3972 = vmatprep.subr.mxu0 0.0
    %3973 = vmatpush1.msra.mxu0 0.0
    %3974 = vmatprep.subr.mxu0 0.0
    %3975 = vmatpush1.msra.mxu0 0.0
    %3976 = vmatprep.subr.mxu0 0.0
    %3977 = vmatpush1.msra.mxu0 0.0
    %3978 = vmatprep.subr.mxu0 0.0
    %3979 = vmatpush1.msra.mxu0 0.0
    %3980 = vmatprep.subr.mxu0 0.0
    %3981 = vmatpush1.msra.mxu0 0.0
    %3982 = vmatprep.subr.mxu0 0.0
    %3983 = vmatpush1.msra.mxu0 0.0
    %3984 = vmatprep.mubr.f32.mxu0 0.0
    %3985 = vmatmul.mubr.f32.gmra.mrb[0].mxu0 %v3909
    %v3986 = vpop.f32.mrb[0].mxu0
    %v3987 = vadd.f32 %v3906, %v3986
    %v3988 = vpop.f32.mrb[0].mxu0
    %3989 = vmatprep.mubr.f32.mxu0 0.0
    %3990 = vmatmul.mubr.f32.gmra.mrb[0].mxu0 %v3912
    %v3991 = vpop.f32.mrb[0].mxu0
    %v3992 = vadd.f32 %v3906, %v3991
    %v3993 = vpop.f32.mrb[0].mxu0
    %3994 = vmatprep.mubr.f32.mxu0 0.0
    %3995 = vmatmul.mubr.f32.gmra.mrb[0].mxu0 %v3915
    %v3996 = vpop.f32.mrb[0].mxu0
    %v3997 = vadd.f32 %v3906, %v3996
    %v3998 = vpop.f32.mrb[0].mxu0
    %3999 = vmatprep.mubr.f32.mxu0 0.0
    %4000 = vmatmul.mubr.f32.gmra.mrb[0].mxu0 %v3918
    %v4001 = vpop.f32.mrb[0].mxu0
    %v4002 = vadd.f32 %v3906, %v4001
    %v4003 = vpop.f32.mrb[0].mxu0
    %4004 = vdwg.mxu0
    %v4005 = vadd.f32 %v3987, %v2275
    %v4006 = vadd.f32 %v3992, %v2276
    %v4007 = vadd.f32 %v3997, %v2277
    %v4008 = vadd.f32 %v4002, %v2278
    %v4009 = vsel %vm192, %v4005, 0.0
    %4010 = vadd.xlane.f32.xlu0 %v4009
    %v4011 = vpop.xlane.xlu0 %4010
    %v4012 = vsel %vm192, %v4006, 0.0
    %4013 = vadd.xlane.f32.xlu0 %v4012
    %v4014 = vpop.xlane.xlu0 %4013
    %v4015 = vsel %vm192, %v4007, 0.0
    %4016 = vadd.xlane.f32.xlu0 %v4015
    %v4017 = vpop.xlane.xlu0 %4016
    %v4018 = vsel %vm192, %v4008, 0.0
    %4019 = vadd.xlane.f32.xlu0 %v4018
    %v4020 = vpop.xlane.xlu0 %4019
    %v4021 = vmul.f32 %v4011, %v1900
    %v4022 = vmul.f32 %v4014, %v1900
    %v4023 = vmul.f32 %v4017, %v1900
    %v4024 = vmul.f32 %v4020, %v1900
    %v4025 = vsub.f32 %v4005, %v4021
    %v4026 = vsub.f32 %v4006, %v4022
    %v4027 = vsub.f32 %v4007, %v4023
    %v4028 = vsub.f32 %v4008, %v4024
    %v4029 = vmul.f32 %v4025, %v4025
    %v4030 = vmul.f32 %v4026, %v4026
    %v4031 = vmul.f32 %v4027, %v4027
    %v4032 = vmul.f32 %v4028, %v4028
    %v4033 = vsel %vm192, %v4029, 0.0
    %4034 = vadd.xlane.f32.xlu0 %v4033
    %v4035 = vpop.xlane.xlu0 %4034
    %v4036 = vsel %vm192, %v4030, 0.0
    %4037 = vadd.xlane.f32.xlu0 %v4036
    %v4038 = vpop.xlane.xlu0 %4037
    %v4039 = vsel %vm192, %v4031, 0.0
    %4040 = vadd.xlane.f32.xlu0 %v4039
    %v4041 = vpop.xlane.xlu0 %4040
    %v4042 = vsel %vm192, %v4032, 0.0
    %4043 = vadd.xlane.f32.xlu0 %v4042
    %v4044 = vpop.xlane.xlu0 %4043
    %v4045 = vmul.f32 %v4035, %v1900
    %v4046 = vmul.f32 %v4038, %v1900
    %v4047 = vmul.f32 %v4041, %v1900
    %v4048 = vmul.f32 %v4044, %v1900
    %v4049 = vadd.f32 %v4045, 1e-05
    %v4050 = vadd.f32 %v4046, 1e-05
    %v4051 = vadd.f32 %v4047, 1e-05
    %v4052 = vadd.f32 %v4048, 1e-05
    %v4053 = vrsqrt.pop %v4049
    %v4054 = vrsqrt.pop %v4050
    %v4055 = vrsqrt.pop %v4051
    %v4056 = vrsqrt.pop %v4052
    %v4057 = vmul.f32 %v4025, %v4053
    %v4058 = vmul.f32 %v4026, %v4054
    %v4059 = vmul.f32 %v4027, %v4055
    %v4060 = vmul.f32 %v4028, %v4056
    %v4062 = vlaneseq
    %v4063 = vshrl.u32 %v4062, 7
    %v4064 = vsub.s32 0, %v4063
    %v4065 = vrot.slane %v2302, %v4064
    %v4067 = vmul.f32 %v4057, %v4065
    %v4068 = vmul.f32 %v4058, %v4065
    %v4069 = vmul.f32 %v4059, %v4065
    %v4070 = vmul.f32 %v4060, %v4065
    %v4072 = vlaneseq
    %v4073 = vshrl.u32 %v4072, 7
    %v4074 = vsub.s32 0, %v4073
    %v4075 = vrot.slane %v2304, %v4074
    %v4077 = vadd.f32 %v4067, %v4075
    %v4078 = vadd.f32 %v4068, %v4075
    %v4079 = vadd.f32 %v4069, %v4075
    %v4080 = vadd.f32 %v4070, %v4075
    %v4082 = vlaneseq
    %v4083 = vshrl.u32 %v4082, 7
    %v4084 = vsub.s32 0, %v4083
    %v4085 = vrot.slane %v2309, %v4084
    %v4088 = vsel %vm192, %v4077, 0
    %v4091 = vsel %vm192, %v4078, 0
    %v4094 = vsel %vm192, %v4079, 0
    %v4097 = vsel %vm192, %v4080, 0
    %4099 = vmatprep.subr.mxu0 0.0
    %4100 = vmatpush1.msra.mxu0 %v2306
    %4101 = vmatprep.subr.mxu0 0.0
    %4102 = vmatpush1.msra.mxu0 %v2307
    %4103 = vmatprep.subr.mxu0 0.0
    %4104 = vmatpush1.msra.mxu0 0.0
    %4105 = vmatprep.subr.mxu0 0.0
    %4106 = vmatpush1.msra.mxu0 0.0
    %4107 = vmatprep.subr.mxu0 0.0
    %4108 = vmatpush1.msra.mxu0 0.0
    %4109 = vmatprep.subr.mxu0 0.0
    %4110 = vmatpush1.msra.mxu0 0.0
    %4111 = vmatprep.subr.mxu0 0.0
    %4112 = vmatpush1.msra.mxu0 0.0
    %4113 = vmatprep.subr.mxu0 0.0
    %4114 = vmatpush1.msra.mxu0 0.0
    %4115 = vmatprep.subr.mxu0 0.0
    %4116 = vmatpush1.msra.mxu0 0.0
    %4117 = vmatprep.subr.mxu0 0.0
    %4118 = vmatpush1.msra.mxu0 0.0
    %4119 = vmatprep.subr.mxu0 0.0
    %4120 = vmatpush1.msra.mxu0 0.0
    %4121 = vmatprep.subr.mxu0 0.0
    %4122 = vmatpush1.msra.mxu0 0.0
    %4123 = vmatprep.subr.mxu0 0.0
    %4124 = vmatpush1.msra.mxu0 0.0
    %4125 = vmatprep.subr.mxu0 0.0
    %4126 = vmatpush1.msra.mxu0 0.0
    %4127 = vmatprep.subr.mxu0 0.0
    %4128 = vmatpush1.msra.mxu0 0.0
    %4129 = vmatprep.subr.mxu0 0.0
    %4130 = vmatpush1.msra.mxu0 0.0
    %4131 = vmatprep.subr.mxu0 0.0
    %4132 = vmatpush1.msra.mxu0 0.0
    %4133 = vmatprep.subr.mxu0 0.0
    %4134 = vmatpush1.msra.mxu0 0.0
    %4135 = vmatprep.subr.mxu0 0.0
    %4136 = vmatpush1.msra.mxu0 0.0
    %4137 = vmatprep.subr.mxu0 0.0
    %4138 = vmatpush1.msra.mxu0 0.0
    %4139 = vmatprep.subr.mxu0 0.0
    %4140 = vmatpush1.msra.mxu0 0.0
    %4141 = vmatprep.subr.mxu0 0.0
    %4142 = vmatpush1.msra.mxu0 0.0
    %4143 = vmatprep.subr.mxu0 0.0
    %4144 = vmatpush1.msra.mxu0 0.0
    %4145 = vmatprep.subr.mxu0 0.0
    %4146 = vmatpush1.msra.mxu0 0.0
    %4147 = vmatprep.subr.mxu0 0.0
    %4148 = vmatpush1.msra.mxu0 0.0
    %4149 = vmatprep.subr.mxu0 0.0
    %4150 = vmatpush1.msra.mxu0 0.0
    %4151 = vmatprep.subr.mxu0 0.0
    %4152 = vmatpush1.msra.mxu0 0.0
    %4153 = vmatprep.subr.mxu0 0.0
    %4154 = vmatpush1.msra.mxu0 0.0
    %4155 = vmatprep.subr.mxu0 0.0
    %4156 = vmatpush1.msra.mxu0 0.0
    %4157 = vmatprep.subr.mxu0 0.0
    %4158 = vmatpush1.msra.mxu0 0.0
    %4159 = vmatprep.subr.mxu0 0.0
    %4160 = vmatpush1.msra.mxu0 0.0
    %4161 = vmatprep.subr.mxu0 0.0
    %4162 = vmatpush1.msra.mxu0 0.0
    %4163 = vmatprep.mubr.f32.mxu0 0.0
    %4164 = vmatmul.mubr.f32.gmra.mrb[0].mxu0 %v4088
    %v4165 = vpop.f32.mrb[0].mxu0
    %v4166 = vadd.f32 %v4085, %v4165
    %v4167 = vpop.f32.mrb[0].mxu0
    %4168 = vmatprep.mubr.f32.mxu0 0.0
    %4169 = vmatmul.mubr.f32.gmra.mrb[0].mxu0 %v4091
    %v4170 = vpop.f32.mrb[0].mxu0
    %v4171 = vadd.f32 %v4085, %v4170
    %v4172 = vpop.f32.mrb[0].mxu0
    %4173 = vmatprep.mubr.f32.mxu0 0.0
    %4174 = vmatmul.mubr.f32.gmra.mrb[0].mxu0 %v4094
    %v4175 = vpop.f32.mrb[0].mxu0
    %v4176 = vadd.f32 %v4085, %v4175
    %v4177 = vpop.f32.mrb[0].mxu0
    %4178 = vmatprep.mubr.f32.mxu0 0.0
    %4179 = vmatmul.mubr.f32.gmra.mrb[0].mxu0 %v4097
    %v4180 = vpop.f32.mrb[0].mxu0
    %v4181 = vadd.f32 %v4085, %v4180
    %v4182 = vpop.f32.mrb[0].mxu0
    %4183 = vdwg.mxu0
    %v4184 = vmul.f32 %v4166, 0.5
    %v4185 = vmul.f32 %v4171, 0.5
    %v4186 = vmul.f32 %v4176, 0.5
    %v4187 = vmul.f32 %v4181, 0.5
    %v4188 = vmul.f32 %v4166, 0.70710677
    %v4189 = vmul.f32 %v4171, 0.70710677
    %v4190 = vmul.f32 %v4176, 0.70710677
    %v4191 = vmul.f32 %v4181, 0.70710677
    %v4192 = vand.u32 2147483647, %v4188
    %v4193 = vand.u32 2147483647, %v4189
    %v4194 = vand.u32 2147483647, %v4190
    %v4195 = vand.u32 2147483647, %v4191
    %v4196 = vmul.f32 %v4192, 0.3275911
    %v4197 = vmul.f32 %v4193, 0.3275911
    %v4198 = vmul.f32 %v4194, 0.3275911
    %v4199 = vmul.f32 %v4195, 0.3275911
    %v4200 = vadd.f32 %v4196, 1.0
    %v4201 = vadd.f32 %v4197, 1.0
    %v4202 = vadd.f32 %v4198, 1.0
    %v4203 = vadd.f32 %v4199, 1.0
    %v4204 = vrcp.pop %v4200
    %v4205 = vmul.f32 1.0, %v4204
    %v4206 = vrcp.pop %v4201
    %v4207 = vmul.f32 1.0, %v4206
    %v4208 = vrcp.pop %v4202
    %v4209 = vmul.f32 1.0, %v4208
    %v4210 = vrcp.pop %v4203
    %v4211 = vmul.f32 1.0, %v4210
    %v4212 = vmul.f32 %v4205, 1.0614054
    %v4213 = vmul.f32 %v4207, 1.0614054
    %v4214 = vmul.f32 %v4209, 1.0614054
    %v4215 = vmul.f32 %v4211, 1.0614054
    %v4216 = vadd.f32 %v4212, -1.4531521
    %v4217 = vadd.f32 %v4213, -1.4531521
    %v4218 = vadd.f32 %v4214, -1.4531521
    %v4219 = vadd.f32 %v4215, -1.4531521
    %v4220 = vmul.f32 %v4216, %v4205
    %v4221 = vmul.f32 %v4217, %v4207
    %v4222 = vmul.f32 %v4218, %v4209
    %v4223 = vmul.f32 %v4219, %v4211
    %v4224 = vadd.f32 %v4220, 1.4214138
    %v4225 = vadd.f32 %v4221, 1.4214138
    %v4226 = vadd.f32 %v4222, 1.4214138
    %v4227 = vadd.f32 %v4223, 1.4214138
    %v4228 = vmul.f32 %v4224, %v4205
    %v4229 = vmul.f32 %v4225, %v4207
    %v4230 = vmul.f32 %v4226, %v4209
    %v4231 = vmul.f32 %v4227, %v4211
    %v4232 = vadd.f32 %v4228, -0.28449672
    %v4233 = vadd.f32 %v4229, -0.28449672
    %v4234 = vadd.f32 %v4230, -0.28449672
    %v4235 = vadd.f32 %v4231, -0.28449672
    %v4236 = vmul.f32 %v4232, %v4205
    %v4237 = vmul.f32 %v4233, %v4207
    %v4238 = vmul.f32 %v4234, %v4209
    %v4239 = vmul.f32 %v4235, %v4211
    %v4240 = vadd.f32 %v4236, 0.2548296
    %v4241 = vadd.f32 %v4237, 0.2548296
    %v4242 = vadd.f32 %v4238, 0.2548296
    %v4243 = vadd.f32 %v4239, 0.2548296
    %v4244 = vmul.f32 %v4240, %v4205
    %v4245 = vmul.f32 %v4241, %v4207
    %v4246 = vmul.f32 %v4242, %v4209
    %v4247 = vmul.f32 %v4243, %v4211
    %v4248 = vsub.f32 0.0, %v4192
    %v4249 = vsub.f32 0.0, %v4193
    %v4250 = vsub.f32 0.0, %v4194
    %v4251 = vsub.f32 0.0, %v4195
    %v4252 = vmul.f32 %v4248, %v4192
    %v4253 = vmul.f32 %v4249, %v4193
    %v4254 = vmul.f32 %v4250, %v4194
    %v4255 = vmul.f32 %v4251, %v4195
    %v4256 = vmul.f32 %v4252, 1.442695
    %v4257 = vpow.pop %v4256
    %v4258 = vmul.f32 %v4253, 1.442695
    %v4259 = vpow.pop %v4258
    %v4260 = vmul.f32 %v4254, 1.442695
    %v4261 = vpow.pop %v4260
    %v4262 = vmul.f32 %v4255, 1.442695
    %v4263 = vpow.pop %v4262
    %v4264 = vmul.f32 %v4244, %v4257
    %v4265 = vmul.f32 %v4245, %v4259
    %v4266 = vmul.f32 %v4246, %v4261
    %v4267 = vmul.f32 %v4247, %v4263
    %v4268 = vsub.f32 1.0, %v4264
    %v4269 = vsub.f32 1.0, %v4265
    %v4270 = vsub.f32 1.0, %v4266
    %v4271 = vsub.f32 1.0, %v4267
    %vm4272 = vcmp.ge.f32.partialorder %v4188, 0.0
    %vm4273 = vcmp.ge.f32.partialorder %v4189, 0.0
    %vm4274 = vcmp.ge.f32.partialorder %v4190, 0.0
    %vm4275 = vcmp.ge.f32.partialorder %v4191, 0.0
    %v4276 = vsub.f32 0.0, %v4268
    %v4277 = vsub.f32 0.0, %v4269
    %v4278 = vsub.f32 0.0, %v4270
    %v4279 = vsub.f32 0.0, %v4271
    %v4280 = vsel %vm4272, %v4268, %v4276
    %v4281 = vsel %vm4273, %v4269, %v4277
    %v4282 = vsel %vm4274, %v4270, %v4278
    %v4283 = vsel %vm4275, %v4271, %v4279
    %v4284 = vadd.f32 %v4280, 1.0
    %v4285 = vadd.f32 %v4281, 1.0
    %v4286 = vadd.f32 %v4282, 1.0
    %v4287 = vadd.f32 %v4283, 1.0
    %v4288 = vmul.f32 %v4184, %v4284
    %v4289 = vmul.f32 %v4185, %v4285
    %v4290 = vmul.f32 %v4186, %v4286
    %v4291 = vmul.f32 %v4187, %v4287
    %v4293 = vlaneseq
    %v4294 = vshrl.u32 %v4293, 7
    %v4295 = vsub.s32 0, %v4294
    %v4296 = vrot.slane %v2316, %v4295
    %v4299 = vsel %vm764, %v4288, 0
    %v4302 = vsel %vm764, %v4289, 0
    %v4305 = vsel %vm764, %v4290, 0
    %v4308 = vsel %vm764, %v4291, 0
    %4310 = vmatprep.subr.mxu0 0.0
    %4311 = vmatpush1.msra.mxu0 %v2311
    %4312 = vmatprep.subr.mxu0 0.0
    %4313 = vmatpush1.msra.mxu0 %v2312
    %4314 = vmatprep.subr.mxu0 0.0
    %4315 = vmatpush1.msra.mxu0 %v2313
    %4316 = vmatprep.subr.mxu0 0.0
    %4317 = vmatpush1.msra.mxu0 %v2314
    %4318 = vmatprep.subr.mxu0 0.0
    %4319 = vmatpush1.msra.mxu0 0.0
    %4320 = vmatprep.subr.mxu0 0.0
    %4321 = vmatpush1.msra.mxu0 0.0
    %4322 = vmatprep.subr.mxu0 0.0
    %4323 = vmatpush1.msra.mxu0 0.0
    %4324 = vmatprep.subr.mxu0 0.0
    %4325 = vmatpush1.msra.mxu0 0.0
    %4326 = vmatprep.subr.mxu0 0.0
    %4327 = vmatpush1.msra.mxu0 0.0
    %4328 = vmatprep.subr.mxu0 0.0
    %4329 = vmatpush1.msra.mxu0 0.0
    %4330 = vmatprep.subr.mxu0 0.0
    %4331 = vmatpush1.msra.mxu0 0.0
    %4332 = vmatprep.subr.mxu0 0.0
    %4333 = vmatpush1.msra.mxu0 0.0
    %4334 = vmatprep.subr.mxu0 0.0
    %4335 = vmatpush1.msra.mxu0 0.0
    %4336 = vmatprep.subr.mxu0 0.0
    %4337 = vmatpush1.msra.mxu0 0.0
    %4338 = vmatprep.subr.mxu0 0.0
    %4339 = vmatpush1.msra.mxu0 0.0
    %4340 = vmatprep.subr.mxu0 0.0
    %4341 = vmatpush1.msra.mxu0 0.0
    %4342 = vmatprep.subr.mxu0 0.0
    %4343 = vmatpush1.msra.mxu0 0.0
    %4344 = vmatprep.subr.mxu0 0.0
    %4345 = vmatpush1.msra.mxu0 0.0
    %4346 = vmatprep.subr.mxu0 0.0
    %4347 = vmatpush1.msra.mxu0 0.0
    %4348 = vmatprep.subr.mxu0 0.0
    %4349 = vmatpush1.msra.mxu0 0.0
    %4350 = vmatprep.subr.mxu0 0.0
    %4351 = vmatpush1.msra.mxu0 0.0
    %4352 = vmatprep.subr.mxu0 0.0
    %4353 = vmatpush1.msra.mxu0 0.0
    %4354 = vmatprep.subr.mxu0 0.0
    %4355 = vmatpush1.msra.mxu0 0.0
    %4356 = vmatprep.subr.mxu0 0.0
    %4357 = vmatpush1.msra.mxu0 0.0
    %4358 = vmatprep.subr.mxu0 0.0
    %4359 = vmatpush1.msra.mxu0 0.0
    %4360 = vmatprep.subr.mxu0 0.0
    %4361 = vmatpush1.msra.mxu0 0.0
    %4362 = vmatprep.subr.mxu0 0.0
    %4363 = vmatpush1.msra.mxu0 0.0
    %4364 = vmatprep.subr.mxu0 0.0
    %4365 = vmatpush1.msra.mxu0 0.0
    %4366 = vmatprep.subr.mxu0 0.0
    %4367 = vmatpush1.msra.mxu0 0.0
    %4368 = vmatprep.subr.mxu0 0.0
    %4369 = vmatpush1.msra.mxu0 0.0
    %4370 = vmatprep.subr.mxu0 0.0
    %4371 = vmatpush1.msra.mxu0 0.0
    %4372 = vmatprep.subr.mxu0 0.0
    %4373 = vmatpush1.msra.mxu0 0.0
    %4374 = vmatprep.mubr.f32.mxu0 0.0
    %4375 = vmatmul.mubr.f32.gmra.mrb[0].mxu0 %v4299
    %v4376 = vpop.f32.mrb[0].mxu0
    %v4377 = vadd.f32 %v4296, %v4376
    %v4378 = vpop.f32.mrb[0].mxu0
    %4379 = vmatprep.mubr.f32.mxu0 0.0
    %4380 = vmatmul.mubr.f32.gmra.mrb[0].mxu0 %v4302
    %v4381 = vpop.f32.mrb[0].mxu0
    %v4382 = vadd.f32 %v4296, %v4381
    %v4383 = vpop.f32.mrb[0].mxu0
    %4384 = vmatprep.mubr.f32.mxu0 0.0
    %4385 = vmatmul.mubr.f32.gmra.mrb[0].mxu0 %v4305
    %v4386 = vpop.f32.mrb[0].mxu0
    %v4387 = vadd.f32 %v4296, %v4386
    %v4388 = vpop.f32.mrb[0].mxu0
    %4389 = vmatprep.mubr.f32.mxu0 0.0
    %4390 = vmatmul.mubr.f32.gmra.mrb[0].mxu0 %v4308
    %v4391 = vpop.f32.mrb[0].mxu0
    %v4392 = vadd.f32 %v4296, %v4391
    %v4393 = vpop.f32.mrb[0].mxu0
    %4394 = vdwg.mxu0
    %v4395 = vadd.f32 %v4377, %v4005
    %v4396 = vadd.f32 %v4382, %v4006
    %v4397 = vadd.f32 %v4387, %v4007
    %v4398 = vadd.f32 %v4392, %v4008
    %4399 = vst.msk [vmem:[%s17] sm:$0xff] %vm192, %v4395
    %4400 = vst.msk [vmem:[%s17 + $0x8] sm:$0xff] %vm192, %v4396
    %4401 = vst.msk [vmem:[%s17 + $0x10] sm:$0xff] %vm192, %v4397
    %4402 = vst.msk [vmem:[%s17 + $0x18] sm:$0xff] %vm192, %v4398
    // Predicated region
    $region98: #{tpu_custom_call.1} parent=1 // pred_check
      _
    $region99: #{tpu_custom_call.1} parent=1 // pred_check_branch
      %4404 = sbr.rel (0) target = $region101
    $region100: #{tpu_custom_call.1} parent=1 // pred_region
      _
    $region101: #{tpu_custom_call.1} parent=1 // pred_fallthru
      _
    // Predicated region
    $region102: #{tpu_custom_call.1} parent=1 // pred_check
      _
    $region103: #{tpu_custom_call.1} parent=1 // pred_check_branch
      %4406 = sbr.rel (0) target = $region105
    $region104: #{tpu_custom_call.1} parent=1 // pred_region
      _
    $region105: #{tpu_custom_call.1} parent=1 // pred_fallthru
      _
    %4407 = vsyncpa [#allocation3], 1
    %4408 = vsyncpa [#allocation5], 1
    %4409 = vsyncpa [#allocation8], 1
    %4410 = vsyncpa [#allocation11], 1

</llo_original>
